<compile_context>
chip_gen: v7x
topology: tpu7x:2x2x1
jax: 0.10.0
libtpu: 0.0.40
codegen_flags: <defaults>
</compile_context>

<pallas_src>
import functools

import jax
import jax.numpy as jnp
from jax import lax
from jax.experimental import pallas as pl
from jax.experimental.pallas import tpu as pltpu

LEAKY_SCALE = 0.2
DROPOUT_P = 0.5
BN_EPS = 1e-5

D_IN, D_H, D_OUT = 100, 512, 784
D_IN_PAD = 128  # K of layer 1 padded to a lane-aligned 128


def _batchnorm_train(h, gamma, beta):
    # training-mode BatchNorm1d: batch mean, biased variance, folded scale/shift
    mean = jnp.mean(h, axis=0, keepdims=True)
    var = jnp.mean(jnp.square(h - mean), axis=0, keepdims=True)
    scale = gamma * lax.rsqrt(var + BN_EPS)
    shift = beta - mean * scale
    return h * scale + shift


def _leaky_relu(h):
    return jnp.where(h >= 0, h, LEAKY_SCALE * h)


def gen_kernel(x_ref, m1_ref, m2_ref,
               w1_ref, b1_ref, g1_ref, be1_ref,
               w2_ref, b2_ref, g2_ref, be2_ref,
               w3_ref, b3_ref, g3_ref, be3_ref,
               o_ref):
    # Block 1: Linear(100->512, K padded to 128) -> BN -> LeakyReLU -> Dropout
    h = jnp.dot(x_ref[...], w1_ref[...],
                preferred_element_type=jnp.float32) + b1_ref[...]
    h = _leaky_relu(_batchnorm_train(h, g1_ref[...], be1_ref[...]))
    h = h * m1_ref[...]                       # mask already carries 1/(1-p)

    # Block 2: Linear(512,512) -> BN -> LeakyReLU -> Dropout
    h = jnp.dot(h.astype(jnp.bfloat16), w2_ref[...],
                preferred_element_type=jnp.float32) + b2_ref[...]
    h = _leaky_relu(_batchnorm_train(h, g2_ref[...], be2_ref[...]))
    h = h * m2_ref[...]

    # Block 3: Linear(512,784) -> BN -> Tanh
    h = jnp.dot(h.astype(jnp.bfloat16), w3_ref[...],
                preferred_element_type=jnp.float32) + b3_ref[...]
    h = jnp.tanh(_batchnorm_train(h, g3_ref[...], be3_ref[...]))

    o_ref[...] = h.astype(o_ref.dtype)


@jax.jit
def gen_forward(x, params, dropout_key):
    B = x.shape[0]
    (w1, b1, g1, be1, w2, b2, g2, be2, w3, b3, g3, be3) = params

    # Zero-pad the layer-1 contraction dim 100 -> 128 (zeros contribute nothing
    # to the dot) and cast streamed weight matrices / x to bf16.
    x_p = jnp.pad(x, ((0, 0), (0, D_IN_PAD - D_IN))).astype(jnp.bfloat16)
    w1_p = jnp.pad(w1, ((0, D_IN_PAD - D_IN), (0, 0))).astype(jnp.bfloat16)
    w2_b = w2.astype(jnp.bfloat16)
    w3_b = w3.astype(jnp.bfloat16)

    # Dropout masks with the keep-scale folded in: value is 0 or 1/(1-p).
    k1, k2 = jax.random.split(dropout_key)
    keep = 1.0 - DROPOUT_P
    inv_keep = 1.0 / keep
    m1 = jax.random.bernoulli(k1, keep, (B, D_H)).astype(jnp.float32) * inv_keep
    m2 = jax.random.bernoulli(k2, keep, (B, D_H)).astype(jnp.float32) * inv_keep

    def full(shape):
        return pl.BlockSpec(shape, lambda i, _s=shape: (0,) * len(_s))

    in_specs = [
        full((B, D_IN_PAD)),                              # x (padded, bf16)
        full((B, D_H)), full((B, D_H)),                   # dropout masks
        full((D_IN_PAD, D_H)), full((1, D_H)), full((1, D_H)), full((1, D_H)),
        full((D_H, D_H)), full((1, D_H)), full((1, D_H)), full((1, D_H)),
        full((D_H, D_OUT)), full((1, D_OUT)), full((1, D_OUT)), full((1, D_OUT)),
    ]
    out_spec = full((B, D_OUT))

    return pl.pallas_call(
        gen_kernel,
        out_shape=jax.ShapeDtypeStruct((B, D_OUT), jnp.float32),
        grid=(1,),
        in_specs=in_specs,
        out_specs=out_spec,
        compiler_params=pltpu.CompilerParams(
            dimension_semantics=("arbitrary",),
            vmem_limit_bytes=32 * 1024 * 1024,
        ),
    )(x_p, m1, m2, w1_p, b1, g1, be1, w2_b, b2, g2, be2, w3_b, b3, g3, be3)


def init_params(key):
    """Deterministic init mirroring nn.Linear default (U(-1/sqrt(fan_in), ..)),
    BatchNorm gamma=1 / beta=0. Stored in f32 (module state); the wrapper casts
    the streamed weights to bf16."""
    def linear(k, fan_in, fan_out):
        kw, kb = jax.random.split(k)
        bound = 1.0 / (fan_in ** 0.5)
        w = jax.random.uniform(kw, (fan_in, fan_out), jnp.float32, -bound, bound)
        b = jax.random.uniform(kb, (1, fan_out), jnp.float32, -bound, bound)
        return w, b

    k1, k2, k3 = jax.random.split(key, 3)
    w1, b1 = linear(k1, D_IN, D_H)
    w2, b2 = linear(k2, D_H, D_H)
    w3, b3 = linear(k3, D_H, D_OUT)

    g1, be1 = jnp.ones((1, D_H), jnp.float32), jnp.zeros((1, D_H), jnp.float32)
    g2, be2 = jnp.ones((1, D_H), jnp.float32), jnp.zeros((1, D_H), jnp.float32)
    g3, be3 = jnp.ones((1, D_OUT), jnp.float32), jnp.zeros((1, D_OUT), jnp.float32)

    return (w1, b1, g1, be1, w2, b2, g2, be2, w3, b3, g3, be3)


if __name__ == "__main__":
    key = jax.random.PRNGKey(0)
    k_x, k_p, k_drop = jax.random.split(key, 3)

    B = 8  # BatchNorm1d in training mode needs batch > 1
    x = jax.random.normal(k_x, (B, D_IN), jnp.float32)   # latent noise
    params = init_params(k_p)

    out = gen_forward(x, params, k_drop)
    out = jax.block_until_ready(out)

    assert out.shape == (B, D_OUT), out.shape
    assert bool(jnp.all(jnp.isfinite(out)))
    assert bool(jnp.all(jnp.abs(out) <= 1.0 + 1e-6))  # tanh output range

    print("KERNEL_OK")
</pallas_src>

<mosaic_0001>
module attributes {stable_mosaic.version = 11 : i64} {
  func.func @gen_kernel(%arg0: i32, %arg1: memref<8x128xbf16, #tpu.memory_space<vmem>>, %arg2: memref<8x512xf32, #tpu.memory_space<vmem>>, %arg3: memref<8x512xf32, #tpu.memory_space<vmem>>, %arg4: memref<128x512xbf16, #tpu.memory_space<vmem>>, %arg5: memref<1x512xf32, #tpu.memory_space<vmem>>, %arg6: memref<1x512xf32, #tpu.memory_space<vmem>>, %arg7: memref<1x512xf32, #tpu.memory_space<vmem>>, %arg8: memref<512x512xbf16, #tpu.memory_space<vmem>>, %arg9: memref<1x512xf32, #tpu.memory_space<vmem>>, %arg10: memref<1x512xf32, #tpu.memory_space<vmem>>, %arg11: memref<1x512xf32, #tpu.memory_space<vmem>>, %arg12: memref<512x784xbf16, #tpu.memory_space<vmem>>, %arg13: memref<1x784xf32, #tpu.memory_space<vmem>>, %arg14: memref<1x784xf32, #tpu.memory_space<vmem>>, %arg15: memref<1x784xf32, #tpu.memory_space<vmem>>, %arg16: memref<8x784xf32, #tpu.memory_space<vmem>>) attributes {dimension_semantics = [#tpu.dimension_semantics<arbitrary>], iteration_bounds = array<i64: 1>, scalar_prefetch = 0 : i64, scratch_operands = 0 : i64, tpu.core_type = #tpu.core_type<tc>, window_params = [{pipeline_mode = #tpu.pipeline_mode<synchronous>, transform_indices = @transform_0, window_bounds = array<i64: 8, 128>}, {pipeline_mode = #tpu.pipeline_mode<synchronous>, transform_indices = @transform_1, window_bounds = array<i64: 8, 512>}, {pipeline_mode = #tpu.pipeline_mode<synchronous>, transform_indices = @transform_2, window_bounds = array<i64: 8, 512>}, {pipeline_mode = #tpu.pipeline_mode<synchronous>, transform_indices = @transform_3, window_bounds = array<i64: 128, 512>}, {pipeline_mode = #tpu.pipeline_mode<synchronous>, transform_indices = @transform_4, window_bounds = array<i64: 1, 512>}, {pipeline_mode = #tpu.pipeline_mode<synchronous>, transform_indices = @transform_5, window_bounds = array<i64: 1, 512>}, {pipeline_mode = #tpu.pipeline_mode<synchronous>, transform_indices = @transform_6, window_bounds = array<i64: 1, 512>}, {pipeline_mode = #tpu.pipeline_mode<synchronous>, transform_indices = @transform_7, window_bounds = array<i64: 512, 512>}, {pipeline_mode = #tpu.pipeline_mode<synchronous>, transform_indices = @transform_8, window_bounds = array<i64: 1, 512>}, {pipeline_mode = #tpu.pipeline_mode<synchronous>, transform_indices = @transform_9, window_bounds = array<i64: 1, 512>}, {pipeline_mode = #tpu.pipeline_mode<synchronous>, transform_indices = @transform_10, window_bounds = array<i64: 1, 512>}, {pipeline_mode = #tpu.pipeline_mode<synchronous>, transform_indices = @transform_11, window_bounds = array<i64: 512, 784>}, {pipeline_mode = #tpu.pipeline_mode<synchronous>, transform_indices = @transform_12, window_bounds = array<i64: 1, 784>}, {pipeline_mode = #tpu.pipeline_mode<synchronous>, transform_indices = @transform_13, window_bounds = array<i64: 1, 784>}, {pipeline_mode = #tpu.pipeline_mode<synchronous>, transform_indices = @transform_14, window_bounds = array<i64: 1, 784>}, {pipeline_mode = #tpu.pipeline_mode<synchronous>, transform_indices = @transform_15, window_bounds = array<i64: 8, 784>}]} {
    %c0 = arith.constant 0 : index
    %c0_0 = arith.constant 0 : index
    %0 = vector.load %arg1[%c0, %c0_0] : memref<8x128xbf16, #tpu.memory_space<vmem>>, vector<8x128xbf16>
    %c0_1 = arith.constant 0 : index
    %c0_2 = arith.constant 0 : index
    %1 = vector.load %arg4[%c0_1, %c0_2] : memref<128x512xbf16, #tpu.memory_space<vmem>>, vector<128x512xbf16>
    %cst = arith.constant dense<0.000000e+00> : vector<8x512xf32>
    %2 = tpu.matmul %0, %1, %cst {dimension_numbers = #tpu.dot_dimension_numbers<[1], [0], [0], [1], [0, 0, 1, 1], [], []>} : vector<8x128xbf16>, vector<128x512xbf16>, vector<8x512xf32> -> vector<8x512xf32>
    %c0_3 = arith.constant 0 : index
    %c0_4 = arith.constant 0 : index
    %3 = vector.load %arg5[%c0_3, %c0_4] : memref<1x512xf32, #tpu.memory_space<vmem>>, vector<1x512xf32>
    %4 = vector.broadcast %3 : vector<1x512xf32> to vector<8x512xf32>
    %5 = arith.addf %2, %4 : vector<8x512xf32>
    %c0_5 = arith.constant 0 : index
    %c0_6 = arith.constant 0 : index
    %6 = vector.load %arg6[%c0_5, %c0_6] : memref<1x512xf32, #tpu.memory_space<vmem>>, vector<1x512xf32>
    %c0_7 = arith.constant 0 : index
    %c0_8 = arith.constant 0 : index
    %7 = vector.load %arg7[%c0_7, %c0_8] : memref<1x512xf32, #tpu.memory_space<vmem>>, vector<1x512xf32>
    %cst_9 = arith.constant dense<0.000000e+00> : vector<512xf32>
    %8 = vector.multi_reduction <add>, %5, %cst_9 [0] : vector<8x512xf32> to vector<512xf32>
    %9 = vector.shape_cast %8 : vector<512xf32> to vector<1x512xf32>
    %cst_10 = arith.constant 8.000000e+00 : f32
    %10 = vector.broadcast %cst_10 : f32 to vector<1x512xf32>
    %11 = arith.divf %9, %10 : vector<1x512xf32>
    %12 = vector.broadcast %11 : vector<1x512xf32> to vector<8x512xf32>
    %13 = arith.subf %5, %12 : vector<8x512xf32>
    %14 = arith.mulf %13, %13 : vector<8x512xf32>
    %cst_11 = arith.constant dense<0.000000e+00> : vector<512xf32>
    %15 = vector.multi_reduction <add>, %14, %cst_11 [0] : vector<8x512xf32> to vector<512xf32>
    %16 = vector.shape_cast %15 : vector<512xf32> to vector<1x512xf32>
    %cst_12 = arith.constant 8.000000e+00 : f32
    %17 = vector.broadcast %cst_12 : f32 to vector<1x512xf32>
    %18 = arith.divf %16, %17 : vector<1x512xf32>
    %cst_13 = arith.constant 9.99999974E-6 : f32
    %19 = vector.broadcast %cst_13 : f32 to vector<1x512xf32>
    %20 = arith.addf %18, %19 : vector<1x512xf32>
    %21 = math.rsqrt %20 : vector<1x512xf32>
    %22 = arith.mulf %6, %21 : vector<1x512xf32>
    %23 = arith.mulf %11, %22 : vector<1x512xf32>
    %24 = arith.subf %7, %23 : vector<1x512xf32>
    %25 = vector.broadcast %22 : vector<1x512xf32> to vector<8x512xf32>
    %26 = arith.mulf %5, %25 : vector<8x512xf32>
    %27 = vector.broadcast %24 : vector<1x512xf32> to vector<8x512xf32>
    %28 = arith.addf %26, %27 : vector<8x512xf32>
    %cst_14 = arith.constant 0.000000e+00 : f32
    %29 = vector.broadcast %cst_14 : f32 to vector<8x512xf32>
    %30 = arith.cmpf oge, %28, %29 : vector<8x512xf32>
    %cst_15 = arith.constant 2.000000e-01 : f32
    %31 = vector.broadcast %cst_15 : f32 to vector<8x512xf32>
    %32 = arith.mulf %31, %28 : vector<8x512xf32>
    %33 = arith.select %30, %28, %32 : vector<8x512xi1>, vector<8x512xf32>
    %c0_16 = arith.constant 0 : index
    %c0_17 = arith.constant 0 : index
    %34 = vector.load %arg2[%c0_16, %c0_17] : memref<8x512xf32, #tpu.memory_space<vmem>>, vector<8x512xf32>
    %35 = arith.mulf %33, %34 : vector<8x512xf32>
    %36 = arith.truncf %35 : vector<8x512xf32> to vector<8x512xbf16>
    %c0_18 = arith.constant 0 : index
    %c0_19 = arith.constant 0 : index
    %37 = vector.load %arg8[%c0_18, %c0_19] : memref<512x512xbf16, #tpu.memory_space<vmem>>, vector<512x512xbf16>
    %cst_20 = arith.constant dense<0.000000e+00> : vector<8x512xf32>
    %38 = tpu.matmul %36, %37, %cst_20 {dimension_numbers = #tpu.dot_dimension_numbers<[1], [0], [0], [1], [0, 0, 1, 1], [], []>} : vector<8x512xbf16>, vector<512x512xbf16>, vector<8x512xf32> -> vector<8x512xf32>
    %c0_21 = arith.constant 0 : index
    %c0_22 = arith.constant 0 : index
    %39 = vector.load %arg9[%c0_21, %c0_22] : memref<1x512xf32, #tpu.memory_space<vmem>>, vector<1x512xf32>
    %40 = vector.broadcast %39 : vector<1x512xf32> to vector<8x512xf32>
    %41 = arith.addf %38, %40 : vector<8x512xf32>
    %c0_23 = arith.constant 0 : index
    %c0_24 = arith.constant 0 : index
    %42 = vector.load %arg10[%c0_23, %c0_24] : memref<1x512xf32, #tpu.memory_space<vmem>>, vector<1x512xf32>
    %c0_25 = arith.constant 0 : index
    %c0_26 = arith.constant 0 : index
    %43 = vector.load %arg11[%c0_25, %c0_26] : memref<1x512xf32, #tpu.memory_space<vmem>>, vector<1x512xf32>
    %cst_27 = arith.constant dense<0.000000e+00> : vector<512xf32>
    %44 = vector.multi_reduction <add>, %41, %cst_27 [0] : vector<8x512xf32> to vector<512xf32>
    %45 = vector.shape_cast %44 : vector<512xf32> to vector<1x512xf32>
    %cst_28 = arith.constant 8.000000e+00 : f32
    %46 = vector.broadcast %cst_28 : f32 to vector<1x512xf32>
    %47 = arith.divf %45, %46 : vector<1x512xf32>
    %48 = vector.broadcast %47 : vector<1x512xf32> to vector<8x512xf32>
    %49 = arith.subf %41, %48 : vector<8x512xf32>
    %50 = arith.mulf %49, %49 : vector<8x512xf32>
    %cst_29 = arith.constant dense<0.000000e+00> : vector<512xf32>
    %51 = vector.multi_reduction <add>, %50, %cst_29 [0] : vector<8x512xf32> to vector<512xf32>
    %52 = vector.shape_cast %51 : vector<512xf32> to vector<1x512xf32>
    %cst_30 = arith.constant 8.000000e+00 : f32
    %53 = vector.broadcast %cst_30 : f32 to vector<1x512xf32>
    %54 = arith.divf %52, %53 : vector<1x512xf32>
    %cst_31 = arith.constant 9.99999974E-6 : f32
    %55 = vector.broadcast %cst_31 : f32 to vector<1x512xf32>
    %56 = arith.addf %54, %55 : vector<1x512xf32>
    %57 = math.rsqrt %56 : vector<1x512xf32>
    %58 = arith.mulf %42, %57 : vector<1x512xf32>
    %59 = arith.mulf %47, %58 : vector<1x512xf32>
    %60 = arith.subf %43, %59 : vector<1x512xf32>
    %61 = vector.broadcast %58 : vector<1x512xf32> to vector<8x512xf32>
    %62 = arith.mulf %41, %61 : vector<8x512xf32>
    %63 = vector.broadcast %60 : vector<1x512xf32> to vector<8x512xf32>
    %64 = arith.addf %62, %63 : vector<8x512xf32>
    %cst_32 = arith.constant 0.000000e+00 : f32
    %65 = vector.broadcast %cst_32 : f32 to vector<8x512xf32>
    %66 = arith.cmpf oge, %64, %65 : vector<8x512xf32>
    %cst_33 = arith.constant 2.000000e-01 : f32
    %67 = vector.broadcast %cst_33 : f32 to vector<8x512xf32>
    %68 = arith.mulf %67, %64 : vector<8x512xf32>
    %69 = arith.select %66, %64, %68 : vector<8x512xi1>, vector<8x512xf32>
    %c0_34 = arith.constant 0 : index
    %c0_35 = arith.constant 0 : index
    %70 = vector.load %arg3[%c0_34, %c0_35] : memref<8x512xf32, #tpu.memory_space<vmem>>, vector<8x512xf32>
    %71 = arith.mulf %69, %70 : vector<8x512xf32>
    %72 = arith.truncf %71 : vector<8x512xf32> to vector<8x512xbf16>
    %c0_36 = arith.constant 0 : index
    %c0_37 = arith.constant 0 : index
    %73 = vector.load %arg12[%c0_36, %c0_37] : memref<512x784xbf16, #tpu.memory_space<vmem>>, vector<512x784xbf16>
    %cst_38 = arith.constant dense<0.000000e+00> : vector<8x784xf32>
    %74 = tpu.matmul %72, %73, %cst_38 {dimension_numbers = #tpu.dot_dimension_numbers<[1], [0], [0], [1], [0, 0, 1, 1], [], []>} : vector<8x512xbf16>, vector<512x784xbf16>, vector<8x784xf32> -> vector<8x784xf32>
    %c0_39 = arith.constant 0 : index
    %c0_40 = arith.constant 0 : index
    %75 = vector.load %arg13[%c0_39, %c0_40] : memref<1x784xf32, #tpu.memory_space<vmem>>, vector<1x784xf32>
    %76 = vector.broadcast %75 : vector<1x784xf32> to vector<8x784xf32>
    %77 = arith.addf %74, %76 : vector<8x784xf32>
    %c0_41 = arith.constant 0 : index
    %c0_42 = arith.constant 0 : index
    %78 = vector.load %arg14[%c0_41, %c0_42] : memref<1x784xf32, #tpu.memory_space<vmem>>, vector<1x784xf32>
    %c0_43 = arith.constant 0 : index
    %c0_44 = arith.constant 0 : index
    %79 = vector.load %arg15[%c0_43, %c0_44] : memref<1x784xf32, #tpu.memory_space<vmem>>, vector<1x784xf32>
    %cst_45 = arith.constant dense<0.000000e+00> : vector<784xf32>
    %80 = vector.multi_reduction <add>, %77, %cst_45 [0] : vector<8x784xf32> to vector<784xf32>
    %81 = vector.shape_cast %80 : vector<784xf32> to vector<1x784xf32>
    %cst_46 = arith.constant 8.000000e+00 : f32
    %82 = vector.broadcast %cst_46 : f32 to vector<1x784xf32>
    %83 = arith.divf %81, %82 : vector<1x784xf32>
    %84 = vector.broadcast %83 : vector<1x784xf32> to vector<8x784xf32>
    %85 = arith.subf %77, %84 : vector<8x784xf32>
    %86 = arith.mulf %85, %85 : vector<8x784xf32>
    %cst_47 = arith.constant dense<0.000000e+00> : vector<784xf32>
    %87 = vector.multi_reduction <add>, %86, %cst_47 [0] : vector<8x784xf32> to vector<784xf32>
    %88 = vector.shape_cast %87 : vector<784xf32> to vector<1x784xf32>
    %cst_48 = arith.constant 8.000000e+00 : f32
    %89 = vector.broadcast %cst_48 : f32 to vector<1x784xf32>
    %90 = arith.divf %88, %89 : vector<1x784xf32>
    %cst_49 = arith.constant 9.99999974E-6 : f32
    %91 = vector.broadcast %cst_49 : f32 to vector<1x784xf32>
    %92 = arith.addf %90, %91 : vector<1x784xf32>
    %93 = math.rsqrt %92 : vector<1x784xf32>
    %94 = arith.mulf %78, %93 : vector<1x784xf32>
    %95 = arith.mulf %83, %94 : vector<1x784xf32>
    %96 = arith.subf %79, %95 : vector<1x784xf32>
    %97 = vector.broadcast %94 : vector<1x784xf32> to vector<8x784xf32>
    %98 = arith.mulf %77, %97 : vector<8x784xf32>
    %99 = vector.broadcast %96 : vector<1x784xf32> to vector<8x784xf32>
    %100 = arith.addf %98, %99 : vector<8x784xf32>
    %101 = math.tanh %100 : vector<8x784xf32>
    %c0_50 = arith.constant 0 : index
    %c0_51 = arith.constant 0 : index
    %102 = vector.load %arg16[%c0_50, %c0_51] : memref<8x784xf32, #tpu.memory_space<vmem>>, vector<8x784xf32>
    tpu.vector_store %arg16[%c0_50, %c0_51], %101 {strides = array<i32>} : memref<8x784xf32, #tpu.memory_space<vmem>>, vector<8x784xf32>,
    return
  }
  func.func @transform_0(%arg0: i32) -> (i32, i32) {
    %c0_i32 = arith.constant 0 : i32
    %c0_i32_0 = arith.constant 0 : i32
    %c0_i32_1 = arith.constant 0 : i32
    return %c0_i32, %c0_i32_0 : i32, i32
  }
  func.func @transform_1(%arg0: i32) -> (i32, i32) {
    %c0_i32 = arith.constant 0 : i32
    %c0_i32_0 = arith.constant 0 : i32
    %c0_i32_1 = arith.constant 0 : i32
    return %c0_i32, %c0_i32_0 : i32, i32
  }
  func.func @transform_2(%arg0: i32) -> (i32, i32) {
    %c0_i32 = arith.constant 0 : i32
    %c0_i32_0 = arith.constant 0 : i32
    %c0_i32_1 = arith.constant 0 : i32
    return %c0_i32, %c0_i32_0 : i32, i32
  }
  func.func @transform_3(%arg0: i32) -> (i32, i32) {
    %c0_i32 = arith.constant 0 : i32
    %c0_i32_0 = arith.constant 0 : i32
    %c0_i32_1 = arith.constant 0 : i32
    return %c0_i32, %c0_i32_0 : i32, i32
  }
  func.func @transform_4(%arg0: i32) -> (i32, i32) {
    %c0_i32 = arith.constant 0 : i32
    %c0_i32_0 = arith.constant 0 : i32
    %c0_i32_1 = arith.constant 0 : i32
    return %c0_i32, %c0_i32_0 : i32, i32
  }
  func.func @transform_5(%arg0: i32) -> (i32, i32) {
    %c0_i32 = arith.constant 0 : i32
    %c0_i32_0 = arith.constant 0 : i32
    %c0_i32_1 = arith.constant 0 : i32
    return %c0_i32, %c0_i32_0 : i32, i32
  }
  func.func @transform_6(%arg0: i32) -> (i32, i32) {
    %c0_i32 = arith.constant 0 : i32
    %c0_i32_0 = arith.constant 0 : i32
    %c0_i32_1 = arith.constant 0 : i32
    return %c0_i32, %c0_i32_0 : i32, i32
  }
  func.func @transform_7(%arg0: i32) -> (i32, i32) {
    %c0_i32 = arith.constant 0 : i32
    %c0_i32_0 = arith.constant 0 : i32
    %c0_i32_1 = arith.constant 0 : i32
    return %c0_i32, %c0_i32_0 : i32, i32
  }
  func.func @transform_8(%arg0: i32) -> (i32, i32) {
    %c0_i32 = arith.constant 0 : i32
    %c0_i32_0 = arith.constant 0 : i32
    %c0_i32_1 = arith.constant 0 : i32
    return %c0_i32, %c0_i32_0 : i32, i32
  }
  func.func @transform_9(%arg0: i32) -> (i32, i32) {
    %c0_i32 = arith.constant 0 : i32
    %c0_i32_0 = arith.constant 0 : i32
    %c0_i32_1 = arith.constant 0 : i32
    return %c0_i32, %c0_i32_0 : i32, i32
  }
  func.func @transform_10(%arg0: i32) -> (i32, i32) {
    %c0_i32 = arith.constant 0 : i32
    %c0_i32_0 = arith.constant 0 : i32
    %c0_i32_1 = arith.constant 0 : i32
    return %c0_i32, %c0_i32_0 : i32, i32
  }
  func.func @transform_11(%arg0: i32) -> (i32, i32) {
    %c0_i32 = arith.constant 0 : i32
    %c0_i32_0 = arith.constant 0 : i32
    %c0_i32_1 = arith.constant 0 : i32
    return %c0_i32, %c0_i32_0 : i32, i32
  }
  func.func @transform_12(%arg0: i32) -> (i32, i32) {
    %c0_i32 = arith.constant 0 : i32
    %c0_i32_0 = arith.constant 0 : i32
    %c0_i32_1 = arith.constant 0 : i32
    return %c0_i32, %c0_i32_0 : i32, i32
  }
  func.func @transform_13(%arg0: i32) -> (i32, i32) {
    %c0_i32 = arith.constant 0 : i32
    %c0_i32_0 = arith.constant 0 : i32
    %c0_i32_1 = arith.constant 0 : i32
    return %c0_i32, %c0_i32_0 : i32, i32
  }
  func.func @transform_14(%arg0: i32) -> (i32, i32) {
    %c0_i32 = arith.constant 0 : i32
    %c0_i32_0 = arith.constant 0 : i32
    %c0_i32_1 = arith.constant 0 : i32
    return %c0_i32, %c0_i32_0 : i32, i32
  }
  func.func @transform_15(%arg0: i32) -> (i32, i32) {
    %c0_i32 = arith.constant 0 : i32
    %c0_i32_0 = arith.constant 0 : i32
    %c0_i32_1 = arith.constant 0 : i32
    return %c0_i32, %c0_i32_0 : i32, i32
  }
}

</mosaic_0001>

<llo_original>
// kernel: gen_forward.3
$region0: #{gen_forward.3}
  #allocation0 [shape = 'u32[]', space=smem, size = 0x4, offset = 0x4, fixed_abs, tag = 'smem constant byte address 0x4 - core index']
  #allocation1 [shape = 'u32[144,128]{1,0:T(1,128)}', space=vmem, size = 0x12000, scoped, tag = 'internal scratch']
  %s0 = inlined_call_operand.vmem [shape: bf16[8,128], index: 0, kind: input, shape index: {}]
  %s1 = inlined_call_operand.vmem [shape: f32[8,512], index: 1, kind: input, shape index: {}]
  %s2 = inlined_call_operand.vmem [shape: f32[8,512], index: 2, kind: input, shape index: {}]
  %s3 = inlined_call_operand.vmem [shape: bf16[128,512], index: 3, kind: input, shape index: {}]
  %s4 = inlined_call_operand.vmem [shape: f32[1,512], index: 4, kind: input, shape index: {}]
  %s5 = inlined_call_operand.vmem [shape: f32[1,512], index: 5, kind: input, shape index: {}]
  %s6 = inlined_call_operand.vmem [shape: f32[1,512], index: 6, kind: input, shape index: {}]
  %s7 = inlined_call_operand.vmem [shape: bf16[512,512], index: 7, kind: input, shape index: {}]
  %s8 = inlined_call_operand.vmem [shape: f32[1,512], index: 8, kind: input, shape index: {}]
  %s9 = inlined_call_operand.vmem [shape: f32[1,512], index: 9, kind: input, shape index: {}]
  %s10 = inlined_call_operand.vmem [shape: f32[1,512], index: 10, kind: input, shape index: {}]
  %s11 = inlined_call_operand.vmem [shape: bf16[512,784], index: 11, kind: input, shape index: {}]
  %s12 = inlined_call_operand.vmem [shape: f32[1,784], index: 12, kind: input, shape index: {}]
  %s13 = inlined_call_operand.vmem [shape: f32[1,784], index: 13, kind: input, shape index: {}]
  %s14 = inlined_call_operand.vmem [shape: f32[1,784], index: 14, kind: input, shape index: {}]
  %s15 = inlined_call_operand.hbm [shape: f32[8,784], index: 15, kind: output, shape index: {}]
  %s16 = sld [smem:[#allocation0]]
  $region70: #{gen_forward.3} parent=0
    _
  %s18 = ssub.s32 1, %s16
  %s19 = scalar_select 0, %s18, %s16
  $region1: #{gen_forward.3} parent=0
    #allocation2 [shape = 'u8[28672]{0}', space=vmem, size = 0x7000, scoped, tag = 'output window, operand 0, single buffered']
    #allocation3 [shape = 's32[1]{0}', space=sflag, size = 0x4, scoped, tag = 'scoped memory for gen_forward.3']
    %20 = vsyncpa [#allocation3], 0
    // Predicated region
    $region2: #{gen_forward.3} parent=1 // pred_check
      _
    $region3: #{gen_forward.3} parent=1 // pred_check_branch
      %22 = sbr.rel (0) target = $region5
    $region4: #{gen_forward.3} parent=1 // pred_region
      _
    $region5: #{gen_forward.3} parent=1 // pred_fallthru
      _
    // Predicated region
    $region6: #{gen_forward.3} parent=1 // pred_check
      _
    $region7: #{gen_forward.3} parent=1 // pred_check_branch
      %24 = sbr.rel (0) target = $region9
    $region8: #{gen_forward.3} parent=1 // pred_region
      _
    $region9: #{gen_forward.3} parent=1 // pred_fallthru
      _
    // Predicated region
    $region10: #{gen_forward.3} parent=1 // pred_check
      _
    $region11: #{gen_forward.3} parent=1 // pred_check_branch
      %26 = sbr.rel (0) target = $region13
    $region12: #{gen_forward.3} parent=1 // pred_region
      _
    $region13: #{gen_forward.3} parent=1 // pred_fallthru
      _
    // Predicated region
    $region14: #{gen_forward.3} parent=1 // pred_check
      _
    $region15: #{gen_forward.3} parent=1 // pred_check_branch
      %28 = sbr.rel (0) target = $region17
    $region16: #{gen_forward.3} parent=1 // pred_region
      _
    $region17: #{gen_forward.3} parent=1 // pred_fallthru
      _
    // Predicated region
    $region18: #{gen_forward.3} parent=1 // pred_check
      _
    $region19: #{gen_forward.3} parent=1 // pred_check_branch
      %30 = sbr.rel (0) target = $region21
    $region20: #{gen_forward.3} parent=1 // pred_region
      _
    $region21: #{gen_forward.3} parent=1 // pred_fallthru
      _
    // Predicated region
    $region22: #{gen_forward.3} parent=1 // pred_check
      _
    $region23: #{gen_forward.3} parent=1 // pred_check_branch
      %32 = sbr.rel (0) target = $region25
    $region24: #{gen_forward.3} parent=1 // pred_region
      _
    $region25: #{gen_forward.3} parent=1 // pred_fallthru
      _
    // Predicated region
    $region26: #{gen_forward.3} parent=1 // pred_check
      _
    $region27: #{gen_forward.3} parent=1 // pred_check_branch
      %34 = sbr.rel (0) target = $region29
    $region28: #{gen_forward.3} parent=1 // pred_region
      _
    $region29: #{gen_forward.3} parent=1 // pred_fallthru
      _
    // Predicated region
    $region30: #{gen_forward.3} parent=1 // pred_check
      _
    $region31: #{gen_forward.3} parent=1 // pred_check_branch
      %36 = sbr.rel (0) target = $region33
    $region32: #{gen_forward.3} parent=1 // pred_region
      _
    $region33: #{gen_forward.3} parent=1 // pred_fallthru
      _
    // Predicated region
    $region34: #{gen_forward.3} parent=1 // pred_check
      _
    $region35: #{gen_forward.3} parent=1 // pred_check_branch
      %38 = sbr.rel (0) target = $region37
    $region36: #{gen_forward.3} parent=1 // pred_region
      _
    $region37: #{gen_forward.3} parent=1 // pred_fallthru
      _
    // Predicated region
    $region38: #{gen_forward.3} parent=1 // pred_check
      _
    $region39: #{gen_forward.3} parent=1 // pred_check_branch
      %40 = sbr.rel (0) target = $region41
    $region40: #{gen_forward.3} parent=1 // pred_region
      _
    $region41: #{gen_forward.3} parent=1 // pred_fallthru
      _
    // Predicated region
    $region42: #{gen_forward.3} parent=1 // pred_check
      _
    $region43: #{gen_forward.3} parent=1 // pred_check_branch
      %42 = sbr.rel (0) target = $region45
    $region44: #{gen_forward.3} parent=1 // pred_region
      _
    $region45: #{gen_forward.3} parent=1 // pred_fallthru
      _
    // Predicated region
    $region46: #{gen_forward.3} parent=1 // pred_check
      _
    $region47: #{gen_forward.3} parent=1 // pred_check_branch
      %44 = sbr.rel (0) target = $region49
    $region48: #{gen_forward.3} parent=1 // pred_region
      _
    $region49: #{gen_forward.3} parent=1 // pred_fallthru
      _
    // Predicated region
    $region50: #{gen_forward.3} parent=1 // pred_check
      _
    $region51: #{gen_forward.3} parent=1 // pred_check_branch
      %46 = sbr.rel (0) target = $region53
    $region52: #{gen_forward.3} parent=1 // pred_region
      _
    $region53: #{gen_forward.3} parent=1 // pred_fallthru
      _
    // Predicated region
    $region54: #{gen_forward.3} parent=1 // pred_check
      _
    $region55: #{gen_forward.3} parent=1 // pred_check_branch
      %48 = sbr.rel (0) target = $region57
    $region56: #{gen_forward.3} parent=1 // pred_region
      _
    $region57: #{gen_forward.3} parent=1 // pred_fallthru
      _
    // Predicated region
    $region58: #{gen_forward.3} parent=1 // pred_check
      _
    $region59: #{gen_forward.3} parent=1 // pred_check_branch
      %50 = sbr.rel (0) target = $region61
    $region60: #{gen_forward.3} parent=1 // pred_region
      _
    $region61: #{gen_forward.3} parent=1 // pred_fallthru
      _
    %v52 = vld [vmem:[%s0] sm:$0xf]
    %v53 = vld [vmem:[%s3] sm:$0xff]
    %v54 = vld [vmem:[%s3 + $0x8] sm:$0xff]
    %v55 = vld [vmem:[%s3 + $0x10] sm:$0xff]
    %v56 = vld [vmem:[%s3 + $0x18] sm:$0xff]
    %v57 = vld [vmem:[%s3 + $0x20] sm:$0xff]
    %v58 = vld [vmem:[%s3 + $0x28] sm:$0xff]
    %v59 = vld [vmem:[%s3 + $0x30] sm:$0xff]
    %v60 = vld [vmem:[%s3 + $0x38] sm:$0xff]
    %v61 = vld [vmem:[%s3 + $0x40] sm:$0xff]
    %v62 = vld [vmem:[%s3 + $0x48] sm:$0xff]
    %v63 = vld [vmem:[%s3 + $0x50] sm:$0xff]
    %v64 = vld [vmem:[%s3 + $0x58] sm:$0xff]
    %v65 = vld [vmem:[%s3 + $0x60] sm:$0xff]
    %v66 = vld [vmem:[%s3 + $0x68] sm:$0xff]
    %v67 = vld [vmem:[%s3 + $0x70] sm:$0xff]
    %v68 = vld [vmem:[%s3 + $0x78] sm:$0xff]
    %v69 = vld [vmem:[%s3 + $0x80] sm:$0xff]
    %v70 = vld [vmem:[%s3 + $0x88] sm:$0xff]
    %v71 = vld [vmem:[%s3 + $0x90] sm:$0xff]
    %v72 = vld [vmem:[%s3 + $0x98] sm:$0xff]
    %v73 = vld [vmem:[%s3 + $0xa0] sm:$0xff]
    %v74 = vld [vmem:[%s3 + $0xa8] sm:$0xff]
    %v75 = vld [vmem:[%s3 + $0xb0] sm:$0xff]
    %v76 = vld [vmem:[%s3 + $0xb8] sm:$0xff]
    %v77 = vld [vmem:[%s3 + $0xc0] sm:$0xff]
    %v78 = vld [vmem:[%s3 + $0xc8] sm:$0xff]
    %v79 = vld [vmem:[%s3 + $0xd0] sm:$0xff]
    %v80 = vld [vmem:[%s3 + $0xd8] sm:$0xff]
    %v81 = vld [vmem:[%s3 + $0xe0] sm:$0xff]
    %v82 = vld [vmem:[%s3 + $0xe8] sm:$0xff]
    %v83 = vld [vmem:[%s3 + $0xf0] sm:$0xff]
    %v84 = vld [vmem:[%s3 + $0xf8] sm:$0xff]
    %v85 = vld [vmem:[%s4] sm:$0xf]
    %v87 = vlaneseq
    %v88 = vshrl.u32 %v87, 7
    %v89 = vsub.s32 0, %v88
    %v90 = vrot.slane %v85, %v89
    %v91 = vlaneseq
    %v92 = vshrl.u32 %v91, 7
    %v93 = vsub.s32 1, %v92
    %v94 = vrot.slane %v85, %v93
    %v95 = vlaneseq
    %v96 = vshrl.u32 %v95, 7
    %v97 = vsub.s32 2, %v96
    %v98 = vrot.slane %v85, %v97
    %v99 = vlaneseq
    %v100 = vshrl.u32 %v99, 7
    %v101 = vsub.s32 3, %v100
    %v102 = vrot.slane %v85, %v101
    %v139 = vunpack.c.l.b16 %v53
    %v140 = vunpack.c.h.b16 %v53
    %v141 = vunpack.c.l.b16 %v54
    %v142 = vunpack.c.h.b16 %v54
    %v143 = vunpack.c.l.b16 %v55
    %v144 = vunpack.c.h.b16 %v55
    %v145 = vunpack.c.l.b16 %v56
    %v146 = vunpack.c.h.b16 %v56
    %v147 = vunpack.c.l.b16 %v57
    %v148 = vunpack.c.h.b16 %v57
    %v149 = vunpack.c.l.b16 %v58
    %v150 = vunpack.c.h.b16 %v58
    %v151 = vunpack.c.l.b16 %v59
    %v152 = vunpack.c.h.b16 %v59
    %v153 = vunpack.c.l.b16 %v60
    %v154 = vunpack.c.h.b16 %v60
    %v155 = vunpack.c.l.b16 %v61
    %v156 = vunpack.c.h.b16 %v61
    %v157 = vunpack.c.l.b16 %v62
    %v158 = vunpack.c.h.b16 %v62
    %v159 = vunpack.c.l.b16 %v63
    %v160 = vunpack.c.h.b16 %v63
    %v161 = vunpack.c.l.b16 %v64
    %v162 = vunpack.c.h.b16 %v64
    %v163 = vunpack.c.l.b16 %v65
    %v164 = vunpack.c.h.b16 %v65
    %v165 = vunpack.c.l.b16 %v66
    %v166 = vunpack.c.h.b16 %v66
    %v167 = vunpack.c.l.b16 %v67
    %v168 = vunpack.c.h.b16 %v67
    %v169 = vunpack.c.l.b16 %v68
    %v170 = vunpack.c.h.b16 %v68
    %v171 = vunpack.c.l.b16 %v69
    %v172 = vunpack.c.h.b16 %v69
    %v173 = vunpack.c.l.b16 %v70
    %v174 = vunpack.c.h.b16 %v70
    %v175 = vunpack.c.l.b16 %v71
    %v176 = vunpack.c.h.b16 %v71
    %v177 = vunpack.c.l.b16 %v72
    %v178 = vunpack.c.h.b16 %v72
    %v179 = vunpack.c.l.b16 %v73
    %v180 = vunpack.c.h.b16 %v73
    %v181 = vunpack.c.l.b16 %v74
    %v182 = vunpack.c.h.b16 %v74
    %v183 = vunpack.c.l.b16 %v75
    %v184 = vunpack.c.h.b16 %v75
    %v185 = vunpack.c.l.b16 %v76
    %v186 = vunpack.c.h.b16 %v76
    %v187 = vunpack.c.l.b16 %v77
    %v188 = vunpack.c.h.b16 %v77
    %v189 = vunpack.c.l.b16 %v78
    %v190 = vunpack.c.h.b16 %v78
    %v191 = vunpack.c.l.b16 %v79
    %v192 = vunpack.c.h.b16 %v79
    %v193 = vunpack.c.l.b16 %v80
    %v194 = vunpack.c.h.b16 %v80
    %v195 = vunpack.c.l.b16 %v81
    %v196 = vunpack.c.h.b16 %v81
    %v197 = vunpack.c.l.b16 %v82
    %v198 = vunpack.c.h.b16 %v82
    %v199 = vunpack.c.l.b16 %v83
    %v200 = vunpack.c.h.b16 %v83
    %v201 = vunpack.c.l.b16 %v84
    %v202 = vunpack.c.h.b16 %v84
    %v203 = vpack.c.b16 %v143, %v139
    %v204 = vpack.c.b16 %v144, %v140
    %v205 = vpack.c.b16 %v145, %v141
    %v206 = vpack.c.b16 %v146, %v142
    %v207 = vpack.c.b16 %v151, %v147
    %v208 = vpack.c.b16 %v152, %v148
    %v209 = vpack.c.b16 %v153, %v149
    %v210 = vpack.c.b16 %v154, %v150
    %v211 = vpack.c.b16 %v159, %v155
    %v212 = vpack.c.b16 %v160, %v156
    %v213 = vpack.c.b16 %v161, %v157
    %v214 = vpack.c.b16 %v162, %v158
    %v215 = vpack.c.b16 %v167, %v163
    %v216 = vpack.c.b16 %v168, %v164
    %v217 = vpack.c.b16 %v169, %v165
    %v218 = vpack.c.b16 %v170, %v166
    %v219 = vpack.c.b16 %v175, %v171
    %v220 = vpack.c.b16 %v176, %v172
    %v221 = vpack.c.b16 %v177, %v173
    %v222 = vpack.c.b16 %v178, %v174
    %v223 = vpack.c.b16 %v183, %v179
    %v224 = vpack.c.b16 %v184, %v180
    %v225 = vpack.c.b16 %v185, %v181
    %v226 = vpack.c.b16 %v186, %v182
    %v227 = vpack.c.b16 %v191, %v187
    %v228 = vpack.c.b16 %v192, %v188
    %v229 = vpack.c.b16 %v193, %v189
    %v230 = vpack.c.b16 %v194, %v190
    %v231 = vpack.c.b16 %v199, %v195
    %v232 = vpack.c.b16 %v200, %v196
    %v233 = vpack.c.b16 %v201, %v197
    %v234 = vpack.c.b16 %v202, %v198
    %267 = vmatprep.subr.bf16.mxu0 %v204
    %268 = vmatpush1.bf16.msra.mxu0 %v203
    %269 = vmatprep.subr.bf16.mxu0 %v208
    %270 = vmatpush1.bf16.msra.mxu0 %v207
    %271 = vmatprep.subr.bf16.mxu0 %v212
    %272 = vmatpush1.bf16.msra.mxu0 %v211
    %273 = vmatprep.subr.bf16.mxu0 %v216
    %274 = vmatpush1.bf16.msra.mxu0 %v215
    %275 = vmatprep.subr.bf16.mxu0 %v220
    %276 = vmatpush1.bf16.msra.mxu0 %v219
    %277 = vmatprep.subr.bf16.mxu0 %v224
    %278 = vmatpush1.bf16.msra.mxu0 %v223
    %279 = vmatprep.subr.bf16.mxu0 %v228
    %280 = vmatpush1.bf16.msra.mxu0 %v227
    %281 = vmatprep.subr.bf16.mxu0 %v232
    %282 = vmatpush1.bf16.msra.mxu0 %v231
    %283 = vmatprep.subr.bf16.mxu0 0
    %284 = vmatpush1.bf16.msra.mxu0 0
    %285 = vmatprep.subr.bf16.mxu0 0
    %286 = vmatpush1.bf16.msra.mxu0 0
    %287 = vmatprep.subr.bf16.mxu0 0
    %288 = vmatpush1.bf16.msra.mxu0 0
    %289 = vmatprep.subr.bf16.mxu0 0
    %290 = vmatpush1.bf16.msra.mxu0 0
    %291 = vmatprep.subr.bf16.mxu0 0
    %292 = vmatpush1.bf16.msra.mxu0 0
    %293 = vmatprep.subr.bf16.mxu0 0
    %294 = vmatpush1.bf16.msra.mxu0 0
    %295 = vmatprep.subr.bf16.mxu0 0
    %296 = vmatpush1.bf16.msra.mxu0 0
    %297 = vmatprep.subr.bf16.mxu0 0
    %298 = vmatpush1.bf16.msra.mxu0 0
    %299 = vmatprep.mubr.bf16.mxu0 0
    %300 = vmatmul.mubr.bf16.gmra.mrb[0].mxu0 %v52
    %v301 = vpop.f32.mrb[0].mxu0
    %v302 = vadd.f32 %v90, %v301
    %v303 = vpop.f32.mrb[0].mxu0
    %v304 = vadd.f32 %v94, %v303
    %v305 = vpop.f32.mrb[0].mxu0
    %v306 = vpop.f32.mrb[0].mxu0
    %307 = vdwg.mxu0
    %308 = vmatprep.subr.bf16.mxu0 %v206
    %309 = vmatpush1.bf16.msra.mxu0 %v205
    %310 = vmatprep.subr.bf16.mxu0 %v210
    %311 = vmatpush1.bf16.msra.mxu0 %v209
    %312 = vmatprep.subr.bf16.mxu0 %v214
    %313 = vmatpush1.bf16.msra.mxu0 %v213
    %314 = vmatprep.subr.bf16.mxu0 %v218
    %315 = vmatpush1.bf16.msra.mxu0 %v217
    %316 = vmatprep.subr.bf16.mxu0 %v222
    %317 = vmatpush1.bf16.msra.mxu0 %v221
    %318 = vmatprep.subr.bf16.mxu0 %v226
    %319 = vmatpush1.bf16.msra.mxu0 %v225
    %320 = vmatprep.subr.bf16.mxu0 %v230
    %321 = vmatpush1.bf16.msra.mxu0 %v229
    %322 = vmatprep.subr.bf16.mxu0 %v234
    %323 = vmatpush1.bf16.msra.mxu0 %v233
    %324 = vmatprep.subr.bf16.mxu0 0
    %325 = vmatpush1.bf16.msra.mxu0 0
    %326 = vmatprep.subr.bf16.mxu0 0
    %327 = vmatpush1.bf16.msra.mxu0 0
    %328 = vmatprep.subr.bf16.mxu0 0
    %329 = vmatpush1.bf16.msra.mxu0 0
    %330 = vmatprep.subr.bf16.mxu0 0
    %331 = vmatpush1.bf16.msra.mxu0 0
    %332 = vmatprep.subr.bf16.mxu0 0
    %333 = vmatpush1.bf16.msra.mxu0 0
    %334 = vmatprep.subr.bf16.mxu0 0
    %335 = vmatpush1.bf16.msra.mxu0 0
    %336 = vmatprep.subr.bf16.mxu0 0
    %337 = vmatpush1.bf16.msra.mxu0 0
    %338 = vmatprep.subr.bf16.mxu0 0
    %339 = vmatpush1.bf16.msra.mxu0 0
    %340 = vmatprep.mubr.bf16.mxu0 0
    %341 = vmatmul.mubr.bf16.gmra.mrb[0].mxu0 %v52
    %v342 = vpop.f32.mrb[0].mxu0
    %v343 = vadd.f32 %v98, %v342
    %v344 = vpop.f32.mrb[0].mxu0
    %v345 = vadd.f32 %v102, %v344
    %v346 = vpop.f32.mrb[0].mxu0
    %v347 = vpop.f32.mrb[0].mxu0
    %348 = vdwg.mxu0
    %v349 = vld [vmem:[%s5] sm:$0xf]
    %v350 = vld [vmem:[%s6] sm:$0xf]
    %v351 = vrot.slane %v302, 4
    %v352 = vadd.f32 %v302, %v351
    %v353 = vrot.slane %v352, 2
    %v354 = vadd.f32 %v352, %v353
    %v355 = vrot.slane %v354, 1
    %v356 = vadd.f32 %v354, %v355
    %v357 = vrot.slane %v304, 4
    %v358 = vadd.f32 %v304, %v357
    %v359 = vrot.slane %v358, 2
    %v360 = vadd.f32 %v358, %v359
    %v361 = vrot.slane %v360, 1
    %v362 = vadd.f32 %v360, %v361
    %v363 = vrot.slane %v343, 4
    %v364 = vadd.f32 %v343, %v363
    %v365 = vrot.slane %v364, 2
    %v366 = vadd.f32 %v364, %v365
    %v367 = vrot.slane %v366, 1
    %v368 = vadd.f32 %v366, %v367
    %v369 = vrot.slane %v345, 4
    %v370 = vadd.f32 %v345, %v369
    %v371 = vrot.slane %v370, 2
    %v372 = vadd.f32 %v370, %v371
    %v373 = vrot.slane %v372, 1
    %v374 = vadd.f32 %v372, %v373
    %v375 = vrcp.pop 8.0
    %v376 = vmul.f32 %v356, %v375
    %v377 = vmul.f32 %v362, %v375
    %v378 = vmul.f32 %v368, %v375
    %v379 = vmul.f32 %v374, %v375
    %v380 = vsub.f32 %v302, %v376
    %v381 = vsub.f32 %v304, %v377
    %v382 = vsub.f32 %v343, %v378
    %v383 = vsub.f32 %v345, %v379
    %v384 = vmul.f32 %v380, %v380
    %v385 = vmul.f32 %v381, %v381
    %v386 = vmul.f32 %v382, %v382
    %v387 = vmul.f32 %v383, %v383
    %v388 = vrot.slane %v384, 4
    %v389 = vadd.f32 %v384, %v388
    %v390 = vrot.slane %v389, 2
    %v391 = vadd.f32 %v389, %v390
    %v392 = vrot.slane %v391, 1
    %v393 = vadd.f32 %v391, %v392
    %v394 = vrot.slane %v385, 4
    %v395 = vadd.f32 %v385, %v394
    %v396 = vrot.slane %v395, 2
    %v397 = vadd.f32 %v395, %v396
    %v398 = vrot.slane %v397, 1
    %v399 = vadd.f32 %v397, %v398
    %v400 = vrot.slane %v386, 4
    %v401 = vadd.f32 %v386, %v400
    %v402 = vrot.slane %v401, 2
    %v403 = vadd.f32 %v401, %v402
    %v404 = vrot.slane %v403, 1
    %v405 = vadd.f32 %v403, %v404
    %v406 = vrot.slane %v387, 4
    %v407 = vadd.f32 %v387, %v406
    %v408 = vrot.slane %v407, 2
    %v409 = vadd.f32 %v407, %v408
    %v410 = vrot.slane %v409, 1
    %v411 = vadd.f32 %v409, %v410
    %v412 = vmul.f32 %v393, %v375
    %v413 = vmul.f32 %v399, %v375
    %v414 = vmul.f32 %v405, %v375
    %v415 = vmul.f32 %v411, %v375
    %v416 = vadd.f32 %v412, 1e-05
    %v417 = vadd.f32 %v413, 1e-05
    %v418 = vadd.f32 %v414, 1e-05
    %v419 = vadd.f32 %v415, 1e-05
    %v420 = vrsqrt.pop %v416
    %v421 = vrsqrt.pop %v417
    %v422 = vrsqrt.pop %v418
    %v423 = vrsqrt.pop %v419
    %v428 = vcombine.low %v420, %v421
    %v429 = vcombine.low %v422, %v423
    %v431 = vunpack.c.l.s4 1966171168
    %v432 = vunpack.c.0.s8 %v431
    %v433 = vlaneseq
    %v434 = vshrl.u32 %v433, 7
    %v435 = vsub.s32 %v432, %v434
    %v436 = vrot.slane %v428, %v435
    %v438 = vunpack.c.l.s4 1966171168
    %v439 = vunpack.c.0.s8 %v438
    %v440 = vlaneseq
    %v441 = vshrl.u32 %v440, 7
    %v442 = vsub.s32 %v439, %v441
    %v443 = vrot.slane %v429, %v442
    %v444 = vcombine.low %v436, %v443
    %v446 = vunpack.c.l.s4 1966171168
    %v447 = vunpack.c.0.s8 %v446
    %v448 = vlaneseq
    %v449 = vshrl.u32 %v448, 7
    %v450 = vsub.s32 %v447, %v449
    %v451 = vrot.slane %v444, %v450
    %v453 = vmul.f32 %v349, %v451
    %v455 = vlaneseq
    %v456 = vshrl.u32 %v455, 7
    %v457 = vsub.s32 0, %v456
    %v458 = vrot.slane %v453, %v457
    %v459 = vlaneseq
    %v460 = vshrl.u32 %v459, 7
    %v461 = vsub.s32 1, %v460
    %v462 = vrot.slane %v453, %v461
    %v463 = vlaneseq
    %v464 = vshrl.u32 %v463, 7
    %v465 = vsub.s32 2, %v464
    %v466 = vrot.slane %v453, %v465
    %v467 = vlaneseq
    %v468 = vshrl.u32 %v467, 7
    %v469 = vsub.s32 3, %v468
    %v470 = vrot.slane %v453, %v469
    %v475 = vmul.f32 %v376, %v458
    %v476 = vmul.f32 %v377, %v462
    %v477 = vmul.f32 %v378, %v466
    %v478 = vmul.f32 %v379, %v470
    %v483 = vcombine.low %v475, %v476
    %v484 = vcombine.low %v477, %v478
    %v486 = vunpack.c.l.s4 1966171168
    %v487 = vunpack.c.0.s8 %v486
    %v488 = vlaneseq
    %v489 = vshrl.u32 %v488, 7
    %v490 = vsub.s32 %v487, %v489
    %v491 = vrot.slane %v483, %v490
    %v493 = vunpack.c.l.s4 1966171168
    %v494 = vunpack.c.0.s8 %v493
    %v495 = vlaneseq
    %v496 = vshrl.u32 %v495, 7
    %v497 = vsub.s32 %v494, %v496
    %v498 = vrot.slane %v484, %v497
    %v499 = vcombine.low %v491, %v498
    %v501 = vunpack.c.l.s4 1966171168
    %v502 = vunpack.c.0.s8 %v501
    %v503 = vlaneseq
    %v504 = vshrl.u32 %v503, 7
    %v505 = vsub.s32 %v502, %v504
    %v506 = vrot.slane %v499, %v505
    %v508 = vsub.f32 %v350, %v506
    %v509 = vmul.f32 %v302, %v458
    %v510 = vmul.f32 %v304, %v462
    %v511 = vmul.f32 %v343, %v466
    %v512 = vmul.f32 %v345, %v470
    %v514 = vlaneseq
    %v515 = vshrl.u32 %v514, 7
    %v516 = vsub.s32 0, %v515
    %v517 = vrot.slane %v508, %v516
    %v518 = vlaneseq
    %v519 = vshrl.u32 %v518, 7
    %v520 = vsub.s32 1, %v519
    %v521 = vrot.slane %v508, %v520
    %v522 = vlaneseq
    %v523 = vshrl.u32 %v522, 7
    %v524 = vsub.s32 2, %v523
    %v525 = vrot.slane %v508, %v524
    %v526 = vlaneseq
    %v527 = vshrl.u32 %v526, 7
    %v528 = vsub.s32 3, %v527
    %v529 = vrot.slane %v508, %v528
    %v534 = vadd.f32 %v509, %v517
    %v535 = vadd.f32 %v510, %v521
    %v536 = vadd.f32 %v511, %v525
    %v537 = vadd.f32 %v512, %v529
    %vm538 = vcmp.ge.f32.partialorder %v534, 0.0
    %vm539 = vcmp.ge.f32.partialorder %v535, 0.0
    %vm540 = vcmp.ge.f32.partialorder %v536, 0.0
    %vm541 = vcmp.ge.f32.partialorder %v537, 0.0
    %v542 = vmul.f32 %v534, 0.2
    %v543 = vmul.f32 %v535, 0.2
    %v544 = vmul.f32 %v536, 0.2
    %v545 = vmul.f32 %v537, 0.2
    %v546 = vsel %vm538, %v534, %v542
    %v547 = vsel %vm539, %v535, %v543
    %v548 = vsel %vm540, %v536, %v544
    %v549 = vsel %vm541, %v537, %v545
    %v550 = vld [vmem:[%s1] sm:$0xff]
    %v551 = vld [vmem:[%s1 + $0x8] sm:$0xff]
    %v552 = vld [vmem:[%s1 + $0x10] sm:$0xff]
    %v553 = vld [vmem:[%s1 + $0x18] sm:$0xff]
    %v554 = vmul.f32 %v546, %v550
    %v555 = vmul.f32 %v547, %v551
    %v556 = vmul.f32 %v548, %v552
    %v557 = vmul.f32 %v549, %v553
    %v558 = vpack.c.bf16 %v554, %v554
    %v559 = vpack.c.bf16 %v555, %v555
    %v560 = vpack.c.bf16 %v556, %v556
    %v561 = vpack.c.bf16 %v557, %v557
    %v562 = vld [vmem:[%s7] sm:$0xff]
    %v563 = vld [vmem:[%s7 + $0x8] sm:$0xff]
    %v564 = vld [vmem:[%s7 + $0x10] sm:$0xff]
    %v565 = vld [vmem:[%s7 + $0x18] sm:$0xff]
    %v566 = vld [vmem:[%s7 + $0x20] sm:$0xff]
    %v567 = vld [vmem:[%s7 + $0x28] sm:$0xff]
    %v568 = vld [vmem:[%s7 + $0x30] sm:$0xff]
    %v569 = vld [vmem:[%s7 + $0x38] sm:$0xff]
    %v570 = vld [vmem:[%s7 + $0x40] sm:$0xff]
    %v571 = vld [vmem:[%s7 + $0x48] sm:$0xff]
    %v572 = vld [vmem:[%s7 + $0x50] sm:$0xff]
    %v573 = vld [vmem:[%s7 + $0x58] sm:$0xff]
    %v574 = vld [vmem:[%s7 + $0x60] sm:$0xff]
    %v575 = vld [vmem:[%s7 + $0x68] sm:$0xff]
    %v576 = vld [vmem:[%s7 + $0x70] sm:$0xff]
    %v577 = vld [vmem:[%s7 + $0x78] sm:$0xff]
    %v578 = vld [vmem:[%s7 + $0x80] sm:$0xff]
    %v579 = vld [vmem:[%s7 + $0x88] sm:$0xff]
    %v580 = vld [vmem:[%s7 + $0x90] sm:$0xff]
    %v581 = vld [vmem:[%s7 + $0x98] sm:$0xff]
    %v582 = vld [vmem:[%s7 + $0xa0] sm:$0xff]
    %v583 = vld [vmem:[%s7 + $0xa8] sm:$0xff]
    %v584 = vld [vmem:[%s7 + $0xb0] sm:$0xff]
    %v585 = vld [vmem:[%s7 + $0xb8] sm:$0xff]
    %v586 = vld [vmem:[%s7 + $0xc0] sm:$0xff]
    %v587 = vld [vmem:[%s7 + $0xc8] sm:$0xff]
    %v588 = vld [vmem:[%s7 + $0xd0] sm:$0xff]
    %v589 = vld [vmem:[%s7 + $0xd8] sm:$0xff]
    %v590 = vld [vmem:[%s7 + $0xe0] sm:$0xff]
    %v591 = vld [vmem:[%s7 + $0xe8] sm:$0xff]
    %v592 = vld [vmem:[%s7 + $0xf0] sm:$0xff]
    %v593 = vld [vmem:[%s7 + $0xf8] sm:$0xff]
    %v594 = vld [vmem:[%s7 + $0x100] sm:$0xff]
    %v595 = vld [vmem:[%s7 + $0x108] sm:$0xff]
    %v596 = vld [vmem:[%s7 + $0x110] sm:$0xff]
    %v597 = vld [vmem:[%s7 + $0x118] sm:$0xff]
    %v598 = vld [vmem:[%s7 + $0x120] sm:$0xff]
    %v599 = vld [vmem:[%s7 + $0x128] sm:$0xff]
    %v600 = vld [vmem:[%s7 + $0x130] sm:$0xff]
    %v601 = vld [vmem:[%s7 + $0x138] sm:$0xff]
    %v602 = vld [vmem:[%s7 + $0x140] sm:$0xff]
    %v603 = vld [vmem:[%s7 + $0x148] sm:$0xff]
    %v604 = vld [vmem:[%s7 + $0x150] sm:$0xff]
    %v605 = vld [vmem:[%s7 + $0x158] sm:$0xff]
    %v606 = vld [vmem:[%s7 + $0x160] sm:$0xff]
    %v607 = vld [vmem:[%s7 + $0x168] sm:$0xff]
    %v608 = vld [vmem:[%s7 + $0x170] sm:$0xff]
    %v609 = vld [vmem:[%s7 + $0x178] sm:$0xff]
    %v610 = vld [vmem:[%s7 + $0x180] sm:$0xff]
    %v611 = vld [vmem:[%s7 + $0x188] sm:$0xff]
    %v612 = vld [vmem:[%s7 + $0x190] sm:$0xff]
    %v613 = vld [vmem:[%s7 + $0x198] sm:$0xff]
    %v614 = vld [vmem:[%s7 + $0x1a0] sm:$0xff]
    %v615 = vld [vmem:[%s7 + $0x1a8] sm:$0xff]
    %v616 = vld [vmem:[%s7 + $0x1b0] sm:$0xff]
    %v617 = vld [vmem:[%s7 + $0x1b8] sm:$0xff]
    %v618 = vld [vmem:[%s7 + $0x1c0] sm:$0xff]
    %v619 = vld [vmem:[%s7 + $0x1c8] sm:$0xff]
    %v620 = vld [vmem:[%s7 + $0x1d0] sm:$0xff]
    %v621 = vld [vmem:[%s7 + $0x1d8] sm:$0xff]
    %v622 = vld [vmem:[%s7 + $0x1e0] sm:$0xff]
    %v623 = vld [vmem:[%s7 + $0x1e8] sm:$0xff]
    %v624 = vld [vmem:[%s7 + $0x1f0] sm:$0xff]
    %v625 = vld [vmem:[%s7 + $0x1f8] sm:$0xff]
    %v626 = vld [vmem:[%s7 + $0x200] sm:$0xff]
    %v627 = vld [vmem:[%s7 + $0x208] sm:$0xff]
    %v628 = vld [vmem:[%s7 + $0x210] sm:$0xff]
    %v629 = vld [vmem:[%s7 + $0x218] sm:$0xff]
    %v630 = vld [vmem:[%s7 + $0x220] sm:$0xff]
    %v631 = vld [vmem:[%s7 + $0x228] sm:$0xff]
    %v632 = vld [vmem:[%s7 + $0x230] sm:$0xff]
    %v633 = vld [vmem:[%s7 + $0x238] sm:$0xff]
    %v634 = vld [vmem:[%s7 + $0x240] sm:$0xff]
    %v635 = vld [vmem:[%s7 + $0x248] sm:$0xff]
    %v636 = vld [vmem:[%s7 + $0x250] sm:$0xff]
    %v637 = vld [vmem:[%s7 + $0x258] sm:$0xff]
    %v638 = vld [vmem:[%s7 + $0x260] sm:$0xff]
    %v639 = vld [vmem:[%s7 + $0x268] sm:$0xff]
    %v640 = vld [vmem:[%s7 + $0x270] sm:$0xff]
    %v641 = vld [vmem:[%s7 + $0x278] sm:$0xff]
    %v642 = vld [vmem:[%s7 + $0x280] sm:$0xff]
    %v643 = vld [vmem:[%s7 + $0x288] sm:$0xff]
    %v644 = vld [vmem:[%s7 + $0x290] sm:$0xff]
    %v645 = vld [vmem:[%s7 + $0x298] sm:$0xff]
    %v646 = vld [vmem:[%s7 + $0x2a0] sm:$0xff]
    %v647 = vld [vmem:[%s7 + $0x2a8] sm:$0xff]
    %v648 = vld [vmem:[%s7 + $0x2b0] sm:$0xff]
    %v649 = vld [vmem:[%s7 + $0x2b8] sm:$0xff]
    %v650 = vld [vmem:[%s7 + $0x2c0] sm:$0xff]
    %v651 = vld [vmem:[%s7 + $0x2c8] sm:$0xff]
    %v652 = vld [vmem:[%s7 + $0x2d0] sm:$0xff]
    %v653 = vld [vmem:[%s7 + $0x2d8] sm:$0xff]
    %v654 = vld [vmem:[%s7 + $0x2e0] sm:$0xff]
    %v655 = vld [vmem:[%s7 + $0x2e8] sm:$0xff]
    %v656 = vld [vmem:[%s7 + $0x2f0] sm:$0xff]
    %v657 = vld [vmem:[%s7 + $0x2f8] sm:$0xff]
    %v658 = vld [vmem:[%s7 + $0x300] sm:$0xff]
    %v659 = vld [vmem:[%s7 + $0x308] sm:$0xff]
    %v660 = vld [vmem:[%s7 + $0x310] sm:$0xff]
    %v661 = vld [vmem:[%s7 + $0x318] sm:$0xff]
    %v662 = vld [vmem:[%s7 + $0x320] sm:$0xff]
    %v663 = vld [vmem:[%s7 + $0x328] sm:$0xff]
    %v664 = vld [vmem:[%s7 + $0x330] sm:$0xff]
    %v665 = vld [vmem:[%s7 + $0x338] sm:$0xff]
    %v666 = vld [vmem:[%s7 + $0x340] sm:$0xff]
    %v667 = vld [vmem:[%s7 + $0x348] sm:$0xff]
    %v668 = vld [vmem:[%s7 + $0x350] sm:$0xff]
    %v669 = vld [vmem:[%s7 + $0x358] sm:$0xff]
    %v670 = vld [vmem:[%s7 + $0x360] sm:$0xff]
    %v671 = vld [vmem:[%s7 + $0x368] sm:$0xff]
    %v672 = vld [vmem:[%s7 + $0x370] sm:$0xff]
    %v673 = vld [vmem:[%s7 + $0x378] sm:$0xff]
    %v674 = vld [vmem:[%s7 + $0x380] sm:$0xff]
    %v675 = vld [vmem:[%s7 + $0x388] sm:$0xff]
    %v676 = vld [vmem:[%s7 + $0x390] sm:$0xff]
    %v677 = vld [vmem:[%s7 + $0x398] sm:$0xff]
    %v678 = vld [vmem:[%s7 + $0x3a0] sm:$0xff]
    %v679 = vld [vmem:[%s7 + $0x3a8] sm:$0xff]
    %v680 = vld [vmem:[%s7 + $0x3b0] sm:$0xff]
    %v681 = vld [vmem:[%s7 + $0x3b8] sm:$0xff]
    %v682 = vld [vmem:[%s7 + $0x3c0] sm:$0xff]
    %v683 = vld [vmem:[%s7 + $0x3c8] sm:$0xff]
    %v684 = vld [vmem:[%s7 + $0x3d0] sm:$0xff]
    %v685 = vld [vmem:[%s7 + $0x3d8] sm:$0xff]
    %v686 = vld [vmem:[%s7 + $0x3e0] sm:$0xff]
    %v687 = vld [vmem:[%s7 + $0x3e8] sm:$0xff]
    %v688 = vld [vmem:[%s7 + $0x3f0] sm:$0xff]
    %v689 = vld [vmem:[%s7 + $0x3f8] sm:$0xff]
    %v690 = vld [vmem:[%s8] sm:$0xf]
    %v692 = vlaneseq
    %v693 = vshrl.u32 %v692, 7
    %v694 = vsub.s32 0, %v693
    %v695 = vrot.slane %v690, %v694
    %v696 = vlaneseq
    %v697 = vshrl.u32 %v696, 7
    %v698 = vsub.s32 1, %v697
    %v699 = vrot.slane %v690, %v698
    %v700 = vlaneseq
    %v701 = vshrl.u32 %v700, 7
    %v702 = vsub.s32 2, %v701
    %v703 = vrot.slane %v690, %v702
    %v704 = vlaneseq
    %v705 = vshrl.u32 %v704, 7
    %v706 = vsub.s32 3, %v705
    %v707 = vrot.slane %v690, %v706
    %v840 = vunpack.c.l.b16 %v562
    %v841 = vunpack.c.h.b16 %v562
    %v842 = vunpack.c.l.b16 %v563
    %v843 = vunpack.c.h.b16 %v563
    %v844 = vunpack.c.l.b16 %v564
    %v845 = vunpack.c.h.b16 %v564
    %v846 = vunpack.c.l.b16 %v565
    %v847 = vunpack.c.h.b16 %v565
    %v848 = vunpack.c.l.b16 %v566
    %v849 = vunpack.c.h.b16 %v566
    %v850 = vunpack.c.l.b16 %v567
    %v851 = vunpack.c.h.b16 %v567
    %v852 = vunpack.c.l.b16 %v568
    %v853 = vunpack.c.h.b16 %v568
    %v854 = vunpack.c.l.b16 %v569
    %v855 = vunpack.c.h.b16 %v569
    %v856 = vunpack.c.l.b16 %v570
    %v857 = vunpack.c.h.b16 %v570
    %v858 = vunpack.c.l.b16 %v571
    %v859 = vunpack.c.h.b16 %v571
    %v860 = vunpack.c.l.b16 %v572
    %v861 = vunpack.c.h.b16 %v572
    %v862 = vunpack.c.l.b16 %v573
    %v863 = vunpack.c.h.b16 %v573
    %v864 = vunpack.c.l.b16 %v574
    %v865 = vunpack.c.h.b16 %v574
    %v866 = vunpack.c.l.b16 %v575
    %v867 = vunpack.c.h.b16 %v575
    %v868 = vunpack.c.l.b16 %v576
    %v869 = vunpack.c.h.b16 %v576
    %v870 = vunpack.c.l.b16 %v577
    %v871 = vunpack.c.h.b16 %v577
    %v872 = vunpack.c.l.b16 %v578
    %v873 = vunpack.c.h.b16 %v578
    %v874 = vunpack.c.l.b16 %v579
    %v875 = vunpack.c.h.b16 %v579
    %v876 = vunpack.c.l.b16 %v580
    %v877 = vunpack.c.h.b16 %v580
    %v878 = vunpack.c.l.b16 %v581
    %v879 = vunpack.c.h.b16 %v581
    %v880 = vunpack.c.l.b16 %v582
    %v881 = vunpack.c.h.b16 %v582
    %v882 = vunpack.c.l.b16 %v583
    %v883 = vunpack.c.h.b16 %v583
    %v884 = vunpack.c.l.b16 %v584
    %v885 = vunpack.c.h.b16 %v584
    %v886 = vunpack.c.l.b16 %v585
    %v887 = vunpack.c.h.b16 %v585
    %v888 = vunpack.c.l.b16 %v586
    %v889 = vunpack.c.h.b16 %v586
    %v890 = vunpack.c.l.b16 %v587
    %v891 = vunpack.c.h.b16 %v587
    %v892 = vunpack.c.l.b16 %v588
    %v893 = vunpack.c.h.b16 %v588
    %v894 = vunpack.c.l.b16 %v589
    %v895 = vunpack.c.h.b16 %v589
    %v896 = vunpack.c.l.b16 %v590
    %v897 = vunpack.c.h.b16 %v590
    %v898 = vunpack.c.l.b16 %v591
    %v899 = vunpack.c.h.b16 %v591
    %v900 = vunpack.c.l.b16 %v592
    %v901 = vunpack.c.h.b16 %v592
    %v902 = vunpack.c.l.b16 %v593
    %v903 = vunpack.c.h.b16 %v593
    %v904 = vunpack.c.l.b16 %v594
    %v905 = vunpack.c.h.b16 %v594
    %v906 = vunpack.c.l.b16 %v595
    %v907 = vunpack.c.h.b16 %v595
    %v908 = vunpack.c.l.b16 %v596
    %v909 = vunpack.c.h.b16 %v596
    %v910 = vunpack.c.l.b16 %v597
    %v911 = vunpack.c.h.b16 %v597
    %v912 = vunpack.c.l.b16 %v598
    %v913 = vunpack.c.h.b16 %v598
    %v914 = vunpack.c.l.b16 %v599
    %v915 = vunpack.c.h.b16 %v599
    %v916 = vunpack.c.l.b16 %v600
    %v917 = vunpack.c.h.b16 %v600
    %v918 = vunpack.c.l.b16 %v601
    %v919 = vunpack.c.h.b16 %v601
    %v920 = vunpack.c.l.b16 %v602
    %v921 = vunpack.c.h.b16 %v602
    %v922 = vunpack.c.l.b16 %v603
    %v923 = vunpack.c.h.b16 %v603
    %v924 = vunpack.c.l.b16 %v604
    %v925 = vunpack.c.h.b16 %v604
    %v926 = vunpack.c.l.b16 %v605
    %v927 = vunpack.c.h.b16 %v605
    %v928 = vunpack.c.l.b16 %v606
    %v929 = vunpack.c.h.b16 %v606
    %v930 = vunpack.c.l.b16 %v607
    %v931 = vunpack.c.h.b16 %v607
    %v932 = vunpack.c.l.b16 %v608
    %v933 = vunpack.c.h.b16 %v608
    %v934 = vunpack.c.l.b16 %v609
    %v935 = vunpack.c.h.b16 %v609
    %v936 = vunpack.c.l.b16 %v610
    %v937 = vunpack.c.h.b16 %v610
    %v938 = vunpack.c.l.b16 %v611
    %v939 = vunpack.c.h.b16 %v611
    %v940 = vunpack.c.l.b16 %v612
    %v941 = vunpack.c.h.b16 %v612
    %v942 = vunpack.c.l.b16 %v613
    %v943 = vunpack.c.h.b16 %v613
    %v944 = vunpack.c.l.b16 %v614
    %v945 = vunpack.c.h.b16 %v614
    %v946 = vunpack.c.l.b16 %v615
    %v947 = vunpack.c.h.b16 %v615
    %v948 = vunpack.c.l.b16 %v616
    %v949 = vunpack.c.h.b16 %v616
    %v950 = vunpack.c.l.b16 %v617
    %v951 = vunpack.c.h.b16 %v617
    %v952 = vunpack.c.l.b16 %v618
    %v953 = vunpack.c.h.b16 %v618
    %v954 = vunpack.c.l.b16 %v619
    %v955 = vunpack.c.h.b16 %v619
    %v956 = vunpack.c.l.b16 %v620
    %v957 = vunpack.c.h.b16 %v620
    %v958 = vunpack.c.l.b16 %v621
    %v959 = vunpack.c.h.b16 %v621
    %v960 = vunpack.c.l.b16 %v622
    %v961 = vunpack.c.h.b16 %v622
    %v962 = vunpack.c.l.b16 %v623
    %v963 = vunpack.c.h.b16 %v623
    %v964 = vunpack.c.l.b16 %v624
    %v965 = vunpack.c.h.b16 %v624
    %v966 = vunpack.c.l.b16 %v625
    %v967 = vunpack.c.h.b16 %v625
    %v968 = vunpack.c.l.b16 %v626
    %v969 = vunpack.c.h.b16 %v626
    %v970 = vunpack.c.l.b16 %v627
    %v971 = vunpack.c.h.b16 %v627
    %v972 = vunpack.c.l.b16 %v628
    %v973 = vunpack.c.h.b16 %v628
    %v974 = vunpack.c.l.b16 %v629
    %v975 = vunpack.c.h.b16 %v629
    %v976 = vunpack.c.l.b16 %v630
    %v977 = vunpack.c.h.b16 %v630
    %v978 = vunpack.c.l.b16 %v631
    %v979 = vunpack.c.h.b16 %v631
    %v980 = vunpack.c.l.b16 %v632
    %v981 = vunpack.c.h.b16 %v632
    %v982 = vunpack.c.l.b16 %v633
    %v983 = vunpack.c.h.b16 %v633
    %v984 = vunpack.c.l.b16 %v634
    %v985 = vunpack.c.h.b16 %v634
    %v986 = vunpack.c.l.b16 %v635
    %v987 = vunpack.c.h.b16 %v635
    %v988 = vunpack.c.l.b16 %v636
    %v989 = vunpack.c.h.b16 %v636
    %v990 = vunpack.c.l.b16 %v637
    %v991 = vunpack.c.h.b16 %v637
    %v992 = vunpack.c.l.b16 %v638
    %v993 = vunpack.c.h.b16 %v638
    %v994 = vunpack.c.l.b16 %v639
    %v995 = vunpack.c.h.b16 %v639
    %v996 = vunpack.c.l.b16 %v640
    %v997 = vunpack.c.h.b16 %v640
    %v998 = vunpack.c.l.b16 %v641
    %v999 = vunpack.c.h.b16 %v641
    %v1000 = vunpack.c.l.b16 %v642
    %v1001 = vunpack.c.h.b16 %v642
    %v1002 = vunpack.c.l.b16 %v643
    %v1003 = vunpack.c.h.b16 %v643
    %v1004 = vunpack.c.l.b16 %v644
    %v1005 = vunpack.c.h.b16 %v644
    %v1006 = vunpack.c.l.b16 %v645
    %v1007 = vunpack.c.h.b16 %v645
    %v1008 = vunpack.c.l.b16 %v646
    %v1009 = vunpack.c.h.b16 %v646
    %v1010 = vunpack.c.l.b16 %v647
    %v1011 = vunpack.c.h.b16 %v647
    %v1012 = vunpack.c.l.b16 %v648
    %v1013 = vunpack.c.h.b16 %v648
    %v1014 = vunpack.c.l.b16 %v649
    %v1015 = vunpack.c.h.b16 %v649
    %v1016 = vunpack.c.l.b16 %v650
    %v1017 = vunpack.c.h.b16 %v650
    %v1018 = vunpack.c.l.b16 %v651
    %v1019 = vunpack.c.h.b16 %v651
    %v1020 = vunpack.c.l.b16 %v652
    %v1021 = vunpack.c.h.b16 %v652
    %v1022 = vunpack.c.l.b16 %v653
    %v1023 = vunpack.c.h.b16 %v653
    %v1024 = vunpack.c.l.b16 %v654
    %v1025 = vunpack.c.h.b16 %v654
    %v1026 = vunpack.c.l.b16 %v655
    %v1027 = vunpack.c.h.b16 %v655
    %v1028 = vunpack.c.l.b16 %v656
    %v1029 = vunpack.c.h.b16 %v656
    %v1030 = vunpack.c.l.b16 %v657
    %v1031 = vunpack.c.h.b16 %v657
    %v1032 = vunpack.c.l.b16 %v658
    %v1033 = vunpack.c.h.b16 %v658
    %v1034 = vunpack.c.l.b16 %v659
    %v1035 = vunpack.c.h.b16 %v659
    %v1036 = vunpack.c.l.b16 %v660
    %v1037 = vunpack.c.h.b16 %v660
    %v1038 = vunpack.c.l.b16 %v661
    %v1039 = vunpack.c.h.b16 %v661
    %v1040 = vunpack.c.l.b16 %v662
    %v1041 = vunpack.c.h.b16 %v662
    %v1042 = vunpack.c.l.b16 %v663
    %v1043 = vunpack.c.h.b16 %v663
    %v1044 = vunpack.c.l.b16 %v664
    %v1045 = vunpack.c.h.b16 %v664
    %v1046 = vunpack.c.l.b16 %v665
    %v1047 = vunpack.c.h.b16 %v665
    %v1048 = vunpack.c.l.b16 %v666
    %v1049 = vunpack.c.h.b16 %v666
    %v1050 = vunpack.c.l.b16 %v667
    %v1051 = vunpack.c.h.b16 %v667
    %v1052 = vunpack.c.l.b16 %v668
    %v1053 = vunpack.c.h.b16 %v668
    %v1054 = vunpack.c.l.b16 %v669
    %v1055 = vunpack.c.h.b16 %v669
    %v1056 = vunpack.c.l.b16 %v670
    %v1057 = vunpack.c.h.b16 %v670
    %v1058 = vunpack.c.l.b16 %v671
    %v1059 = vunpack.c.h.b16 %v671
    %v1060 = vunpack.c.l.b16 %v672
    %v1061 = vunpack.c.h.b16 %v672
    %v1062 = vunpack.c.l.b16 %v673
    %v1063 = vunpack.c.h.b16 %v673
    %v1064 = vunpack.c.l.b16 %v674
    %v1065 = vunpack.c.h.b16 %v674
    %v1066 = vunpack.c.l.b16 %v675
    %v1067 = vunpack.c.h.b16 %v675
    %v1068 = vunpack.c.l.b16 %v676
    %v1069 = vunpack.c.h.b16 %v676
    %v1070 = vunpack.c.l.b16 %v677
    %v1071 = vunpack.c.h.b16 %v677
    %v1072 = vunpack.c.l.b16 %v678
    %v1073 = vunpack.c.h.b16 %v678
    %v1074 = vunpack.c.l.b16 %v679
    %v1075 = vunpack.c.h.b16 %v679
    %v1076 = vunpack.c.l.b16 %v680
    %v1077 = vunpack.c.h.b16 %v680
    %v1078 = vunpack.c.l.b16 %v681
    %v1079 = vunpack.c.h.b16 %v681
    %v1080 = vunpack.c.l.b16 %v682
    %v1081 = vunpack.c.h.b16 %v682
    %v1082 = vunpack.c.l.b16 %v683
    %v1083 = vunpack.c.h.b16 %v683
    %v1084 = vunpack.c.l.b16 %v684
    %v1085 = vunpack.c.h.b16 %v684
    %v1086 = vunpack.c.l.b16 %v685
    %v1087 = vunpack.c.h.b16 %v685
    %v1088 = vunpack.c.l.b16 %v686
    %v1089 = vunpack.c.h.b16 %v686
    %v1090 = vunpack.c.l.b16 %v687
    %v1091 = vunpack.c.h.b16 %v687
    %v1092 = vunpack.c.l.b16 %v688
    %v1093 = vunpack.c.h.b16 %v688
    %v1094 = vunpack.c.l.b16 %v689
    %v1095 = vunpack.c.h.b16 %v689
    %v1096 = vpack.c.b16 %v844, %v840
    %v1097 = vpack.c.b16 %v845, %v841
    %v1098 = vpack.c.b16 %v846, %v842
    %v1099 = vpack.c.b16 %v847, %v843
    %v1100 = vpack.c.b16 %v852, %v848
    %v1101 = vpack.c.b16 %v853, %v849
    %v1102 = vpack.c.b16 %v854, %v850
    %v1103 = vpack.c.b16 %v855, %v851
    %v1104 = vpack.c.b16 %v860, %v856
    %v1105 = vpack.c.b16 %v861, %v857
    %v1106 = vpack.c.b16 %v862, %v858
    %v1107 = vpack.c.b16 %v863, %v859
    %v1108 = vpack.c.b16 %v868, %v864
    %v1109 = vpack.c.b16 %v869, %v865
    %v1110 = vpack.c.b16 %v870, %v866
    %v1111 = vpack.c.b16 %v871, %v867
    %v1112 = vpack.c.b16 %v876, %v872
    %v1113 = vpack.c.b16 %v877, %v873
    %v1114 = vpack.c.b16 %v878, %v874
    %v1115 = vpack.c.b16 %v879, %v875
    %v1116 = vpack.c.b16 %v884, %v880
    %v1117 = vpack.c.b16 %v885, %v881
    %v1118 = vpack.c.b16 %v886, %v882
    %v1119 = vpack.c.b16 %v887, %v883
    %v1120 = vpack.c.b16 %v892, %v888
    %v1121 = vpack.c.b16 %v893, %v889
    %v1122 = vpack.c.b16 %v894, %v890
    %v1123 = vpack.c.b16 %v895, %v891
    %v1124 = vpack.c.b16 %v900, %v896
    %v1125 = vpack.c.b16 %v901, %v897
    %v1126 = vpack.c.b16 %v902, %v898
    %v1127 = vpack.c.b16 %v903, %v899
    %v1128 = vpack.c.b16 %v908, %v904
    %v1129 = vpack.c.b16 %v909, %v905
    %v1130 = vpack.c.b16 %v910, %v906
    %v1131 = vpack.c.b16 %v911, %v907
    %v1132 = vpack.c.b16 %v916, %v912
    %v1133 = vpack.c.b16 %v917, %v913
    %v1134 = vpack.c.b16 %v918, %v914
    %v1135 = vpack.c.b16 %v919, %v915
    %v1136 = vpack.c.b16 %v924, %v920
    %v1137 = vpack.c.b16 %v925, %v921
    %v1138 = vpack.c.b16 %v926, %v922
    %v1139 = vpack.c.b16 %v927, %v923
    %v1140 = vpack.c.b16 %v932, %v928
    %v1141 = vpack.c.b16 %v933, %v929
    %v1142 = vpack.c.b16 %v934, %v930
    %v1143 = vpack.c.b16 %v935, %v931
    %v1144 = vpack.c.b16 %v940, %v936
    %v1145 = vpack.c.b16 %v941, %v937
    %v1146 = vpack.c.b16 %v942, %v938
    %v1147 = vpack.c.b16 %v943, %v939
    %v1148 = vpack.c.b16 %v948, %v944
    %v1149 = vpack.c.b16 %v949, %v945
    %v1150 = vpack.c.b16 %v950, %v946
    %v1151 = vpack.c.b16 %v951, %v947
    %v1152 = vpack.c.b16 %v956, %v952
    %v1153 = vpack.c.b16 %v957, %v953
    %v1154 = vpack.c.b16 %v958, %v954
    %v1155 = vpack.c.b16 %v959, %v955
    %v1156 = vpack.c.b16 %v964, %v960
    %v1157 = vpack.c.b16 %v965, %v961
    %v1158 = vpack.c.b16 %v966, %v962
    %v1159 = vpack.c.b16 %v967, %v963
    %v1160 = vpack.c.b16 %v972, %v968
    %v1161 = vpack.c.b16 %v973, %v969
    %v1162 = vpack.c.b16 %v974, %v970
    %v1163 = vpack.c.b16 %v975, %v971
    %v1164 = vpack.c.b16 %v980, %v976
    %v1165 = vpack.c.b16 %v981, %v977
    %v1166 = vpack.c.b16 %v982, %v978
    %v1167 = vpack.c.b16 %v983, %v979
    %v1168 = vpack.c.b16 %v988, %v984
    %v1169 = vpack.c.b16 %v989, %v985
    %v1170 = vpack.c.b16 %v990, %v986
    %v1171 = vpack.c.b16 %v991, %v987
    %v1172 = vpack.c.b16 %v996, %v992
    %v1173 = vpack.c.b16 %v997, %v993
    %v1174 = vpack.c.b16 %v998, %v994
    %v1175 = vpack.c.b16 %v999, %v995
    %v1176 = vpack.c.b16 %v1004, %v1000
    %v1177 = vpack.c.b16 %v1005, %v1001
    %v1178 = vpack.c.b16 %v1006, %v1002
    %v1179 = vpack.c.b16 %v1007, %v1003
    %v1180 = vpack.c.b16 %v1012, %v1008
    %v1181 = vpack.c.b16 %v1013, %v1009
    %v1182 = vpack.c.b16 %v1014, %v1010
    %v1183 = vpack.c.b16 %v1015, %v1011
    %v1184 = vpack.c.b16 %v1020, %v1016
    %v1185 = vpack.c.b16 %v1021, %v1017
    %v1186 = vpack.c.b16 %v1022, %v1018
    %v1187 = vpack.c.b16 %v1023, %v1019
    %v1188 = vpack.c.b16 %v1028, %v1024
    %v1189 = vpack.c.b16 %v1029, %v1025
    %v1190 = vpack.c.b16 %v1030, %v1026
    %v1191 = vpack.c.b16 %v1031, %v1027
    %v1192 = vpack.c.b16 %v1036, %v1032
    %v1193 = vpack.c.b16 %v1037, %v1033
    %v1194 = vpack.c.b16 %v1038, %v1034
    %v1195 = vpack.c.b16 %v1039, %v1035
    %v1196 = vpack.c.b16 %v1044, %v1040
    %v1197 = vpack.c.b16 %v1045, %v1041
    %v1198 = vpack.c.b16 %v1046, %v1042
    %v1199 = vpack.c.b16 %v1047, %v1043
    %v1200 = vpack.c.b16 %v1052, %v1048
    %v1201 = vpack.c.b16 %v1053, %v1049
    %v1202 = vpack.c.b16 %v1054, %v1050
    %v1203 = vpack.c.b16 %v1055, %v1051
    %v1204 = vpack.c.b16 %v1060, %v1056
    %v1205 = vpack.c.b16 %v1061, %v1057
    %v1206 = vpack.c.b16 %v1062, %v1058
    %v1207 = vpack.c.b16 %v1063, %v1059
    %v1208 = vpack.c.b16 %v1068, %v1064
    %v1209 = vpack.c.b16 %v1069, %v1065
    %v1210 = vpack.c.b16 %v1070, %v1066
    %v1211 = vpack.c.b16 %v1071, %v1067
    %v1212 = vpack.c.b16 %v1076, %v1072
    %v1213 = vpack.c.b16 %v1077, %v1073
    %v1214 = vpack.c.b16 %v1078, %v1074
    %v1215 = vpack.c.b16 %v1079, %v1075
    %v1216 = vpack.c.b16 %v1084, %v1080
    %v1217 = vpack.c.b16 %v1085, %v1081
    %v1218 = vpack.c.b16 %v1086, %v1082
    %v1219 = vpack.c.b16 %v1087, %v1083
    %v1220 = vpack.c.b16 %v1092, %v1088
    %v1221 = vpack.c.b16 %v1093, %v1089
    %v1222 = vpack.c.b16 %v1094, %v1090
    %v1223 = vpack.c.b16 %v1095, %v1091
    %1352 = vmatprep.subr.bf16.mxu0 %v1097
    %1353 = vmatpush1.bf16.msra.mxu0 %v1096
    %1354 = vmatprep.subr.bf16.mxu0 %v1101
    %1355 = vmatpush1.bf16.msra.mxu0 %v1100
    %1356 = vmatprep.subr.bf16.mxu0 %v1105
    %1357 = vmatpush1.bf16.msra.mxu0 %v1104
    %1358 = vmatprep.subr.bf16.mxu0 %v1109
    %1359 = vmatpush1.bf16.msra.mxu0 %v1108
    %1360 = vmatprep.subr.bf16.mxu0 %v1113
    %1361 = vmatpush1.bf16.msra.mxu0 %v1112
    %1362 = vmatprep.subr.bf16.mxu0 %v1117
    %1363 = vmatpush1.bf16.msra.mxu0 %v1116
    %1364 = vmatprep.subr.bf16.mxu0 %v1121
    %1365 = vmatpush1.bf16.msra.mxu0 %v1120
    %1366 = vmatprep.subr.bf16.mxu0 %v1125
    %1367 = vmatpush1.bf16.msra.mxu0 %v1124
    %1368 = vmatprep.subr.bf16.mxu0 %v1129
    %1369 = vmatpush1.bf16.msra.mxu0 %v1128
    %1370 = vmatprep.subr.bf16.mxu0 %v1133
    %1371 = vmatpush1.bf16.msra.mxu0 %v1132
    %1372 = vmatprep.subr.bf16.mxu0 %v1137
    %1373 = vmatpush1.bf16.msra.mxu0 %v1136
    %1374 = vmatprep.subr.bf16.mxu0 %v1141
    %1375 = vmatpush1.bf16.msra.mxu0 %v1140
    %1376 = vmatprep.subr.bf16.mxu0 %v1145
    %1377 = vmatpush1.bf16.msra.mxu0 %v1144
    %1378 = vmatprep.subr.bf16.mxu0 %v1149
    %1379 = vmatpush1.bf16.msra.mxu0 %v1148
    %1380 = vmatprep.subr.bf16.mxu0 %v1153
    %1381 = vmatpush1.bf16.msra.mxu0 %v1152
    %1382 = vmatprep.subr.bf16.mxu0 %v1157
    %1383 = vmatpush1.bf16.msra.mxu0 %v1156
    %1384 = vmatprep.mubr.bf16.mxu0 %v559
    %1385 = vmatmul.mubr.bf16.gmra.mrb[0].mxu0 %v558
    %v1386 = vpop.f32.mrb[0].mxu0
    %v1387 = vadd.f32 %v695, %v1386
    %v1388 = vpop.f32.mrb[0].mxu0
    %v1389 = vadd.f32 %v699, %v1388
    %v1390 = vpop.f32.mrb[0].mxu0
    %v1391 = vpop.f32.mrb[0].mxu0
    %1392 = vdwg.mxu0
    %1393 = vmatprep.subr.bf16.mxu0 %v1161
    %1394 = vmatpush1.bf16.msra.mxu0 %v1160
    %1395 = vmatprep.subr.bf16.mxu0 %v1165
    %1396 = vmatpush1.bf16.msra.mxu0 %v1164
    %1397 = vmatprep.subr.bf16.mxu0 %v1169
    %1398 = vmatpush1.bf16.msra.mxu0 %v1168
    %1399 = vmatprep.subr.bf16.mxu0 %v1173
    %1400 = vmatpush1.bf16.msra.mxu0 %v1172
    %1401 = vmatprep.subr.bf16.mxu0 %v1177
    %1402 = vmatpush1.bf16.msra.mxu0 %v1176
    %1403 = vmatprep.subr.bf16.mxu0 %v1181
    %1404 = vmatpush1.bf16.msra.mxu0 %v1180
    %1405 = vmatprep.subr.bf16.mxu0 %v1185
    %1406 = vmatpush1.bf16.msra.mxu0 %v1184
    %1407 = vmatprep.subr.bf16.mxu0 %v1189
    %1408 = vmatpush1.bf16.msra.mxu0 %v1188
    %1409 = vmatprep.subr.bf16.mxu0 %v1193
    %1410 = vmatpush1.bf16.msra.mxu0 %v1192
    %1411 = vmatprep.subr.bf16.mxu0 %v1197
    %1412 = vmatpush1.bf16.msra.mxu0 %v1196
    %1413 = vmatprep.subr.bf16.mxu0 %v1201
    %1414 = vmatpush1.bf16.msra.mxu0 %v1200
    %1415 = vmatprep.subr.bf16.mxu0 %v1205
    %1416 = vmatpush1.bf16.msra.mxu0 %v1204
    %1417 = vmatprep.subr.bf16.mxu0 %v1209
    %1418 = vmatpush1.bf16.msra.mxu0 %v1208
    %1419 = vmatprep.subr.bf16.mxu0 %v1213
    %1420 = vmatpush1.bf16.msra.mxu0 %v1212
    %1421 = vmatprep.subr.bf16.mxu0 %v1217
    %1422 = vmatpush1.bf16.msra.mxu0 %v1216
    %1423 = vmatprep.subr.bf16.mxu0 %v1221
    %1424 = vmatpush1.bf16.msra.mxu0 %v1220
    %1425 = vmatprep.mubr.bf16.mxu0 %v561
    %1426 = vmatmul.mubr.bf16.gmra.mrb[0].mxu0 %v560
    %v1427 = vpop.f32.mrb[0].mxu0
    %v1428 = vadd.f32 %v1387, %v1427
    %v1429 = vpop.f32.mrb[0].mxu0
    %v1430 = vadd.f32 %v1389, %v1429
    %v1431 = vpop.f32.mrb[0].mxu0
    %v1432 = vpop.f32.mrb[0].mxu0
    %1433 = vdwg.mxu0
    %1434 = vmatprep.subr.bf16.mxu0 %v1099
    %1435 = vmatpush1.bf16.msra.mxu0 %v1098
    %1436 = vmatprep.subr.bf16.mxu0 %v1103
    %1437 = vmatpush1.bf16.msra.mxu0 %v1102
    %1438 = vmatprep.subr.bf16.mxu0 %v1107
    %1439 = vmatpush1.bf16.msra.mxu0 %v1106
    %1440 = vmatprep.subr.bf16.mxu0 %v1111
    %1441 = vmatpush1.bf16.msra.mxu0 %v1110
    %1442 = vmatprep.subr.bf16.mxu0 %v1115
    %1443 = vmatpush1.bf16.msra.mxu0 %v1114
    %1444 = vmatprep.subr.bf16.mxu0 %v1119
    %1445 = vmatpush1.bf16.msra.mxu0 %v1118
    %1446 = vmatprep.subr.bf16.mxu0 %v1123
    %1447 = vmatpush1.bf16.msra.mxu0 %v1122
    %1448 = vmatprep.subr.bf16.mxu0 %v1127
    %1449 = vmatpush1.bf16.msra.mxu0 %v1126
    %1450 = vmatprep.subr.bf16.mxu0 %v1131
    %1451 = vmatpush1.bf16.msra.mxu0 %v1130
    %1452 = vmatprep.subr.bf16.mxu0 %v1135
    %1453 = vmatpush1.bf16.msra.mxu0 %v1134
    %1454 = vmatprep.subr.bf16.mxu0 %v1139
    %1455 = vmatpush1.bf16.msra.mxu0 %v1138
    %1456 = vmatprep.subr.bf16.mxu0 %v1143
    %1457 = vmatpush1.bf16.msra.mxu0 %v1142
    %1458 = vmatprep.subr.bf16.mxu0 %v1147
    %1459 = vmatpush1.bf16.msra.mxu0 %v1146
    %1460 = vmatprep.subr.bf16.mxu0 %v1151
    %1461 = vmatpush1.bf16.msra.mxu0 %v1150
    %1462 = vmatprep.subr.bf16.mxu0 %v1155
    %1463 = vmatpush1.bf16.msra.mxu0 %v1154
    %1464 = vmatprep.subr.bf16.mxu0 %v1159
    %1465 = vmatpush1.bf16.msra.mxu0 %v1158
    %1466 = vmatprep.mubr.bf16.mxu0 %v559
    %1467 = vmatmul.mubr.bf16.gmra.mrb[0].mxu0 %v558
    %v1468 = vpop.f32.mrb[0].mxu0
    %v1469 = vadd.f32 %v703, %v1468
    %v1470 = vpop.f32.mrb[0].mxu0
    %v1471 = vadd.f32 %v707, %v1470
    %v1472 = vpop.f32.mrb[0].mxu0
    %v1473 = vpop.f32.mrb[0].mxu0
    %1474 = vdwg.mxu0
    %1475 = vmatprep.subr.bf16.mxu0 %v1163
    %1476 = vmatpush1.bf16.msra.mxu0 %v1162
    %1477 = vmatprep.subr.bf16.mxu0 %v1167
    %1478 = vmatpush1.bf16.msra.mxu0 %v1166
    %1479 = vmatprep.subr.bf16.mxu0 %v1171
    %1480 = vmatpush1.bf16.msra.mxu0 %v1170
    %1481 = vmatprep.subr.bf16.mxu0 %v1175
    %1482 = vmatpush1.bf16.msra.mxu0 %v1174
    %1483 = vmatprep.subr.bf16.mxu0 %v1179
    %1484 = vmatpush1.bf16.msra.mxu0 %v1178
    %1485 = vmatprep.subr.bf16.mxu0 %v1183
    %1486 = vmatpush1.bf16.msra.mxu0 %v1182
    %1487 = vmatprep.subr.bf16.mxu0 %v1187
    %1488 = vmatpush1.bf16.msra.mxu0 %v1186
    %1489 = vmatprep.subr.bf16.mxu0 %v1191
    %1490 = vmatpush1.bf16.msra.mxu0 %v1190
    %1491 = vmatprep.subr.bf16.mxu0 %v1195
    %1492 = vmatpush1.bf16.msra.mxu0 %v1194
    %1493 = vmatprep.subr.bf16.mxu0 %v1199
    %1494 = vmatpush1.bf16.msra.mxu0 %v1198
    %1495 = vmatprep.subr.bf16.mxu0 %v1203
    %1496 = vmatpush1.bf16.msra.mxu0 %v1202
    %1497 = vmatprep.subr.bf16.mxu0 %v1207
    %1498 = vmatpush1.bf16.msra.mxu0 %v1206
    %1499 = vmatprep.subr.bf16.mxu0 %v1211
    %1500 = vmatpush1.bf16.msra.mxu0 %v1210
    %1501 = vmatprep.subr.bf16.mxu0 %v1215
    %1502 = vmatpush1.bf16.msra.mxu0 %v1214
    %1503 = vmatprep.subr.bf16.mxu0 %v1219
    %1504 = vmatpush1.bf16.msra.mxu0 %v1218
    %1505 = vmatprep.subr.bf16.mxu0 %v1223
    %1506 = vmatpush1.bf16.msra.mxu0 %v1222
    %1507 = vmatprep.mubr.bf16.mxu0 %v561
    %1508 = vmatmul.mubr.bf16.gmra.mrb[0].mxu0 %v560
    %v1509 = vpop.f32.mrb[0].mxu0
    %v1510 = vadd.f32 %v1469, %v1509
    %v1511 = vpop.f32.mrb[0].mxu0
    %v1512 = vadd.f32 %v1471, %v1511
    %v1513 = vpop.f32.mrb[0].mxu0
    %v1514 = vpop.f32.mrb[0].mxu0
    %1515 = vdwg.mxu0
    %v1516 = vld [vmem:[%s9] sm:$0xf]
    %v1517 = vld [vmem:[%s10] sm:$0xf]
    %v1518 = vrot.slane %v1428, 4
    %v1519 = vadd.f32 %v1428, %v1518
    %v1520 = vrot.slane %v1519, 2
    %v1521 = vadd.f32 %v1519, %v1520
    %v1522 = vrot.slane %v1521, 1
    %v1523 = vadd.f32 %v1521, %v1522
    %v1524 = vrot.slane %v1430, 4
    %v1525 = vadd.f32 %v1430, %v1524
    %v1526 = vrot.slane %v1525, 2
    %v1527 = vadd.f32 %v1525, %v1526
    %v1528 = vrot.slane %v1527, 1
    %v1529 = vadd.f32 %v1527, %v1528
    %v1530 = vrot.slane %v1510, 4
    %v1531 = vadd.f32 %v1510, %v1530
    %v1532 = vrot.slane %v1531, 2
    %v1533 = vadd.f32 %v1531, %v1532
    %v1534 = vrot.slane %v1533, 1
    %v1535 = vadd.f32 %v1533, %v1534
    %v1536 = vrot.slane %v1512, 4
    %v1537 = vadd.f32 %v1512, %v1536
    %v1538 = vrot.slane %v1537, 2
    %v1539 = vadd.f32 %v1537, %v1538
    %v1540 = vrot.slane %v1539, 1
    %v1541 = vadd.f32 %v1539, %v1540
    %v1542 = vmul.f32 %v1523, %v375
    %v1543 = vmul.f32 %v1529, %v375
    %v1544 = vmul.f32 %v1535, %v375
    %v1545 = vmul.f32 %v1541, %v375
    %v1546 = vsub.f32 %v1428, %v1542
    %v1547 = vsub.f32 %v1430, %v1543
    %v1548 = vsub.f32 %v1510, %v1544
    %v1549 = vsub.f32 %v1512, %v1545
    %v1550 = vmul.f32 %v1546, %v1546
    %v1551 = vmul.f32 %v1547, %v1547
    %v1552 = vmul.f32 %v1548, %v1548
    %v1553 = vmul.f32 %v1549, %v1549
    %v1554 = vrot.slane %v1550, 4
    %v1555 = vadd.f32 %v1550, %v1554
    %v1556 = vrot.slane %v1555, 2
    %v1557 = vadd.f32 %v1555, %v1556
    %v1558 = vrot.slane %v1557, 1
    %v1559 = vadd.f32 %v1557, %v1558
    %v1560 = vrot.slane %v1551, 4
    %v1561 = vadd.f32 %v1551, %v1560
    %v1562 = vrot.slane %v1561, 2
    %v1563 = vadd.f32 %v1561, %v1562
    %v1564 = vrot.slane %v1563, 1
    %v1565 = vadd.f32 %v1563, %v1564
    %v1566 = vrot.slane %v1552, 4
    %v1567 = vadd.f32 %v1552, %v1566
    %v1568 = vrot.slane %v1567, 2
    %v1569 = vadd.f32 %v1567, %v1568
    %v1570 = vrot.slane %v1569, 1
    %v1571 = vadd.f32 %v1569, %v1570
    %v1572 = vrot.slane %v1553, 4
    %v1573 = vadd.f32 %v1553, %v1572
    %v1574 = vrot.slane %v1573, 2
    %v1575 = vadd.f32 %v1573, %v1574
    %v1576 = vrot.slane %v1575, 1
    %v1577 = vadd.f32 %v1575, %v1576
    %v1578 = vmul.f32 %v1559, %v375
    %v1579 = vmul.f32 %v1565, %v375
    %v1580 = vmul.f32 %v1571, %v375
    %v1581 = vmul.f32 %v1577, %v375
    %v1582 = vadd.f32 %v1578, 1e-05
    %v1583 = vadd.f32 %v1579, 1e-05
    %v1584 = vadd.f32 %v1580, 1e-05
    %v1585 = vadd.f32 %v1581, 1e-05
    %v1586 = vrsqrt.pop %v1582
    %v1587 = vrsqrt.pop %v1583
    %v1588 = vrsqrt.pop %v1584
    %v1589 = vrsqrt.pop %v1585
    %v1594 = vcombine.low %v1586, %v1587
    %v1595 = vcombine.low %v1588, %v1589
    %v1597 = vunpack.c.l.s4 1966171168
    %v1598 = vunpack.c.0.s8 %v1597
    %v1599 = vlaneseq
    %v1600 = vshrl.u32 %v1599, 7
    %v1601 = vsub.s32 %v1598, %v1600
    %v1602 = vrot.slane %v1594, %v1601
    %v1604 = vunpack.c.l.s4 1966171168
    %v1605 = vunpack.c.0.s8 %v1604
    %v1606 = vlaneseq
    %v1607 = vshrl.u32 %v1606, 7
    %v1608 = vsub.s32 %v1605, %v1607
    %v1609 = vrot.slane %v1595, %v1608
    %v1610 = vcombine.low %v1602, %v1609
    %v1612 = vunpack.c.l.s4 1966171168
    %v1613 = vunpack.c.0.s8 %v1612
    %v1614 = vlaneseq
    %v1615 = vshrl.u32 %v1614, 7
    %v1616 = vsub.s32 %v1613, %v1615
    %v1617 = vrot.slane %v1610, %v1616
    %v1619 = vmul.f32 %v1516, %v1617
    %v1621 = vlaneseq
    %v1622 = vshrl.u32 %v1621, 7
    %v1623 = vsub.s32 0, %v1622
    %v1624 = vrot.slane %v1619, %v1623
    %v1625 = vlaneseq
    %v1626 = vshrl.u32 %v1625, 7
    %v1627 = vsub.s32 1, %v1626
    %v1628 = vrot.slane %v1619, %v1627
    %v1629 = vlaneseq
    %v1630 = vshrl.u32 %v1629, 7
    %v1631 = vsub.s32 2, %v1630
    %v1632 = vrot.slane %v1619, %v1631
    %v1633 = vlaneseq
    %v1634 = vshrl.u32 %v1633, 7
    %v1635 = vsub.s32 3, %v1634
    %v1636 = vrot.slane %v1619, %v1635
    %v1641 = vmul.f32 %v1542, %v1624
    %v1642 = vmul.f32 %v1543, %v1628
    %v1643 = vmul.f32 %v1544, %v1632
    %v1644 = vmul.f32 %v1545, %v1636
    %v1649 = vcombine.low %v1641, %v1642
    %v1650 = vcombine.low %v1643, %v1644
    %v1652 = vunpack.c.l.s4 1966171168
    %v1653 = vunpack.c.0.s8 %v1652
    %v1654 = vlaneseq
    %v1655 = vshrl.u32 %v1654, 7
    %v1656 = vsub.s32 %v1653, %v1655
    %v1657 = vrot.slane %v1649, %v1656
    %v1659 = vunpack.c.l.s4 1966171168
    %v1660 = vunpack.c.0.s8 %v1659
    %v1661 = vlaneseq
    %v1662 = vshrl.u32 %v1661, 7
    %v1663 = vsub.s32 %v1660, %v1662
    %v1664 = vrot.slane %v1650, %v1663
    %v1665 = vcombine.low %v1657, %v1664
    %v1667 = vunpack.c.l.s4 1966171168
    %v1668 = vunpack.c.0.s8 %v1667
    %v1669 = vlaneseq
    %v1670 = vshrl.u32 %v1669, 7
    %v1671 = vsub.s32 %v1668, %v1670
    %v1672 = vrot.slane %v1665, %v1671
    %v1674 = vsub.f32 %v1517, %v1672
    %v1675 = vmul.f32 %v1428, %v1624
    %v1676 = vmul.f32 %v1430, %v1628
    %v1677 = vmul.f32 %v1510, %v1632
    %v1678 = vmul.f32 %v1512, %v1636
    %v1680 = vlaneseq
    %v1681 = vshrl.u32 %v1680, 7
    %v1682 = vsub.s32 0, %v1681
    %v1683 = vrot.slane %v1674, %v1682
    %v1684 = vlaneseq
    %v1685 = vshrl.u32 %v1684, 7
    %v1686 = vsub.s32 1, %v1685
    %v1687 = vrot.slane %v1674, %v1686
    %v1688 = vlaneseq
    %v1689 = vshrl.u32 %v1688, 7
    %v1690 = vsub.s32 2, %v1689
    %v1691 = vrot.slane %v1674, %v1690
    %v1692 = vlaneseq
    %v1693 = vshrl.u32 %v1692, 7
    %v1694 = vsub.s32 3, %v1693
    %v1695 = vrot.slane %v1674, %v1694
    %v1700 = vadd.f32 %v1675, %v1683
    %v1701 = vadd.f32 %v1676, %v1687
    %v1702 = vadd.f32 %v1677, %v1691
    %v1703 = vadd.f32 %v1678, %v1695
    %vm1704 = vcmp.ge.f32.partialorder %v1700, 0.0
    %vm1705 = vcmp.ge.f32.partialorder %v1701, 0.0
    %vm1706 = vcmp.ge.f32.partialorder %v1702, 0.0
    %vm1707 = vcmp.ge.f32.partialorder %v1703, 0.0
    %v1708 = vmul.f32 %v1700, 0.2
    %v1709 = vmul.f32 %v1701, 0.2
    %v1710 = vmul.f32 %v1702, 0.2
    %v1711 = vmul.f32 %v1703, 0.2
    %v1712 = vsel %vm1704, %v1700, %v1708
    %v1713 = vsel %vm1705, %v1701, %v1709
    %v1714 = vsel %vm1706, %v1702, %v1710
    %v1715 = vsel %vm1707, %v1703, %v1711
    %v1716 = vld [vmem:[%s2] sm:$0xff]
    %v1717 = vld [vmem:[%s2 + $0x8] sm:$0xff]
    %v1718 = vld [vmem:[%s2 + $0x10] sm:$0xff]
    %v1719 = vld [vmem:[%s2 + $0x18] sm:$0xff]
    %v1720 = vmul.f32 %v1712, %v1716
    %v1721 = vmul.f32 %v1713, %v1717
    %v1722 = vmul.f32 %v1714, %v1718
    %v1723 = vmul.f32 %v1715, %v1719
    %v1724 = vpack.c.bf16 %v1720, %v1720
    %v1725 = vpack.c.bf16 %v1721, %v1721
    %v1726 = vpack.c.bf16 %v1722, %v1722
    %v1727 = vpack.c.bf16 %v1723, %v1723
    %v1728 = vld [vmem:[%s11] sm:$0xff]
    %v1729 = vld [vmem:[%s11 + $0x8] sm:$0xff]
    %v1730 = vld [vmem:[%s11 + $0x10] sm:$0xff]
    %v1731 = vld [vmem:[%s11 + $0x18] sm:$0xf]
    %v1732 = vld [vmem:[%s11 + $0x1c] sm:$0xff]
    %v1733 = vld [vmem:[%s11 + $0x24] sm:$0xff]
    %v1734 = vld [vmem:[%s11 + $0x2c] sm:$0xff]
    %v1735 = vld [vmem:[%s11 + $0x34] sm:$0xf]
    %v1736 = vld [vmem:[%s11 + $0x38] sm:$0xff]
    %v1737 = vld [vmem:[%s11 + $0x40] sm:$0xff]
    %v1738 = vld [vmem:[%s11 + $0x48] sm:$0xff]
    %v1739 = vld [vmem:[%s11 + $0x50] sm:$0xf]
    %v1740 = vld [vmem:[%s11 + $0x54] sm:$0xff]
    %v1741 = vld [vmem:[%s11 + $0x5c] sm:$0xff]
    %v1742 = vld [vmem:[%s11 + $0x64] sm:$0xff]
    %v1743 = vld [vmem:[%s11 + $0x6c] sm:$0xf]
    %v1744 = vld [vmem:[%s11 + $0x70] sm:$0xff]
    %v1745 = vld [vmem:[%s11 + $0x78] sm:$0xff]
    %v1746 = vld [vmem:[%s11 + $0x80] sm:$0xff]
    %v1747 = vld [vmem:[%s11 + $0x88] sm:$0xf]
    %v1748 = vld [vmem:[%s11 + $0x8c] sm:$0xff]
    %v1749 = vld [vmem:[%s11 + $0x94] sm:$0xff]
    %v1750 = vld [vmem:[%s11 + $0x9c] sm:$0xff]
    %v1751 = vld [vmem:[%s11 + $0xa4] sm:$0xf]
    %v1752 = vld [vmem:[%s11 + $0xa8] sm:$0xff]
    %v1753 = vld [vmem:[%s11 + $0xb0] sm:$0xff]
    %v1754 = vld [vmem:[%s11 + $0xb8] sm:$0xff]
    %v1755 = vld [vmem:[%s11 + $0xc0] sm:$0xf]
    %v1756 = vld [vmem:[%s11 + $0xc4] sm:$0xff]
    %v1757 = vld [vmem:[%s11 + $0xcc] sm:$0xff]
    %v1758 = vld [vmem:[%s11 + $0xd4] sm:$0xff]
    %v1759 = vld [vmem:[%s11 + $0xdc] sm:$0xf]
    %v1760 = vld [vmem:[%s11 + $0xe0] sm:$0xff]
    %v1761 = vld [vmem:[%s11 + $0xe8] sm:$0xff]
    %v1762 = vld [vmem:[%s11 + $0xf0] sm:$0xff]
    %v1763 = vld [vmem:[%s11 + $0xf8] sm:$0xf]
    %v1764 = vld [vmem:[%s11 + $0xfc] sm:$0xff]
    %v1765 = vld [vmem:[%s11 + $0x104] sm:$0xff]
    %v1766 = vld [vmem:[%s11 + $0x10c] sm:$0xff]
    %v1767 = vld [vmem:[%s11 + $0x114] sm:$0xf]
    %v1768 = vld [vmem:[%s11 + $0x118] sm:$0xff]
    %v1769 = vld [vmem:[%s11 + $0x120] sm:$0xff]
    %v1770 = vld [vmem:[%s11 + $0x128] sm:$0xff]
    %v1771 = vld [vmem:[%s11 + $0x130] sm:$0xf]
    %v1772 = vld [vmem:[%s11 + $0x134] sm:$0xff]
    %v1773 = vld [vmem:[%s11 + $0x13c] sm:$0xff]
    %v1774 = vld [vmem:[%s11 + $0x144] sm:$0xff]
    %v1775 = vld [vmem:[%s11 + $0x14c] sm:$0xf]
    %v1776 = vld [vmem:[%s11 + $0x150] sm:$0xff]
    %v1777 = vld [vmem:[%s11 + $0x158] sm:$0xff]
    %v1778 = vld [vmem:[%s11 + $0x160] sm:$0xff]
    %v1779 = vld [vmem:[%s11 + $0x168] sm:$0xf]
    %v1780 = vld [vmem:[%s11 + $0x16c] sm:$0xff]
    %v1781 = vld [vmem:[%s11 + $0x174] sm:$0xff]
    %v1782 = vld [vmem:[%s11 + $0x17c] sm:$0xff]
    %v1783 = vld [vmem:[%s11 + $0x184] sm:$0xf]
    %v1784 = vld [vmem:[%s11 + $0x188] sm:$0xff]
    %v1785 = vld [vmem:[%s11 + $0x190] sm:$0xff]
    %v1786 = vld [vmem:[%s11 + $0x198] sm:$0xff]
    %v1787 = vld [vmem:[%s11 + $0x1a0] sm:$0xf]
    %v1788 = vld [vmem:[%s11 + $0x1a4] sm:$0xff]
    %v1789 = vld [vmem:[%s11 + $0x1ac] sm:$0xff]
    %v1790 = vld [vmem:[%s11 + $0x1b4] sm:$0xff]
    %v1791 = vld [vmem:[%s11 + $0x1bc] sm:$0xf]
    %v1792 = vld [vmem:[%s11 + $0x1c0] sm:$0xff]
    %v1793 = vld [vmem:[%s11 + $0x1c8] sm:$0xff]
    %v1794 = vld [vmem:[%s11 + $0x1d0] sm:$0xff]
    %v1795 = vld [vmem:[%s11 + $0x1d8] sm:$0xf]
    %v1796 = vld [vmem:[%s11 + $0x1dc] sm:$0xff]
    %v1797 = vld [vmem:[%s11 + $0x1e4] sm:$0xff]
    %v1798 = vld [vmem:[%s11 + $0x1ec] sm:$0xff]
    %v1799 = vld [vmem:[%s11 + $0x1f4] sm:$0xf]
    %v1800 = vld [vmem:[%s11 + $0x1f8] sm:$0xff]
    %v1801 = vld [vmem:[%s11 + $0x200] sm:$0xff]
    %v1802 = vld [vmem:[%s11 + $0x208] sm:$0xff]
    %v1803 = vld [vmem:[%s11 + $0x210] sm:$0xf]
    %v1804 = vld [vmem:[%s11 + $0x214] sm:$0xff]
    %v1805 = vld [vmem:[%s11 + $0x21c] sm:$0xff]
    %v1806 = vld [vmem:[%s11 + $0x224] sm:$0xff]
    %v1807 = vld [vmem:[%s11 + $0x22c] sm:$0xf]
    %v1808 = vld [vmem:[%s11 + $0x230] sm:$0xff]
    %v1809 = vld [vmem:[%s11 + $0x238] sm:$0xff]
    %v1810 = vld [vmem:[%s11 + $0x240] sm:$0xff]
    %v1811 = vld [vmem:[%s11 + $0x248] sm:$0xf]
    %v1812 = vld [vmem:[%s11 + $0x24c] sm:$0xff]
    %v1813 = vld [vmem:[%s11 + $0x254] sm:$0xff]
    %v1814 = vld [vmem:[%s11 + $0x25c] sm:$0xff]
    %v1815 = vld [vmem:[%s11 + $0x264] sm:$0xf]
    %v1816 = vld [vmem:[%s11 + $0x268] sm:$0xff]
    %v1817 = vld [vmem:[%s11 + $0x270] sm:$0xff]
    %v1818 = vld [vmem:[%s11 + $0x278] sm:$0xff]
    %v1819 = vld [vmem:[%s11 + $0x280] sm:$0xf]
    %v1820 = vld [vmem:[%s11 + $0x284] sm:$0xff]
    %v1821 = vld [vmem:[%s11 + $0x28c] sm:$0xff]
    %v1822 = vld [vmem:[%s11 + $0x294] sm:$0xff]
    %v1823 = vld [vmem:[%s11 + $0x29c] sm:$0xf]
    %v1824 = vld [vmem:[%s11 + $0x2a0] sm:$0xff]
    %v1825 = vld [vmem:[%s11 + $0x2a8] sm:$0xff]
    %v1826 = vld [vmem:[%s11 + $0x2b0] sm:$0xff]
    %v1827 = vld [vmem:[%s11 + $0x2b8] sm:$0xf]
    %v1828 = vld [vmem:[%s11 + $0x2bc] sm:$0xff]
    %v1829 = vld [vmem:[%s11 + $0x2c4] sm:$0xff]
    %v1830 = vld [vmem:[%s11 + $0x2cc] sm:$0xff]
    %v1831 = vld [vmem:[%s11 + $0x2d4] sm:$0xf]
    %v1832 = vld [vmem:[%s11 + $0x2d8] sm:$0xff]
    %v1833 = vld [vmem:[%s11 + $0x2e0] sm:$0xff]
    %v1834 = vld [vmem:[%s11 + $0x2e8] sm:$0xff]
    %v1835 = vld [vmem:[%s11 + $0x2f0] sm:$0xf]
    %v1836 = vld [vmem:[%s11 + $0x2f4] sm:$0xff]
    %v1837 = vld [vmem:[%s11 + $0x2fc] sm:$0xff]
    %v1838 = vld [vmem:[%s11 + $0x304] sm:$0xff]
    %v1839 = vld [vmem:[%s11 + $0x30c] sm:$0xf]
    %v1840 = vld [vmem:[%s11 + $0x310] sm:$0xff]
    %v1841 = vld [vmem:[%s11 + $0x318] sm:$0xff]
    %v1842 = vld [vmem:[%s11 + $0x320] sm:$0xff]
    %v1843 = vld [vmem:[%s11 + $0x328] sm:$0xf]
    %v1844 = vld [vmem:[%s11 + $0x32c] sm:$0xff]
    %v1845 = vld [vmem:[%s11 + $0x334] sm:$0xff]
    %v1846 = vld [vmem:[%s11 + $0x33c] sm:$0xff]
    %v1847 = vld [vmem:[%s11 + $0x344] sm:$0xf]
    %v1848 = vld [vmem:[%s11 + $0x348] sm:$0xff]
    %v1849 = vld [vmem:[%s11 + $0x350] sm:$0xff]
    %v1850 = vld [vmem:[%s11 + $0x358] sm:$0xff]
    %v1851 = vld [vmem:[%s11 + $0x360] sm:$0xf]
    %v1852 = vld [vmem:[%s11 + $0x364] sm:$0xff]
    %v1853 = vld [vmem:[%s11 + $0x36c] sm:$0xff]
    %v1854 = vld [vmem:[%s11 + $0x374] sm:$0xff]
    %v1855 = vld [vmem:[%s11 + $0x37c] sm:$0xf]
    %v1856 = vld [vmem:[%s11 + $0x380] sm:$0xff]
    %v1857 = vld [vmem:[%s11 + $0x388] sm:$0xff]
    %v1858 = vld [vmem:[%s11 + $0x390] sm:$0xff]
    %v1859 = vld [vmem:[%s11 + $0x398] sm:$0xf]
    %v1860 = vld [vmem:[%s11 + $0x39c] sm:$0xff]
    %v1861 = vld [vmem:[%s11 + $0x3a4] sm:$0xff]
    %v1862 = vld [vmem:[%s11 + $0x3ac] sm:$0xff]
    %v1863 = vld [vmem:[%s11 + $0x3b4] sm:$0xf]
    %v1864 = vld [vmem:[%s11 + $0x3b8] sm:$0xff]
    %v1865 = vld [vmem:[%s11 + $0x3c0] sm:$0xff]
    %v1866 = vld [vmem:[%s11 + $0x3c8] sm:$0xff]
    %v1867 = vld [vmem:[%s11 + $0x3d0] sm:$0xf]
    %v1868 = vld [vmem:[%s11 + $0x3d4] sm:$0xff]
    %v1869 = vld [vmem:[%s11 + $0x3dc] sm:$0xff]
    %v1870 = vld [vmem:[%s11 + $0x3e4] sm:$0xff]
    %v1871 = vld [vmem:[%s11 + $0x3ec] sm:$0xf]
    %v1872 = vld [vmem:[%s11 + $0x3f0] sm:$0xff]
    %v1873 = vld [vmem:[%s11 + $0x3f8] sm:$0xff]
    %v1874 = vld [vmem:[%s11 + $0x400] sm:$0xff]
    %v1875 = vld [vmem:[%s11 + $0x408] sm:$0xf]
    %v1876 = vld [vmem:[%s11 + $0x40c] sm:$0xff]
    %v1877 = vld [vmem:[%s11 + $0x414] sm:$0xff]
    %v1878 = vld [vmem:[%s11 + $0x41c] sm:$0xff]
    %v1879 = vld [vmem:[%s11 + $0x424] sm:$0xf]
    %v1880 = vld [vmem:[%s11 + $0x428] sm:$0xff]
    %v1881 = vld [vmem:[%s11 + $0x430] sm:$0xff]
    %v1882 = vld [vmem:[%s11 + $0x438] sm:$0xff]
    %v1883 = vld [vmem:[%s11 + $0x440] sm:$0xf]
    %v1884 = vld [vmem:[%s11 + $0x444] sm:$0xff]
    %v1885 = vld [vmem:[%s11 + $0x44c] sm:$0xff]
    %v1886 = vld [vmem:[%s11 + $0x454] sm:$0xff]
    %v1887 = vld [vmem:[%s11 + $0x45c] sm:$0xf]
    %v1888 = vld [vmem:[%s11 + $0x460] sm:$0xff]
    %v1889 = vld [vmem:[%s11 + $0x468] sm:$0xff]
    %v1890 = vld [vmem:[%s11 + $0x470] sm:$0xff]
    %v1891 = vld [vmem:[%s11 + $0x478] sm:$0xf]
    %v1892 = vld [vmem:[%s11 + $0x47c] sm:$0xff]
    %v1893 = vld [vmem:[%s11 + $0x484] sm:$0xff]
    %v1894 = vld [vmem:[%s11 + $0x48c] sm:$0xff]
    %v1895 = vld [vmem:[%s11 + $0x494] sm:$0xf]
    %v1896 = vld [vmem:[%s11 + $0x498] sm:$0xff]
    %v1897 = vld [vmem:[%s11 + $0x4a0] sm:$0xff]
    %v1898 = vld [vmem:[%s11 + $0x4a8] sm:$0xff]
    %v1899 = vld [vmem:[%s11 + $0x4b0] sm:$0xf]
    %v1900 = vld [vmem:[%s11 + $0x4b4] sm:$0xff]
    %v1901 = vld [vmem:[%s11 + $0x4bc] sm:$0xff]
    %v1902 = vld [vmem:[%s11 + $0x4c4] sm:$0xff]
    %v1903 = vld [vmem:[%s11 + $0x4cc] sm:$0xf]
    %v1904 = vld [vmem:[%s11 + $0x4d0] sm:$0xff]
    %v1905 = vld [vmem:[%s11 + $0x4d8] sm:$0xff]
    %v1906 = vld [vmem:[%s11 + $0x4e0] sm:$0xff]
    %v1907 = vld [vmem:[%s11 + $0x4e8] sm:$0xf]
    %v1908 = vld [vmem:[%s11 + $0x4ec] sm:$0xff]
    %v1909 = vld [vmem:[%s11 + $0x4f4] sm:$0xff]
    %v1910 = vld [vmem:[%s11 + $0x4fc] sm:$0xff]
    %v1911 = vld [vmem:[%s11 + $0x504] sm:$0xf]
    %v1912 = vld [vmem:[%s11 + $0x508] sm:$0xff]
    %v1913 = vld [vmem:[%s11 + $0x510] sm:$0xff]
    %v1914 = vld [vmem:[%s11 + $0x518] sm:$0xff]
    %v1915 = vld [vmem:[%s11 + $0x520] sm:$0xf]
    %v1916 = vld [vmem:[%s11 + $0x524] sm:$0xff]
    %v1917 = vld [vmem:[%s11 + $0x52c] sm:$0xff]
    %v1918 = vld [vmem:[%s11 + $0x534] sm:$0xff]
    %v1919 = vld [vmem:[%s11 + $0x53c] sm:$0xf]
    %v1920 = vld [vmem:[%s11 + $0x540] sm:$0xff]
    %v1921 = vld [vmem:[%s11 + $0x548] sm:$0xff]
    %v1922 = vld [vmem:[%s11 + $0x550] sm:$0xff]
    %v1923 = vld [vmem:[%s11 + $0x558] sm:$0xf]
    %v1924 = vld [vmem:[%s11 + $0x55c] sm:$0xff]
    %v1925 = vld [vmem:[%s11 + $0x564] sm:$0xff]
    %v1926 = vld [vmem:[%s11 + $0x56c] sm:$0xff]
    %v1927 = vld [vmem:[%s11 + $0x574] sm:$0xf]
    %v1928 = vld [vmem:[%s11 + $0x578] sm:$0xff]
    %v1929 = vld [vmem:[%s11 + $0x580] sm:$0xff]
    %v1930 = vld [vmem:[%s11 + $0x588] sm:$0xff]
    %v1931 = vld [vmem:[%s11 + $0x590] sm:$0xf]
    %v1932 = vld [vmem:[%s11 + $0x594] sm:$0xff]
    %v1933 = vld [vmem:[%s11 + $0x59c] sm:$0xff]
    %v1934 = vld [vmem:[%s11 + $0x5a4] sm:$0xff]
    %v1935 = vld [vmem:[%s11 + $0x5ac] sm:$0xf]
    %v1936 = vld [vmem:[%s11 + $0x5b0] sm:$0xff]
    %v1937 = vld [vmem:[%s11 + $0x5b8] sm:$0xff]
    %v1938 = vld [vmem:[%s11 + $0x5c0] sm:$0xff]
    %v1939 = vld [vmem:[%s11 + $0x5c8] sm:$0xf]
    %v1940 = vld [vmem:[%s11 + $0x5cc] sm:$0xff]
    %v1941 = vld [vmem:[%s11 + $0x5d4] sm:$0xff]
    %v1942 = vld [vmem:[%s11 + $0x5dc] sm:$0xff]
    %v1943 = vld [vmem:[%s11 + $0x5e4] sm:$0xf]
    %v1944 = vld [vmem:[%s11 + $0x5e8] sm:$0xff]
    %v1945 = vld [vmem:[%s11 + $0x5f0] sm:$0xff]
    %v1946 = vld [vmem:[%s11 + $0x5f8] sm:$0xff]
    %v1947 = vld [vmem:[%s11 + $0x600] sm:$0xf]
    %v1948 = vld [vmem:[%s11 + $0x604] sm:$0xff]
    %v1949 = vld [vmem:[%s11 + $0x60c] sm:$0xff]
    %v1950 = vld [vmem:[%s11 + $0x614] sm:$0xff]
    %v1951 = vld [vmem:[%s11 + $0x61c] sm:$0xf]
    %v1952 = vld [vmem:[%s11 + $0x620] sm:$0xff]
    %v1953 = vld [vmem:[%s11 + $0x628] sm:$0xff]
    %v1954 = vld [vmem:[%s11 + $0x630] sm:$0xff]
    %v1955 = vld [vmem:[%s11 + $0x638] sm:$0xf]
    %v1956 = vld [vmem:[%s11 + $0x63c] sm:$0xff]
    %v1957 = vld [vmem:[%s11 + $0x644] sm:$0xff]
    %v1958 = vld [vmem:[%s11 + $0x64c] sm:$0xff]
    %v1959 = vld [vmem:[%s11 + $0x654] sm:$0xf]
    %v1960 = vld [vmem:[%s11 + $0x658] sm:$0xff]
    %v1961 = vld [vmem:[%s11 + $0x660] sm:$0xff]
    %v1962 = vld [vmem:[%s11 + $0x668] sm:$0xff]
    %v1963 = vld [vmem:[%s11 + $0x670] sm:$0xf]
    %v1964 = vld [vmem:[%s11 + $0x674] sm:$0xff]
    %v1965 = vld [vmem:[%s11 + $0x67c] sm:$0xff]
    %v1966 = vld [vmem:[%s11 + $0x684] sm:$0xff]
    %v1967 = vld [vmem:[%s11 + $0x68c] sm:$0xf]
    %v1968 = vld [vmem:[%s11 + $0x690] sm:$0xff]
    %v1969 = vld [vmem:[%s11 + $0x698] sm:$0xff]
    %v1970 = vld [vmem:[%s11 + $0x6a0] sm:$0xff]
    %v1971 = vld [vmem:[%s11 + $0x6a8] sm:$0xf]
    %v1972 = vld [vmem:[%s11 + $0x6ac] sm:$0xff]
    %v1973 = vld [vmem:[%s11 + $0x6b4] sm:$0xff]
    %v1974 = vld [vmem:[%s11 + $0x6bc] sm:$0xff]
    %v1975 = vld [vmem:[%s11 + $0x6c4] sm:$0xf]
    %v1976 = vld [vmem:[%s11 + $0x6c8] sm:$0xff]
    %v1977 = vld [vmem:[%s11 + $0x6d0] sm:$0xff]
    %v1978 = vld [vmem:[%s11 + $0x6d8] sm:$0xff]
    %v1979 = vld [vmem:[%s11 + $0x6e0] sm:$0xf]
    %v1980 = vld [vmem:[%s11 + $0x6e4] sm:$0xff]
    %v1981 = vld [vmem:[%s11 + $0x6ec] sm:$0xff]
    %v1982 = vld [vmem:[%s11 + $0x6f4] sm:$0xff]
    %v1983 = vld [vmem:[%s11 + $0x6fc] sm:$0xf]
    %v1984 = vld [vmem:[%s12] sm:$0x7f]
    %v1986 = vlaneseq
    %v1987 = vshrl.u32 %v1986, 7
    %v1988 = vsub.s32 0, %v1987
    %v1989 = vrot.slane %v1984, %v1988
    %v1990 = vlaneseq
    %v1991 = vshrl.u32 %v1990, 7
    %v1992 = vsub.s32 1, %v1991
    %v1993 = vrot.slane %v1984, %v1992
    %v1994 = vlaneseq
    %v1995 = vshrl.u32 %v1994, 7
    %v1996 = vsub.s32 2, %v1995
    %v1997 = vrot.slane %v1984, %v1996
    %v1998 = vlaneseq
    %v1999 = vshrl.u32 %v1998, 7
    %v2000 = vsub.s32 3, %v1999
    %v2001 = vrot.slane %v1984, %v2000
    %v2002 = vlaneseq
    %v2003 = vshrl.u32 %v2002, 7
    %v2004 = vsub.s32 4, %v2003
    %v2005 = vrot.slane %v1984, %v2004
    %v2006 = vlaneseq
    %v2007 = vshrl.u32 %v2006, 7
    %v2008 = vsub.s32 5, %v2007
    %v2009 = vrot.slane %v1984, %v2008
    %v2010 = vlaneseq
    %v2011 = vshrl.u32 %v2010, 7
    %v2012 = vsub.s32 6, %v2011
    %v2013 = vrot.slane %v1984, %v2012
    %v2277 = vunpack.c.l.b16 %v1728
    %v2278 = vunpack.c.h.b16 %v1728
    %v2279 = vunpack.c.l.b16 %v1729
    %v2280 = vunpack.c.h.b16 %v1729
    %v2281 = vunpack.c.l.b16 %v1730
    %v2282 = vunpack.c.h.b16 %v1730
    %v2283 = vunpack.c.l.b16 %v1731
    %v2284 = vunpack.c.l.b16 %v1732
    %v2285 = vunpack.c.h.b16 %v1732
    %v2286 = vunpack.c.l.b16 %v1733
    %v2287 = vunpack.c.h.b16 %v1733
    %v2288 = vunpack.c.l.b16 %v1734
    %v2289 = vunpack.c.h.b16 %v1734
    %v2290 = vunpack.c.l.b16 %v1735
    %v2291 = vunpack.c.l.b16 %v1736
    %v2292 = vunpack.c.h.b16 %v1736
    %v2293 = vunpack.c.l.b16 %v1737
    %v2294 = vunpack.c.h.b16 %v1737
    %v2295 = vunpack.c.l.b16 %v1738
    %v2296 = vunpack.c.h.b16 %v1738
    %v2297 = vunpack.c.l.b16 %v1739
    %v2298 = vunpack.c.l.b16 %v1740
    %v2299 = vunpack.c.h.b16 %v1740
    %v2300 = vunpack.c.l.b16 %v1741
    %v2301 = vunpack.c.h.b16 %v1741
    %v2302 = vunpack.c.l.b16 %v1742
    %v2303 = vunpack.c.h.b16 %v1742
    %v2304 = vunpack.c.l.b16 %v1743
    %v2305 = vunpack.c.l.b16 %v1744
    %v2306 = vunpack.c.h.b16 %v1744
    %v2307 = vunpack.c.l.b16 %v1745
    %v2308 = vunpack.c.h.b16 %v1745
    %v2309 = vunpack.c.l.b16 %v1746
    %v2310 = vunpack.c.h.b16 %v1746
    %v2311 = vunpack.c.l.b16 %v1747
    %v2312 = vunpack.c.l.b16 %v1748
    %v2313 = vunpack.c.h.b16 %v1748
    %v2314 = vunpack.c.l.b16 %v1749
    %v2315 = vunpack.c.h.b16 %v1749
    %v2316 = vunpack.c.l.b16 %v1750
    %v2317 = vunpack.c.h.b16 %v1750
    %v2318 = vunpack.c.l.b16 %v1751
    %v2319 = vunpack.c.l.b16 %v1752
    %v2320 = vunpack.c.h.b16 %v1752
    %v2321 = vunpack.c.l.b16 %v1753
    %v2322 = vunpack.c.h.b16 %v1753
    %v2323 = vunpack.c.l.b16 %v1754
    %v2324 = vunpack.c.h.b16 %v1754
    %v2325 = vunpack.c.l.b16 %v1755
    %v2326 = vunpack.c.l.b16 %v1756
    %v2327 = vunpack.c.h.b16 %v1756
    %v2328 = vunpack.c.l.b16 %v1757
    %v2329 = vunpack.c.h.b16 %v1757
    %v2330 = vunpack.c.l.b16 %v1758
    %v2331 = vunpack.c.h.b16 %v1758
    %v2332 = vunpack.c.l.b16 %v1759
    %v2333 = vunpack.c.l.b16 %v1760
    %v2334 = vunpack.c.h.b16 %v1760
    %v2335 = vunpack.c.l.b16 %v1761
    %v2336 = vunpack.c.h.b16 %v1761
    %v2337 = vunpack.c.l.b16 %v1762
    %v2338 = vunpack.c.h.b16 %v1762
    %v2339 = vunpack.c.l.b16 %v1763
    %v2340 = vunpack.c.l.b16 %v1764
    %v2341 = vunpack.c.h.b16 %v1764
    %v2342 = vunpack.c.l.b16 %v1765
    %v2343 = vunpack.c.h.b16 %v1765
    %v2344 = vunpack.c.l.b16 %v1766
    %v2345 = vunpack.c.h.b16 %v1766
    %v2346 = vunpack.c.l.b16 %v1767
    %v2347 = vunpack.c.l.b16 %v1768
    %v2348 = vunpack.c.h.b16 %v1768
    %v2349 = vunpack.c.l.b16 %v1769
    %v2350 = vunpack.c.h.b16 %v1769
    %v2351 = vunpack.c.l.b16 %v1770
    %v2352 = vunpack.c.h.b16 %v1770
    %v2353 = vunpack.c.l.b16 %v1771
    %v2354 = vunpack.c.l.b16 %v1772
    %v2355 = vunpack.c.h.b16 %v1772
    %v2356 = vunpack.c.l.b16 %v1773
    %v2357 = vunpack.c.h.b16 %v1773
    %v2358 = vunpack.c.l.b16 %v1774
    %v2359 = vunpack.c.h.b16 %v1774
    %v2360 = vunpack.c.l.b16 %v1775
    %v2361 = vunpack.c.l.b16 %v1776
    %v2362 = vunpack.c.h.b16 %v1776
    %v2363 = vunpack.c.l.b16 %v1777
    %v2364 = vunpack.c.h.b16 %v1777
    %v2365 = vunpack.c.l.b16 %v1778
    %v2366 = vunpack.c.h.b16 %v1778
    %v2367 = vunpack.c.l.b16 %v1779
    %v2368 = vunpack.c.l.b16 %v1780
    %v2369 = vunpack.c.h.b16 %v1780
    %v2370 = vunpack.c.l.b16 %v1781
    %v2371 = vunpack.c.h.b16 %v1781
    %v2372 = vunpack.c.l.b16 %v1782
    %v2373 = vunpack.c.h.b16 %v1782
    %v2374 = vunpack.c.l.b16 %v1783
    %v2375 = vunpack.c.l.b16 %v1784
    %v2376 = vunpack.c.h.b16 %v1784
    %v2377 = vunpack.c.l.b16 %v1785
    %v2378 = vunpack.c.h.b16 %v1785
    %v2379 = vunpack.c.l.b16 %v1786
    %v2380 = vunpack.c.h.b16 %v1786
    %v2381 = vunpack.c.l.b16 %v1787
    %v2382 = vunpack.c.l.b16 %v1788
    %v2383 = vunpack.c.h.b16 %v1788
    %v2384 = vunpack.c.l.b16 %v1789
    %v2385 = vunpack.c.h.b16 %v1789
    %v2386 = vunpack.c.l.b16 %v1790
    %v2387 = vunpack.c.h.b16 %v1790
    %v2388 = vunpack.c.l.b16 %v1791
    %v2389 = vunpack.c.l.b16 %v1792
    %v2390 = vunpack.c.h.b16 %v1792
    %v2391 = vunpack.c.l.b16 %v1793
    %v2392 = vunpack.c.h.b16 %v1793
    %v2393 = vunpack.c.l.b16 %v1794
    %v2394 = vunpack.c.h.b16 %v1794
    %v2395 = vunpack.c.l.b16 %v1795
    %v2396 = vunpack.c.l.b16 %v1796
    %v2397 = vunpack.c.h.b16 %v1796
    %v2398 = vunpack.c.l.b16 %v1797
    %v2399 = vunpack.c.h.b16 %v1797
    %v2400 = vunpack.c.l.b16 %v1798
    %v2401 = vunpack.c.h.b16 %v1798
    %v2402 = vunpack.c.l.b16 %v1799
    %v2403 = vunpack.c.l.b16 %v1800
    %v2404 = vunpack.c.h.b16 %v1800
    %v2405 = vunpack.c.l.b16 %v1801
    %v2406 = vunpack.c.h.b16 %v1801
    %v2407 = vunpack.c.l.b16 %v1802
    %v2408 = vunpack.c.h.b16 %v1802
    %v2409 = vunpack.c.l.b16 %v1803
    %v2410 = vunpack.c.l.b16 %v1804
    %v2411 = vunpack.c.h.b16 %v1804
    %v2412 = vunpack.c.l.b16 %v1805
    %v2413 = vunpack.c.h.b16 %v1805
    %v2414 = vunpack.c.l.b16 %v1806
    %v2415 = vunpack.c.h.b16 %v1806
    %v2416 = vunpack.c.l.b16 %v1807
    %v2417 = vunpack.c.l.b16 %v1808
    %v2418 = vunpack.c.h.b16 %v1808
    %v2419 = vunpack.c.l.b16 %v1809
    %v2420 = vunpack.c.h.b16 %v1809
    %v2421 = vunpack.c.l.b16 %v1810
    %v2422 = vunpack.c.h.b16 %v1810
    %v2423 = vunpack.c.l.b16 %v1811
    %v2424 = vunpack.c.l.b16 %v1812
    %v2425 = vunpack.c.h.b16 %v1812
    %v2426 = vunpack.c.l.b16 %v1813
    %v2427 = vunpack.c.h.b16 %v1813
    %v2428 = vunpack.c.l.b16 %v1814
    %v2429 = vunpack.c.h.b16 %v1814
    %v2430 = vunpack.c.l.b16 %v1815
    %v2431 = vunpack.c.l.b16 %v1816
    %v2432 = vunpack.c.h.b16 %v1816
    %v2433 = vunpack.c.l.b16 %v1817
    %v2434 = vunpack.c.h.b16 %v1817
    %v2435 = vunpack.c.l.b16 %v1818
    %v2436 = vunpack.c.h.b16 %v1818
    %v2437 = vunpack.c.l.b16 %v1819
    %v2438 = vunpack.c.l.b16 %v1820
    %v2439 = vunpack.c.h.b16 %v1820
    %v2440 = vunpack.c.l.b16 %v1821
    %v2441 = vunpack.c.h.b16 %v1821
    %v2442 = vunpack.c.l.b16 %v1822
    %v2443 = vunpack.c.h.b16 %v1822
    %v2444 = vunpack.c.l.b16 %v1823
    %v2445 = vunpack.c.l.b16 %v1824
    %v2446 = vunpack.c.h.b16 %v1824
    %v2447 = vunpack.c.l.b16 %v1825
    %v2448 = vunpack.c.h.b16 %v1825
    %v2449 = vunpack.c.l.b16 %v1826
    %v2450 = vunpack.c.h.b16 %v1826
    %v2451 = vunpack.c.l.b16 %v1827
    %v2452 = vunpack.c.l.b16 %v1828
    %v2453 = vunpack.c.h.b16 %v1828
    %v2454 = vunpack.c.l.b16 %v1829
    %v2455 = vunpack.c.h.b16 %v1829
    %v2456 = vunpack.c.l.b16 %v1830
    %v2457 = vunpack.c.h.b16 %v1830
    %v2458 = vunpack.c.l.b16 %v1831
    %v2459 = vunpack.c.l.b16 %v1832
    %v2460 = vunpack.c.h.b16 %v1832
    %v2461 = vunpack.c.l.b16 %v1833
    %v2462 = vunpack.c.h.b16 %v1833
    %v2463 = vunpack.c.l.b16 %v1834
    %v2464 = vunpack.c.h.b16 %v1834
    %v2465 = vunpack.c.l.b16 %v1835
    %v2466 = vunpack.c.l.b16 %v1836
    %v2467 = vunpack.c.h.b16 %v1836
    %v2468 = vunpack.c.l.b16 %v1837
    %v2469 = vunpack.c.h.b16 %v1837
    %v2470 = vunpack.c.l.b16 %v1838
    %v2471 = vunpack.c.h.b16 %v1838
    %v2472 = vunpack.c.l.b16 %v1839
    %v2473 = vunpack.c.l.b16 %v1840
    %v2474 = vunpack.c.h.b16 %v1840
    %v2475 = vunpack.c.l.b16 %v1841
    %v2476 = vunpack.c.h.b16 %v1841
    %v2477 = vunpack.c.l.b16 %v1842
    %v2478 = vunpack.c.h.b16 %v1842
    %v2479 = vunpack.c.l.b16 %v1843
    %v2480 = vunpack.c.l.b16 %v1844
    %v2481 = vunpack.c.h.b16 %v1844
    %v2482 = vunpack.c.l.b16 %v1845
    %v2483 = vunpack.c.h.b16 %v1845
    %v2484 = vunpack.c.l.b16 %v1846
    %v2485 = vunpack.c.h.b16 %v1846
    %v2486 = vunpack.c.l.b16 %v1847
    %v2487 = vunpack.c.l.b16 %v1848
    %v2488 = vunpack.c.h.b16 %v1848
    %v2489 = vunpack.c.l.b16 %v1849
    %v2490 = vunpack.c.h.b16 %v1849
    %v2491 = vunpack.c.l.b16 %v1850
    %v2492 = vunpack.c.h.b16 %v1850
    %v2493 = vunpack.c.l.b16 %v1851
    %v2494 = vunpack.c.l.b16 %v1852
    %v2495 = vunpack.c.h.b16 %v1852
    %v2496 = vunpack.c.l.b16 %v1853
    %v2497 = vunpack.c.h.b16 %v1853
    %v2498 = vunpack.c.l.b16 %v1854
    %v2499 = vunpack.c.h.b16 %v1854
    %v2500 = vunpack.c.l.b16 %v1855
    %v2501 = vunpack.c.l.b16 %v1856
    %v2502 = vunpack.c.h.b16 %v1856
    %v2503 = vunpack.c.l.b16 %v1857
    %v2504 = vunpack.c.h.b16 %v1857
    %v2505 = vunpack.c.l.b16 %v1858
    %v2506 = vunpack.c.h.b16 %v1858
    %v2507 = vunpack.c.l.b16 %v1859
    %v2508 = vunpack.c.l.b16 %v1860
    %v2509 = vunpack.c.h.b16 %v1860
    %v2510 = vunpack.c.l.b16 %v1861
    %v2511 = vunpack.c.h.b16 %v1861
    %v2512 = vunpack.c.l.b16 %v1862
    %v2513 = vunpack.c.h.b16 %v1862
    %v2514 = vunpack.c.l.b16 %v1863
    %v2515 = vunpack.c.l.b16 %v1864
    %v2516 = vunpack.c.h.b16 %v1864
    %v2517 = vunpack.c.l.b16 %v1865
    %v2518 = vunpack.c.h.b16 %v1865
    %v2519 = vunpack.c.l.b16 %v1866
    %v2520 = vunpack.c.h.b16 %v1866
    %v2521 = vunpack.c.l.b16 %v1867
    %v2522 = vunpack.c.l.b16 %v1868
    %v2523 = vunpack.c.h.b16 %v1868
    %v2524 = vunpack.c.l.b16 %v1869
    %v2525 = vunpack.c.h.b16 %v1869
    %v2526 = vunpack.c.l.b16 %v1870
    %v2527 = vunpack.c.h.b16 %v1870
    %v2528 = vunpack.c.l.b16 %v1871
    %v2529 = vunpack.c.l.b16 %v1872
    %v2530 = vunpack.c.h.b16 %v1872
    %v2531 = vunpack.c.l.b16 %v1873
    %v2532 = vunpack.c.h.b16 %v1873
    %v2533 = vunpack.c.l.b16 %v1874
    %v2534 = vunpack.c.h.b16 %v1874
    %v2535 = vunpack.c.l.b16 %v1875
    %v2536 = vunpack.c.l.b16 %v1876
    %v2537 = vunpack.c.h.b16 %v1876
    %v2538 = vunpack.c.l.b16 %v1877
    %v2539 = vunpack.c.h.b16 %v1877
    %v2540 = vunpack.c.l.b16 %v1878
    %v2541 = vunpack.c.h.b16 %v1878
    %v2542 = vunpack.c.l.b16 %v1879
    %v2543 = vunpack.c.l.b16 %v1880
    %v2544 = vunpack.c.h.b16 %v1880
    %v2545 = vunpack.c.l.b16 %v1881
    %v2546 = vunpack.c.h.b16 %v1881
    %v2547 = vunpack.c.l.b16 %v1882
    %v2548 = vunpack.c.h.b16 %v1882
    %v2549 = vunpack.c.l.b16 %v1883
    %v2550 = vunpack.c.l.b16 %v1884
    %v2551 = vunpack.c.h.b16 %v1884
    %v2552 = vunpack.c.l.b16 %v1885
    %v2553 = vunpack.c.h.b16 %v1885
    %v2554 = vunpack.c.l.b16 %v1886
    %v2555 = vunpack.c.h.b16 %v1886
    %v2556 = vunpack.c.l.b16 %v1887
    %v2557 = vunpack.c.l.b16 %v1888
    %v2558 = vunpack.c.h.b16 %v1888
    %v2559 = vunpack.c.l.b16 %v1889
    %v2560 = vunpack.c.h.b16 %v1889
    %v2561 = vunpack.c.l.b16 %v1890
    %v2562 = vunpack.c.h.b16 %v1890
    %v2563 = vunpack.c.l.b16 %v1891
    %v2564 = vunpack.c.l.b16 %v1892
    %v2565 = vunpack.c.h.b16 %v1892
    %v2566 = vunpack.c.l.b16 %v1893
    %v2567 = vunpack.c.h.b16 %v1893
    %v2568 = vunpack.c.l.b16 %v1894
    %v2569 = vunpack.c.h.b16 %v1894
    %v2570 = vunpack.c.l.b16 %v1895
    %v2571 = vunpack.c.l.b16 %v1896
    %v2572 = vunpack.c.h.b16 %v1896
    %v2573 = vunpack.c.l.b16 %v1897
    %v2574 = vunpack.c.h.b16 %v1897
    %v2575 = vunpack.c.l.b16 %v1898
    %v2576 = vunpack.c.h.b16 %v1898
    %v2577 = vunpack.c.l.b16 %v1899
    %v2578 = vunpack.c.l.b16 %v1900
    %v2579 = vunpack.c.h.b16 %v1900
    %v2580 = vunpack.c.l.b16 %v1901
    %v2581 = vunpack.c.h.b16 %v1901
    %v2582 = vunpack.c.l.b16 %v1902
    %v2583 = vunpack.c.h.b16 %v1902
    %v2584 = vunpack.c.l.b16 %v1903
    %v2585 = vunpack.c.l.b16 %v1904
    %v2586 = vunpack.c.h.b16 %v1904
    %v2587 = vunpack.c.l.b16 %v1905
    %v2588 = vunpack.c.h.b16 %v1905
    %v2589 = vunpack.c.l.b16 %v1906
    %v2590 = vunpack.c.h.b16 %v1906
    %v2591 = vunpack.c.l.b16 %v1907
    %v2592 = vunpack.c.l.b16 %v1908
    %v2593 = vunpack.c.h.b16 %v1908
    %v2594 = vunpack.c.l.b16 %v1909
    %v2595 = vunpack.c.h.b16 %v1909
    %v2596 = vunpack.c.l.b16 %v1910
    %v2597 = vunpack.c.h.b16 %v1910
    %v2598 = vunpack.c.l.b16 %v1911
    %v2599 = vunpack.c.l.b16 %v1912
    %v2600 = vunpack.c.h.b16 %v1912
    %v2601 = vunpack.c.l.b16 %v1913
    %v2602 = vunpack.c.h.b16 %v1913
    %v2603 = vunpack.c.l.b16 %v1914
    %v2604 = vunpack.c.h.b16 %v1914
    %v2605 = vunpack.c.l.b16 %v1915
    %v2606 = vunpack.c.l.b16 %v1916
    %v2607 = vunpack.c.h.b16 %v1916
    %v2608 = vunpack.c.l.b16 %v1917
    %v2609 = vunpack.c.h.b16 %v1917
    %v2610 = vunpack.c.l.b16 %v1918
    %v2611 = vunpack.c.h.b16 %v1918
    %v2612 = vunpack.c.l.b16 %v1919
    %v2613 = vunpack.c.l.b16 %v1920
    %v2614 = vunpack.c.h.b16 %v1920
    %v2615 = vunpack.c.l.b16 %v1921
    %v2616 = vunpack.c.h.b16 %v1921
    %v2617 = vunpack.c.l.b16 %v1922
    %v2618 = vunpack.c.h.b16 %v1922
    %v2619 = vunpack.c.l.b16 %v1923
    %v2620 = vunpack.c.l.b16 %v1924
    %v2621 = vunpack.c.h.b16 %v1924
    %v2622 = vunpack.c.l.b16 %v1925
    %v2623 = vunpack.c.h.b16 %v1925
    %v2624 = vunpack.c.l.b16 %v1926
    %v2625 = vunpack.c.h.b16 %v1926
    %v2626 = vunpack.c.l.b16 %v1927
    %v2627 = vunpack.c.l.b16 %v1928
    %v2628 = vunpack.c.h.b16 %v1928
    %v2629 = vunpack.c.l.b16 %v1929
    %v2630 = vunpack.c.h.b16 %v1929
    %v2631 = vunpack.c.l.b16 %v1930
    %v2632 = vunpack.c.h.b16 %v1930
    %v2633 = vunpack.c.l.b16 %v1931
    %v2634 = vunpack.c.l.b16 %v1932
    %v2635 = vunpack.c.h.b16 %v1932
    %v2636 = vunpack.c.l.b16 %v1933
    %v2637 = vunpack.c.h.b16 %v1933
    %v2638 = vunpack.c.l.b16 %v1934
    %v2639 = vunpack.c.h.b16 %v1934
    %v2640 = vunpack.c.l.b16 %v1935
    %v2641 = vunpack.c.l.b16 %v1936
    %v2642 = vunpack.c.h.b16 %v1936
    %v2643 = vunpack.c.l.b16 %v1937
    %v2644 = vunpack.c.h.b16 %v1937
    %v2645 = vunpack.c.l.b16 %v1938
    %v2646 = vunpack.c.h.b16 %v1938
    %v2647 = vunpack.c.l.b16 %v1939
    %v2648 = vunpack.c.l.b16 %v1940
    %v2649 = vunpack.c.h.b16 %v1940
    %v2650 = vunpack.c.l.b16 %v1941
    %v2651 = vunpack.c.h.b16 %v1941
    %v2652 = vunpack.c.l.b16 %v1942
    %v2653 = vunpack.c.h.b16 %v1942
    %v2654 = vunpack.c.l.b16 %v1943
    %v2655 = vunpack.c.l.b16 %v1944
    %v2656 = vunpack.c.h.b16 %v1944
    %v2657 = vunpack.c.l.b16 %v1945
    %v2658 = vunpack.c.h.b16 %v1945
    %v2659 = vunpack.c.l.b16 %v1946
    %v2660 = vunpack.c.h.b16 %v1946
    %v2661 = vunpack.c.l.b16 %v1947
    %v2662 = vunpack.c.l.b16 %v1948
    %v2663 = vunpack.c.h.b16 %v1948
    %v2664 = vunpack.c.l.b16 %v1949
    %v2665 = vunpack.c.h.b16 %v1949
    %v2666 = vunpack.c.l.b16 %v1950
    %v2667 = vunpack.c.h.b16 %v1950
    %v2668 = vunpack.c.l.b16 %v1951
    %v2669 = vunpack.c.l.b16 %v1952
    %v2670 = vunpack.c.h.b16 %v1952
    %v2671 = vunpack.c.l.b16 %v1953
    %v2672 = vunpack.c.h.b16 %v1953
    %v2673 = vunpack.c.l.b16 %v1954
    %v2674 = vunpack.c.h.b16 %v1954
    %v2675 = vunpack.c.l.b16 %v1955
    %v2676 = vunpack.c.l.b16 %v1956
    %v2677 = vunpack.c.h.b16 %v1956
    %v2678 = vunpack.c.l.b16 %v1957
    %v2679 = vunpack.c.h.b16 %v1957
    %v2680 = vunpack.c.l.b16 %v1958
    %v2681 = vunpack.c.h.b16 %v1958
    %v2682 = vunpack.c.l.b16 %v1959
    %v2683 = vunpack.c.l.b16 %v1960
    %v2684 = vunpack.c.h.b16 %v1960
    %v2685 = vunpack.c.l.b16 %v1961
    %v2686 = vunpack.c.h.b16 %v1961
    %v2687 = vunpack.c.l.b16 %v1962
    %v2688 = vunpack.c.h.b16 %v1962
    %v2689 = vunpack.c.l.b16 %v1963
    %v2690 = vunpack.c.l.b16 %v1964
    %v2691 = vunpack.c.h.b16 %v1964
    %v2692 = vunpack.c.l.b16 %v1965
    %v2693 = vunpack.c.h.b16 %v1965
    %v2694 = vunpack.c.l.b16 %v1966
    %v2695 = vunpack.c.h.b16 %v1966
    %v2696 = vunpack.c.l.b16 %v1967
    %v2697 = vunpack.c.l.b16 %v1968
    %v2698 = vunpack.c.h.b16 %v1968
    %v2699 = vunpack.c.l.b16 %v1969
    %v2700 = vunpack.c.h.b16 %v1969
    %v2701 = vunpack.c.l.b16 %v1970
    %v2702 = vunpack.c.h.b16 %v1970
    %v2703 = vunpack.c.l.b16 %v1971
    %v2704 = vunpack.c.l.b16 %v1972
    %v2705 = vunpack.c.h.b16 %v1972
    %v2706 = vunpack.c.l.b16 %v1973
    %v2707 = vunpack.c.h.b16 %v1973
    %v2708 = vunpack.c.l.b16 %v1974
    %v2709 = vunpack.c.h.b16 %v1974
    %v2710 = vunpack.c.l.b16 %v1975
    %v2711 = vunpack.c.l.b16 %v1976
    %v2712 = vunpack.c.h.b16 %v1976
    %v2713 = vunpack.c.l.b16 %v1977
    %v2714 = vunpack.c.h.b16 %v1977
    %v2715 = vunpack.c.l.b16 %v1978
    %v2716 = vunpack.c.h.b16 %v1978
    %v2717 = vunpack.c.l.b16 %v1979
    %v2718 = vunpack.c.l.b16 %v1980
    %v2719 = vunpack.c.h.b16 %v1980
    %v2720 = vunpack.c.l.b16 %v1981
    %v2721 = vunpack.c.h.b16 %v1981
    %v2722 = vunpack.c.l.b16 %v1982
    %v2723 = vunpack.c.h.b16 %v1982
    %v2724 = vunpack.c.l.b16 %v1983
    %v2725 = vpack.c.b16 %v2284, %v2277
    %v2726 = vpack.c.b16 %v2285, %v2278
    %v2727 = vpack.c.b16 %v2286, %v2279
    %v2728 = vpack.c.b16 %v2287, %v2280
    %v2729 = vpack.c.b16 %v2288, %v2281
    %v2730 = vpack.c.b16 %v2289, %v2282
    %v2731 = vpack.c.b16 %v2290, %v2283
    %v2732 = vpack.c.b16 %v2298, %v2291
    %v2733 = vpack.c.b16 %v2299, %v2292
    %v2734 = vpack.c.b16 %v2300, %v2293
    %v2735 = vpack.c.b16 %v2301, %v2294
    %v2736 = vpack.c.b16 %v2302, %v2295
    %v2737 = vpack.c.b16 %v2303, %v2296
    %v2738 = vpack.c.b16 %v2304, %v2297
    %v2739 = vpack.c.b16 %v2312, %v2305
    %v2740 = vpack.c.b16 %v2313, %v2306
    %v2741 = vpack.c.b16 %v2314, %v2307
    %v2742 = vpack.c.b16 %v2315, %v2308
    %v2743 = vpack.c.b16 %v2316, %v2309
    %v2744 = vpack.c.b16 %v2317, %v2310
    %v2745 = vpack.c.b16 %v2318, %v2311
    %v2746 = vpack.c.b16 %v2326, %v2319
    %v2747 = vpack.c.b16 %v2327, %v2320
    %v2748 = vpack.c.b16 %v2328, %v2321
    %v2749 = vpack.c.b16 %v2329, %v2322
    %v2750 = vpack.c.b16 %v2330, %v2323
    %v2751 = vpack.c.b16 %v2331, %v2324
    %v2752 = vpack.c.b16 %v2332, %v2325
    %v2753 = vpack.c.b16 %v2340, %v2333
    %v2754 = vpack.c.b16 %v2341, %v2334
    %v2755 = vpack.c.b16 %v2342, %v2335
    %v2756 = vpack.c.b16 %v2343, %v2336
    %v2757 = vpack.c.b16 %v2344, %v2337
    %v2758 = vpack.c.b16 %v2345, %v2338
    %v2759 = vpack.c.b16 %v2346, %v2339
    %v2760 = vpack.c.b16 %v2354, %v2347
    %v2761 = vpack.c.b16 %v2355, %v2348
    %v2762 = vpack.c.b16 %v2356, %v2349
    %v2763 = vpack.c.b16 %v2357, %v2350
    %v2764 = vpack.c.b16 %v2358, %v2351
    %v2765 = vpack.c.b16 %v2359, %v2352
    %v2766 = vpack.c.b16 %v2360, %v2353
    %v2767 = vpack.c.b16 %v2368, %v2361
    %v2768 = vpack.c.b16 %v2369, %v2362
    %v2769 = vpack.c.b16 %v2370, %v2363
    %v2770 = vpack.c.b16 %v2371, %v2364
    %v2771 = vpack.c.b16 %v2372, %v2365
    %v2772 = vpack.c.b16 %v2373, %v2366
    %v2773 = vpack.c.b16 %v2374, %v2367
    %v2774 = vpack.c.b16 %v2382, %v2375
    %v2775 = vpack.c.b16 %v2383, %v2376
    %v2776 = vpack.c.b16 %v2384, %v2377
    %v2777 = vpack.c.b16 %v2385, %v2378
    %v2778 = vpack.c.b16 %v2386, %v2379
    %v2779 = vpack.c.b16 %v2387, %v2380
    %v2780 = vpack.c.b16 %v2388, %v2381
    %v2781 = vpack.c.b16 %v2396, %v2389
    %v2782 = vpack.c.b16 %v2397, %v2390
    %v2783 = vpack.c.b16 %v2398, %v2391
    %v2784 = vpack.c.b16 %v2399, %v2392
    %v2785 = vpack.c.b16 %v2400, %v2393
    %v2786 = vpack.c.b16 %v2401, %v2394
    %v2787 = vpack.c.b16 %v2402, %v2395
    %v2788 = vpack.c.b16 %v2410, %v2403
    %v2789 = vpack.c.b16 %v2411, %v2404
    %v2790 = vpack.c.b16 %v2412, %v2405
    %v2791 = vpack.c.b16 %v2413, %v2406
    %v2792 = vpack.c.b16 %v2414, %v2407
    %v2793 = vpack.c.b16 %v2415, %v2408
    %v2794 = vpack.c.b16 %v2416, %v2409
    %v2795 = vpack.c.b16 %v2424, %v2417
    %v2796 = vpack.c.b16 %v2425, %v2418
    %v2797 = vpack.c.b16 %v2426, %v2419
    %v2798 = vpack.c.b16 %v2427, %v2420
    %v2799 = vpack.c.b16 %v2428, %v2421
    %v2800 = vpack.c.b16 %v2429, %v2422
    %v2801 = vpack.c.b16 %v2430, %v2423
    %v2802 = vpack.c.b16 %v2438, %v2431
    %v2803 = vpack.c.b16 %v2439, %v2432
    %v2804 = vpack.c.b16 %v2440, %v2433
    %v2805 = vpack.c.b16 %v2441, %v2434
    %v2806 = vpack.c.b16 %v2442, %v2435
    %v2807 = vpack.c.b16 %v2443, %v2436
    %v2808 = vpack.c.b16 %v2444, %v2437
    %v2809 = vpack.c.b16 %v2452, %v2445
    %v2810 = vpack.c.b16 %v2453, %v2446
    %v2811 = vpack.c.b16 %v2454, %v2447
    %v2812 = vpack.c.b16 %v2455, %v2448
    %v2813 = vpack.c.b16 %v2456, %v2449
    %v2814 = vpack.c.b16 %v2457, %v2450
    %v2815 = vpack.c.b16 %v2458, %v2451
    %v2816 = vpack.c.b16 %v2466, %v2459
    %v2817 = vpack.c.b16 %v2467, %v2460
    %v2818 = vpack.c.b16 %v2468, %v2461
    %v2819 = vpack.c.b16 %v2469, %v2462
    %v2820 = vpack.c.b16 %v2470, %v2463
    %v2821 = vpack.c.b16 %v2471, %v2464
    %v2822 = vpack.c.b16 %v2472, %v2465
    %v2823 = vpack.c.b16 %v2480, %v2473
    %v2824 = vpack.c.b16 %v2481, %v2474
    %v2825 = vpack.c.b16 %v2482, %v2475
    %v2826 = vpack.c.b16 %v2483, %v2476
    %v2827 = vpack.c.b16 %v2484, %v2477
    %v2828 = vpack.c.b16 %v2485, %v2478
    %v2829 = vpack.c.b16 %v2486, %v2479
    %v2830 = vpack.c.b16 %v2494, %v2487
    %v2831 = vpack.c.b16 %v2495, %v2488
    %v2832 = vpack.c.b16 %v2496, %v2489
    %v2833 = vpack.c.b16 %v2497, %v2490
    %v2834 = vpack.c.b16 %v2498, %v2491
    %v2835 = vpack.c.b16 %v2499, %v2492
    %v2836 = vpack.c.b16 %v2500, %v2493
    %v2837 = vpack.c.b16 %v2508, %v2501
    %v2838 = vpack.c.b16 %v2509, %v2502
    %v2839 = vpack.c.b16 %v2510, %v2503
    %v2840 = vpack.c.b16 %v2511, %v2504
    %v2841 = vpack.c.b16 %v2512, %v2505
    %v2842 = vpack.c.b16 %v2513, %v2506
    %v2843 = vpack.c.b16 %v2514, %v2507
    %v2844 = vpack.c.b16 %v2522, %v2515
    %v2845 = vpack.c.b16 %v2523, %v2516
    %v2846 = vpack.c.b16 %v2524, %v2517
    %v2847 = vpack.c.b16 %v2525, %v2518
    %v2848 = vpack.c.b16 %v2526, %v2519
    %v2849 = vpack.c.b16 %v2527, %v2520
    %v2850 = vpack.c.b16 %v2528, %v2521
    %v2851 = vpack.c.b16 %v2536, %v2529
    %v2852 = vpack.c.b16 %v2537, %v2530
    %v2853 = vpack.c.b16 %v2538, %v2531
    %v2854 = vpack.c.b16 %v2539, %v2532
    %v2855 = vpack.c.b16 %v2540, %v2533
    %v2856 = vpack.c.b16 %v2541, %v2534
    %v2857 = vpack.c.b16 %v2542, %v2535
    %v2858 = vpack.c.b16 %v2550, %v2543
    %v2859 = vpack.c.b16 %v2551, %v2544
    %v2860 = vpack.c.b16 %v2552, %v2545
    %v2861 = vpack.c.b16 %v2553, %v2546
    %v2862 = vpack.c.b16 %v2554, %v2547
    %v2863 = vpack.c.b16 %v2555, %v2548
    %v2864 = vpack.c.b16 %v2556, %v2549
    %v2865 = vpack.c.b16 %v2564, %v2557
    %v2866 = vpack.c.b16 %v2565, %v2558
    %v2867 = vpack.c.b16 %v2566, %v2559
    %v2868 = vpack.c.b16 %v2567, %v2560
    %v2869 = vpack.c.b16 %v2568, %v2561
    %v2870 = vpack.c.b16 %v2569, %v2562
    %v2871 = vpack.c.b16 %v2570, %v2563
    %v2872 = vpack.c.b16 %v2578, %v2571
    %v2873 = vpack.c.b16 %v2579, %v2572
    %v2874 = vpack.c.b16 %v2580, %v2573
    %v2875 = vpack.c.b16 %v2581, %v2574
    %v2876 = vpack.c.b16 %v2582, %v2575
    %v2877 = vpack.c.b16 %v2583, %v2576
    %v2878 = vpack.c.b16 %v2584, %v2577
    %v2879 = vpack.c.b16 %v2592, %v2585
    %v2880 = vpack.c.b16 %v2593, %v2586
    %v2881 = vpack.c.b16 %v2594, %v2587
    %v2882 = vpack.c.b16 %v2595, %v2588
    %v2883 = vpack.c.b16 %v2596, %v2589
    %v2884 = vpack.c.b16 %v2597, %v2590
    %v2885 = vpack.c.b16 %v2598, %v2591
    %v2886 = vpack.c.b16 %v2606, %v2599
    %v2887 = vpack.c.b16 %v2607, %v2600
    %v2888 = vpack.c.b16 %v2608, %v2601
    %v2889 = vpack.c.b16 %v2609, %v2602
    %v2890 = vpack.c.b16 %v2610, %v2603
    %v2891 = vpack.c.b16 %v2611, %v2604
    %v2892 = vpack.c.b16 %v2612, %v2605
    %v2893 = vpack.c.b16 %v2620, %v2613
    %v2894 = vpack.c.b16 %v2621, %v2614
    %v2895 = vpack.c.b16 %v2622, %v2615
    %v2896 = vpack.c.b16 %v2623, %v2616
    %v2897 = vpack.c.b16 %v2624, %v2617
    %v2898 = vpack.c.b16 %v2625, %v2618
    %v2899 = vpack.c.b16 %v2626, %v2619
    %v2900 = vpack.c.b16 %v2634, %v2627
    %v2901 = vpack.c.b16 %v2635, %v2628
    %v2902 = vpack.c.b16 %v2636, %v2629
    %v2903 = vpack.c.b16 %v2637, %v2630
    %v2904 = vpack.c.b16 %v2638, %v2631
    %v2905 = vpack.c.b16 %v2639, %v2632
    %v2906 = vpack.c.b16 %v2640, %v2633
    %v2907 = vpack.c.b16 %v2648, %v2641
    %v2908 = vpack.c.b16 %v2649, %v2642
    %v2909 = vpack.c.b16 %v2650, %v2643
    %v2910 = vpack.c.b16 %v2651, %v2644
    %v2911 = vpack.c.b16 %v2652, %v2645
    %v2912 = vpack.c.b16 %v2653, %v2646
    %v2913 = vpack.c.b16 %v2654, %v2647
    %v2914 = vpack.c.b16 %v2662, %v2655
    %v2915 = vpack.c.b16 %v2663, %v2656
    %v2916 = vpack.c.b16 %v2664, %v2657
    %v2917 = vpack.c.b16 %v2665, %v2658
    %v2918 = vpack.c.b16 %v2666, %v2659
    %v2919 = vpack.c.b16 %v2667, %v2660
    %v2920 = vpack.c.b16 %v2668, %v2661
    %v2921 = vpack.c.b16 %v2676, %v2669
    %v2922 = vpack.c.b16 %v2677, %v2670
    %v2923 = vpack.c.b16 %v2678, %v2671
    %v2924 = vpack.c.b16 %v2679, %v2672
    %v2925 = vpack.c.b16 %v2680, %v2673
    %v2926 = vpack.c.b16 %v2681, %v2674
    %v2927 = vpack.c.b16 %v2682, %v2675
    %v2928 = vpack.c.b16 %v2690, %v2683
    %v2929 = vpack.c.b16 %v2691, %v2684
    %v2930 = vpack.c.b16 %v2692, %v2685
    %v2931 = vpack.c.b16 %v2693, %v2686
    %v2932 = vpack.c.b16 %v2694, %v2687
    %v2933 = vpack.c.b16 %v2695, %v2688
    %v2934 = vpack.c.b16 %v2696, %v2689
    %v2935 = vpack.c.b16 %v2704, %v2697
    %v2936 = vpack.c.b16 %v2705, %v2698
    %v2937 = vpack.c.b16 %v2706, %v2699
    %v2938 = vpack.c.b16 %v2707, %v2700
    %v2939 = vpack.c.b16 %v2708, %v2701
    %v2940 = vpack.c.b16 %v2709, %v2702
    %v2941 = vpack.c.b16 %v2710, %v2703
    %v2942 = vpack.c.b16 %v2718, %v2711
    %v2943 = vpack.c.b16 %v2719, %v2712
    %v2944 = vpack.c.b16 %v2720, %v2713
    %v2945 = vpack.c.b16 %v2721, %v2714
    %v2946 = vpack.c.b16 %v2722, %v2715
    %v2947 = vpack.c.b16 %v2723, %v2716
    %v2948 = vpack.c.b16 %v2724, %v2717
    %3173 = vmatprep.subr.bf16.mxu0 %v2726
    %3174 = vmatpush1.bf16.msra.mxu0 %v2725
    %3175 = vmatprep.subr.bf16.mxu0 %v2733
    %3176 = vmatpush1.bf16.msra.mxu0 %v2732
    %3177 = vmatprep.subr.bf16.mxu0 %v2740
    %3178 = vmatpush1.bf16.msra.mxu0 %v2739
    %3179 = vmatprep.subr.bf16.mxu0 %v2747
    %3180 = vmatpush1.bf16.msra.mxu0 %v2746
    %3181 = vmatprep.subr.bf16.mxu0 %v2754
    %3182 = vmatpush1.bf16.msra.mxu0 %v2753
    %3183 = vmatprep.subr.bf16.mxu0 %v2761
    %3184 = vmatpush1.bf16.msra.mxu0 %v2760
    %3185 = vmatprep.subr.bf16.mxu0 %v2768
    %3186 = vmatpush1.bf16.msra.mxu0 %v2767
    %3187 = vmatprep.subr.bf16.mxu0 %v2775
    %3188 = vmatpush1.bf16.msra.mxu0 %v2774
    %3189 = vmatprep.subr.bf16.mxu0 %v2782
    %3190 = vmatpush1.bf16.msra.mxu0 %v2781
    %3191 = vmatprep.subr.bf16.mxu0 %v2789
    %3192 = vmatpush1.bf16.msra.mxu0 %v2788
    %3193 = vmatprep.subr.bf16.mxu0 %v2796
    %3194 = vmatpush1.bf16.msra.mxu0 %v2795
    %3195 = vmatprep.subr.bf16.mxu0 %v2803
    %3196 = vmatpush1.bf16.msra.mxu0 %v2802
    %3197 = vmatprep.subr.bf16.mxu0 %v2810
    %3198 = vmatpush1.bf16.msra.mxu0 %v2809
    %3199 = vmatprep.subr.bf16.mxu0 %v2817
    %3200 = vmatpush1.bf16.msra.mxu0 %v2816
    %3201 = vmatprep.subr.bf16.mxu0 %v2824
    %3202 = vmatpush1.bf16.msra.mxu0 %v2823
    %3203 = vmatprep.subr.bf16.mxu0 %v2831
    %3204 = vmatpush1.bf16.msra.mxu0 %v2830
    %3205 = vmatprep.mubr.bf16.mxu0 %v1725
    %3206 = vmatmul.mubr.bf16.gmra.mrb[0].mxu0 %v1724
    %v3207 = vpop.f32.mrb[0].mxu0
    %v3208 = vadd.f32 %v1989, %v3207
    %v3209 = vpop.f32.mrb[0].mxu0
    %v3210 = vadd.f32 %v1993, %v3209
    %v3211 = vpop.f32.mrb[0].mxu0
    %v3212 = vpop.f32.mrb[0].mxu0
    %3213 = vdwg.mxu0
    %3214 = vmatprep.subr.bf16.mxu0 %v2838
    %3215 = vmatpush1.bf16.msra.mxu0 %v2837
    %3216 = vmatprep.subr.bf16.mxu0 %v2845
    %3217 = vmatpush1.bf16.msra.mxu0 %v2844
    %3218 = vmatprep.subr.bf16.mxu0 %v2852
    %3219 = vmatpush1.bf16.msra.mxu0 %v2851
    %3220 = vmatprep.subr.bf16.mxu0 %v2859
    %3221 = vmatpush1.bf16.msra.mxu0 %v2858
    %3222 = vmatprep.subr.bf16.mxu0 %v2866
    %3223 = vmatpush1.bf16.msra.mxu0 %v2865
    %3224 = vmatprep.subr.bf16.mxu0 %v2873
    %3225 = vmatpush1.bf16.msra.mxu0 %v2872
    %3226 = vmatprep.subr.bf16.mxu0 %v2880
    %3227 = vmatpush1.bf16.msra.mxu0 %v2879
    %3228 = vmatprep.subr.bf16.mxu0 %v2887
    %3229 = vmatpush1.bf16.msra.mxu0 %v2886
    %3230 = vmatprep.subr.bf16.mxu0 %v2894
    %3231 = vmatpush1.bf16.msra.mxu0 %v2893
    %3232 = vmatprep.subr.bf16.mxu0 %v2901
    %3233 = vmatpush1.bf16.msra.mxu0 %v2900
    %3234 = vmatprep.subr.bf16.mxu0 %v2908
    %3235 = vmatpush1.bf16.msra.mxu0 %v2907
    %3236 = vmatprep.subr.bf16.mxu0 %v2915
    %3237 = vmatpush1.bf16.msra.mxu0 %v2914
    %3238 = vmatprep.subr.bf16.mxu0 %v2922
    %3239 = vmatpush1.bf16.msra.mxu0 %v2921
    %3240 = vmatprep.subr.bf16.mxu0 %v2929
    %3241 = vmatpush1.bf16.msra.mxu0 %v2928
    %3242 = vmatprep.subr.bf16.mxu0 %v2936
    %3243 = vmatpush1.bf16.msra.mxu0 %v2935
    %3244 = vmatprep.subr.bf16.mxu0 %v2943
    %3245 = vmatpush1.bf16.msra.mxu0 %v2942
    %3246 = vmatprep.mubr.bf16.mxu0 %v1727
    %3247 = vmatmul.mubr.bf16.gmra.mrb[0].mxu0 %v1726
    %v3248 = vpop.f32.mrb[0].mxu0
    %v3249 = vadd.f32 %v3208, %v3248
    %v3250 = vpop.f32.mrb[0].mxu0
    %v3251 = vadd.f32 %v3210, %v3250
    %v3252 = vpop.f32.mrb[0].mxu0
    %v3253 = vpop.f32.mrb[0].mxu0
    %3254 = vdwg.mxu0
    %3255 = vmatprep.subr.bf16.mxu0 %v2728
    %3256 = vmatpush1.bf16.msra.mxu0 %v2727
    %3257 = vmatprep.subr.bf16.mxu0 %v2735
    %3258 = vmatpush1.bf16.msra.mxu0 %v2734
    %3259 = vmatprep.subr.bf16.mxu0 %v2742
    %3260 = vmatpush1.bf16.msra.mxu0 %v2741
    %3261 = vmatprep.subr.bf16.mxu0 %v2749
    %3262 = vmatpush1.bf16.msra.mxu0 %v2748
    %3263 = vmatprep.subr.bf16.mxu0 %v2756
    %3264 = vmatpush1.bf16.msra.mxu0 %v2755
    %3265 = vmatprep.subr.bf16.mxu0 %v2763
    %3266 = vmatpush1.bf16.msra.mxu0 %v2762
    %3267 = vmatprep.subr.bf16.mxu0 %v2770
    %3268 = vmatpush1.bf16.msra.mxu0 %v2769
    %3269 = vmatprep.subr.bf16.mxu0 %v2777
    %3270 = vmatpush1.bf16.msra.mxu0 %v2776
    %3271 = vmatprep.subr.bf16.mxu0 %v2784
    %3272 = vmatpush1.bf16.msra.mxu0 %v2783
    %3273 = vmatprep.subr.bf16.mxu0 %v2791
    %3274 = vmatpush1.bf16.msra.mxu0 %v2790
    %3275 = vmatprep.subr.bf16.mxu0 %v2798
    %3276 = vmatpush1.bf16.msra.mxu0 %v2797
    %3277 = vmatprep.subr.bf16.mxu0 %v2805
    %3278 = vmatpush1.bf16.msra.mxu0 %v2804
    %3279 = vmatprep.subr.bf16.mxu0 %v2812
    %3280 = vmatpush1.bf16.msra.mxu0 %v2811
    %3281 = vmatprep.subr.bf16.mxu0 %v2819
    %3282 = vmatpush1.bf16.msra.mxu0 %v2818
    %3283 = vmatprep.subr.bf16.mxu0 %v2826
    %3284 = vmatpush1.bf16.msra.mxu0 %v2825
    %3285 = vmatprep.subr.bf16.mxu0 %v2833
    %3286 = vmatpush1.bf16.msra.mxu0 %v2832
    %3287 = vmatprep.mubr.bf16.mxu0 %v1725
    %3288 = vmatmul.mubr.bf16.gmra.mrb[0].mxu0 %v1724
    %v3289 = vpop.f32.mrb[0].mxu0
    %v3290 = vadd.f32 %v1997, %v3289
    %v3291 = vpop.f32.mrb[0].mxu0
    %v3292 = vadd.f32 %v2001, %v3291
    %v3293 = vpop.f32.mrb[0].mxu0
    %v3294 = vpop.f32.mrb[0].mxu0
    %3295 = vdwg.mxu0
    %3296 = vmatprep.subr.bf16.mxu0 %v2840
    %3297 = vmatpush1.bf16.msra.mxu0 %v2839
    %3298 = vmatprep.subr.bf16.mxu0 %v2847
    %3299 = vmatpush1.bf16.msra.mxu0 %v2846
    %3300 = vmatprep.subr.bf16.mxu0 %v2854
    %3301 = vmatpush1.bf16.msra.mxu0 %v2853
    %3302 = vmatprep.subr.bf16.mxu0 %v2861
    %3303 = vmatpush1.bf16.msra.mxu0 %v2860
    %3304 = vmatprep.subr.bf16.mxu0 %v2868
    %3305 = vmatpush1.bf16.msra.mxu0 %v2867
    %3306 = vmatprep.subr.bf16.mxu0 %v2875
    %3307 = vmatpush1.bf16.msra.mxu0 %v2874
    %3308 = vmatprep.subr.bf16.mxu0 %v2882
    %3309 = vmatpush1.bf16.msra.mxu0 %v2881
    %3310 = vmatprep.subr.bf16.mxu0 %v2889
    %3311 = vmatpush1.bf16.msra.mxu0 %v2888
    %3312 = vmatprep.subr.bf16.mxu0 %v2896
    %3313 = vmatpush1.bf16.msra.mxu0 %v2895
    %3314 = vmatprep.subr.bf16.mxu0 %v2903
    %3315 = vmatpush1.bf16.msra.mxu0 %v2902
    %3316 = vmatprep.subr.bf16.mxu0 %v2910
    %3317 = vmatpush1.bf16.msra.mxu0 %v2909
    %3318 = vmatprep.subr.bf16.mxu0 %v2917
    %3319 = vmatpush1.bf16.msra.mxu0 %v2916
    %3320 = vmatprep.subr.bf16.mxu0 %v2924
    %3321 = vmatpush1.bf16.msra.mxu0 %v2923
    %3322 = vmatprep.subr.bf16.mxu0 %v2931
    %3323 = vmatpush1.bf16.msra.mxu0 %v2930
    %3324 = vmatprep.subr.bf16.mxu0 %v2938
    %3325 = vmatpush1.bf16.msra.mxu0 %v2937
    %3326 = vmatprep.subr.bf16.mxu0 %v2945
    %3327 = vmatpush1.bf16.msra.mxu0 %v2944
    %3328 = vmatprep.mubr.bf16.mxu0 %v1727
    %3329 = vmatmul.mubr.bf16.gmra.mrb[0].mxu0 %v1726
    %v3330 = vpop.f32.mrb[0].mxu0
    %v3331 = vadd.f32 %v3290, %v3330
    %v3332 = vpop.f32.mrb[0].mxu0
    %v3333 = vadd.f32 %v3292, %v3332
    %v3334 = vpop.f32.mrb[0].mxu0
    %v3335 = vpop.f32.mrb[0].mxu0
    %3336 = vdwg.mxu0
    %3337 = vmatprep.subr.bf16.mxu0 %v2730
    %3338 = vmatpush1.bf16.msra.mxu0 %v2729
    %3339 = vmatprep.subr.bf16.mxu0 %v2737
    %3340 = vmatpush1.bf16.msra.mxu0 %v2736
    %3341 = vmatprep.subr.bf16.mxu0 %v2744
    %3342 = vmatpush1.bf16.msra.mxu0 %v2743
    %3343 = vmatprep.subr.bf16.mxu0 %v2751
    %3344 = vmatpush1.bf16.msra.mxu0 %v2750
    %3345 = vmatprep.subr.bf16.mxu0 %v2758
    %3346 = vmatpush1.bf16.msra.mxu0 %v2757
    %3347 = vmatprep.subr.bf16.mxu0 %v2765
    %3348 = vmatpush1.bf16.msra.mxu0 %v2764
    %3349 = vmatprep.subr.bf16.mxu0 %v2772
    %3350 = vmatpush1.bf16.msra.mxu0 %v2771
    %3351 = vmatprep.subr.bf16.mxu0 %v2779
    %3352 = vmatpush1.bf16.msra.mxu0 %v2778
    %3353 = vmatprep.subr.bf16.mxu0 %v2786
    %3354 = vmatpush1.bf16.msra.mxu0 %v2785
    %3355 = vmatprep.subr.bf16.mxu0 %v2793
    %3356 = vmatpush1.bf16.msra.mxu0 %v2792
    %3357 = vmatprep.subr.bf16.mxu0 %v2800
    %3358 = vmatpush1.bf16.msra.mxu0 %v2799
    %3359 = vmatprep.subr.bf16.mxu0 %v2807
    %3360 = vmatpush1.bf16.msra.mxu0 %v2806
    %3361 = vmatprep.subr.bf16.mxu0 %v2814
    %3362 = vmatpush1.bf16.msra.mxu0 %v2813
    %3363 = vmatprep.subr.bf16.mxu0 %v2821
    %3364 = vmatpush1.bf16.msra.mxu0 %v2820
    %3365 = vmatprep.subr.bf16.mxu0 %v2828
    %3366 = vmatpush1.bf16.msra.mxu0 %v2827
    %3367 = vmatprep.subr.bf16.mxu0 %v2835
    %3368 = vmatpush1.bf16.msra.mxu0 %v2834
    %3369 = vmatprep.mubr.bf16.mxu0 %v1725
    %3370 = vmatmul.mubr.bf16.gmra.mrb[0].mxu0 %v1724
    %v3371 = vpop.f32.mrb[0].mxu0
    %v3372 = vadd.f32 %v2005, %v3371
    %v3373 = vpop.f32.mrb[0].mxu0
    %v3374 = vadd.f32 %v2009, %v3373
    %v3375 = vpop.f32.mrb[0].mxu0
    %v3376 = vpop.f32.mrb[0].mxu0
    %3377 = vdwg.mxu0
    %3378 = vmatprep.subr.bf16.mxu0 %v2842
    %3379 = vmatpush1.bf16.msra.mxu0 %v2841
    %3380 = vmatprep.subr.bf16.mxu0 %v2849
    %3381 = vmatpush1.bf16.msra.mxu0 %v2848
    %3382 = vmatprep.subr.bf16.mxu0 %v2856
    %3383 = vmatpush1.bf16.msra.mxu0 %v2855
    %3384 = vmatprep.subr.bf16.mxu0 %v2863
    %3385 = vmatpush1.bf16.msra.mxu0 %v2862
    %3386 = vmatprep.subr.bf16.mxu0 %v2870
    %3387 = vmatpush1.bf16.msra.mxu0 %v2869
    %3388 = vmatprep.subr.bf16.mxu0 %v2877
    %3389 = vmatpush1.bf16.msra.mxu0 %v2876
    %3390 = vmatprep.subr.bf16.mxu0 %v2884
    %3391 = vmatpush1.bf16.msra.mxu0 %v2883
    %3392 = vmatprep.subr.bf16.mxu0 %v2891
    %3393 = vmatpush1.bf16.msra.mxu0 %v2890
    %3394 = vmatprep.subr.bf16.mxu0 %v2898
    %3395 = vmatpush1.bf16.msra.mxu0 %v2897
    %3396 = vmatprep.subr.bf16.mxu0 %v2905
    %3397 = vmatpush1.bf16.msra.mxu0 %v2904
    %3398 = vmatprep.subr.bf16.mxu0 %v2912
    %3399 = vmatpush1.bf16.msra.mxu0 %v2911
    %3400 = vmatprep.subr.bf16.mxu0 %v2919
    %3401 = vmatpush1.bf16.msra.mxu0 %v2918
    %3402 = vmatprep.subr.bf16.mxu0 %v2926
    %3403 = vmatpush1.bf16.msra.mxu0 %v2925
    %3404 = vmatprep.subr.bf16.mxu0 %v2933
    %3405 = vmatpush1.bf16.msra.mxu0 %v2932
    %3406 = vmatprep.subr.bf16.mxu0 %v2940
    %3407 = vmatpush1.bf16.msra.mxu0 %v2939
    %3408 = vmatprep.subr.bf16.mxu0 %v2947
    %3409 = vmatpush1.bf16.msra.mxu0 %v2946
    %3410 = vmatprep.mubr.bf16.mxu0 %v1727
    %3411 = vmatmul.mubr.bf16.gmra.mrb[0].mxu0 %v1726
    %v3412 = vpop.f32.mrb[0].mxu0
    %v3413 = vadd.f32 %v3372, %v3412
    %v3414 = vpop.f32.mrb[0].mxu0
    %v3415 = vadd.f32 %v3374, %v3414
    %v3416 = vpop.f32.mrb[0].mxu0
    %v3417 = vpop.f32.mrb[0].mxu0
    %3418 = vdwg.mxu0
    %3419 = vmatprep.subr.bf16.mxu0 0
    %3420 = vmatpush1.bf16.msra.mxu0 %v2731
    %3421 = vmatprep.subr.bf16.mxu0 0
    %3422 = vmatpush1.bf16.msra.mxu0 %v2738
    %3423 = vmatprep.subr.bf16.mxu0 0
    %3424 = vmatpush1.bf16.msra.mxu0 %v2745
    %3425 = vmatprep.subr.bf16.mxu0 0
    %3426 = vmatpush1.bf16.msra.mxu0 %v2752
    %3427 = vmatprep.subr.bf16.mxu0 0
    %3428 = vmatpush1.bf16.msra.mxu0 %v2759
    %3429 = vmatprep.subr.bf16.mxu0 0
    %3430 = vmatpush1.bf16.msra.mxu0 %v2766
    %3431 = vmatprep.subr.bf16.mxu0 0
    %3432 = vmatpush1.bf16.msra.mxu0 %v2773
    %3433 = vmatprep.subr.bf16.mxu0 0
    %3434 = vmatpush1.bf16.msra.mxu0 %v2780
    %3435 = vmatprep.subr.bf16.mxu0 0
    %3436 = vmatpush1.bf16.msra.mxu0 %v2787
    %3437 = vmatprep.subr.bf16.mxu0 0
    %3438 = vmatpush1.bf16.msra.mxu0 %v2794
    %3439 = vmatprep.subr.bf16.mxu0 0
    %3440 = vmatpush1.bf16.msra.mxu0 %v2801
    %3441 = vmatprep.subr.bf16.mxu0 0
    %3442 = vmatpush1.bf16.msra.mxu0 %v2808
    %3443 = vmatprep.subr.bf16.mxu0 0
    %3444 = vmatpush1.bf16.msra.mxu0 %v2815
    %3445 = vmatprep.subr.bf16.mxu0 0
    %3446 = vmatpush1.bf16.msra.mxu0 %v2822
    %3447 = vmatprep.subr.bf16.mxu0 0
    %3448 = vmatpush1.bf16.msra.mxu0 %v2829
    %3449 = vmatprep.subr.bf16.mxu0 0
    %3450 = vmatpush1.bf16.msra.mxu0 %v2836
    %3451 = vmatprep.mubr.bf16.mxu0 %v1725
    %3452 = vmatmul.mubr.bf16.gmra.mrb[0].mxu0 %v1724
    %v3453 = vpop.f32.mrb[0].mxu0
    %v3454 = vadd.f32 %v2013, %v3453
    %v3455 = vpop.f32.mrb[0].mxu0
    %v3456 = vpop.f32.mrb[0].mxu0
    %v3457 = vpop.f32.mrb[0].mxu0
    %3458 = vdwg.mxu0
    %3459 = vmatprep.subr.bf16.mxu0 0
    %3460 = vmatpush1.bf16.msra.mxu0 %v2843
    %3461 = vmatprep.subr.bf16.mxu0 0
    %3462 = vmatpush1.bf16.msra.mxu0 %v2850
    %3463 = vmatprep.subr.bf16.mxu0 0
    %3464 = vmatpush1.bf16.msra.mxu0 %v2857
    %3465 = vmatprep.subr.bf16.mxu0 0
    %3466 = vmatpush1.bf16.msra.mxu0 %v2864
    %3467 = vmatprep.subr.bf16.mxu0 0
    %3468 = vmatpush1.bf16.msra.mxu0 %v2871
    %3469 = vmatprep.subr.bf16.mxu0 0
    %3470 = vmatpush1.bf16.msra.mxu0 %v2878
    %3471 = vmatprep.subr.bf16.mxu0 0
    %3472 = vmatpush1.bf16.msra.mxu0 %v2885
    %3473 = vmatprep.subr.bf16.mxu0 0
    %3474 = vmatpush1.bf16.msra.mxu0 %v2892
    %3475 = vmatprep.subr.bf16.mxu0 0
    %3476 = vmatpush1.bf16.msra.mxu0 %v2899
    %3477 = vmatprep.subr.bf16.mxu0 0
    %3478 = vmatpush1.bf16.msra.mxu0 %v2906
    %3479 = vmatprep.subr.bf16.mxu0 0
    %3480 = vmatpush1.bf16.msra.mxu0 %v2913
    %3481 = vmatprep.subr.bf16.mxu0 0
    %3482 = vmatpush1.bf16.msra.mxu0 %v2920
    %3483 = vmatprep.subr.bf16.mxu0 0
    %3484 = vmatpush1.bf16.msra.mxu0 %v2927
    %3485 = vmatprep.subr.bf16.mxu0 0
    %3486 = vmatpush1.bf16.msra.mxu0 %v2934
    %3487 = vmatprep.subr.bf16.mxu0 0
    %3488 = vmatpush1.bf16.msra.mxu0 %v2941
    %3489 = vmatprep.subr.bf16.mxu0 0
    %3490 = vmatpush1.bf16.msra.mxu0 %v2948
    %3491 = vmatprep.mubr.bf16.mxu0 %v1727
    %3492 = vmatmul.mubr.bf16.gmra.mrb[0].mxu0 %v1726
    %v3493 = vpop.f32.mrb[0].mxu0
    %v3494 = vadd.f32 %v3454, %v3493
    %v3495 = vpop.f32.mrb[0].mxu0
    %v3496 = vpop.f32.mrb[0].mxu0
    %v3497 = vpop.f32.mrb[0].mxu0
    %3498 = vdwg.mxu0
    %v3499 = vld [vmem:[%s13] sm:$0x7f]
    %v3500 = vld [vmem:[%s14] sm:$0x7f]
    %v3501 = vrot.slane %v3249, 4
    %v3502 = vadd.f32 %v3249, %v3501
    %v3503 = vrot.slane %v3502, 2
    %v3504 = vadd.f32 %v3502, %v3503
    %v3505 = vrot.slane %v3504, 1
    %v3506 = vadd.f32 %v3504, %v3505
    %v3507 = vrot.slane %v3251, 4
    %v3508 = vadd.f32 %v3251, %v3507
    %v3509 = vrot.slane %v3508, 2
    %v3510 = vadd.f32 %v3508, %v3509
    %v3511 = vrot.slane %v3510, 1
    %v3512 = vadd.f32 %v3510, %v3511
    %v3513 = vrot.slane %v3331, 4
    %v3514 = vadd.f32 %v3331, %v3513
    %v3515 = vrot.slane %v3514, 2
    %v3516 = vadd.f32 %v3514, %v3515
    %v3517 = vrot.slane %v3516, 1
    %v3518 = vadd.f32 %v3516, %v3517
    %v3519 = vrot.slane %v3333, 4
    %v3520 = vadd.f32 %v3333, %v3519
    %v3521 = vrot.slane %v3520, 2
    %v3522 = vadd.f32 %v3520, %v3521
    %v3523 = vrot.slane %v3522, 1
    %v3524 = vadd.f32 %v3522, %v3523
    %v3525 = vrot.slane %v3413, 4
    %v3526 = vadd.f32 %v3413, %v3525
    %v3527 = vrot.slane %v3526, 2
    %v3528 = vadd.f32 %v3526, %v3527
    %v3529 = vrot.slane %v3528, 1
    %v3530 = vadd.f32 %v3528, %v3529
    %v3531 = vrot.slane %v3415, 4
    %v3532 = vadd.f32 %v3415, %v3531
    %v3533 = vrot.slane %v3532, 2
    %v3534 = vadd.f32 %v3532, %v3533
    %v3535 = vrot.slane %v3534, 1
    %v3536 = vadd.f32 %v3534, %v3535
    %vm3537 = vcmask 130048
    %v3538 = vsel %vm3537, %v3494, 0.0
    %v3539 = vrot.slane %v3538, 4
    %v3540 = vadd.f32 %v3538, %v3539
    %v3541 = vrot.slane %v3540, 2
    %v3542 = vadd.f32 %v3540, %v3541
    %v3543 = vrot.slane %v3542, 1
    %v3544 = vadd.f32 %v3542, %v3543
    %v3545 = vmul.f32 %v3506, %v375
    %v3546 = vmul.f32 %v3512, %v375
    %v3547 = vmul.f32 %v3518, %v375
    %v3548 = vmul.f32 %v3524, %v375
    %v3549 = vmul.f32 %v3530, %v375
    %v3550 = vmul.f32 %v3536, %v375
    %v3551 = vmul.f32 %v3544, %v375
    %v3552 = vsub.f32 %v3249, %v3545
    %v3553 = vsub.f32 %v3251, %v3546
    %v3554 = vsub.f32 %v3331, %v3547
    %v3555 = vsub.f32 %v3333, %v3548
    %v3556 = vsub.f32 %v3413, %v3549
    %v3557 = vsub.f32 %v3415, %v3550
    %v3558 = vsub.f32 %v3494, %v3551
    %v3559 = vmul.f32 %v3552, %v3552
    %v3560 = vmul.f32 %v3553, %v3553
    %v3561 = vmul.f32 %v3554, %v3554
    %v3562 = vmul.f32 %v3555, %v3555
    %v3563 = vmul.f32 %v3556, %v3556
    %v3564 = vmul.f32 %v3557, %v3557
    %v3565 = vmul.f32 %v3558, %v3558
    %v3566 = vrot.slane %v3559, 4
    %v3567 = vadd.f32 %v3559, %v3566
    %v3568 = vrot.slane %v3567, 2
    %v3569 = vadd.f32 %v3567, %v3568
    %v3570 = vrot.slane %v3569, 1
    %v3571 = vadd.f32 %v3569, %v3570
    %v3572 = vrot.slane %v3560, 4
    %v3573 = vadd.f32 %v3560, %v3572
    %v3574 = vrot.slane %v3573, 2
    %v3575 = vadd.f32 %v3573, %v3574
    %v3576 = vrot.slane %v3575, 1
    %v3577 = vadd.f32 %v3575, %v3576
    %v3578 = vrot.slane %v3561, 4
    %v3579 = vadd.f32 %v3561, %v3578
    %v3580 = vrot.slane %v3579, 2
    %v3581 = vadd.f32 %v3579, %v3580
    %v3582 = vrot.slane %v3581, 1
    %v3583 = vadd.f32 %v3581, %v3582
    %v3584 = vrot.slane %v3562, 4
    %v3585 = vadd.f32 %v3562, %v3584
    %v3586 = vrot.slane %v3585, 2
    %v3587 = vadd.f32 %v3585, %v3586
    %v3588 = vrot.slane %v3587, 1
    %v3589 = vadd.f32 %v3587, %v3588
    %v3590 = vrot.slane %v3563, 4
    %v3591 = vadd.f32 %v3563, %v3590
    %v3592 = vrot.slane %v3591, 2
    %v3593 = vadd.f32 %v3591, %v3592
    %v3594 = vrot.slane %v3593, 1
    %v3595 = vadd.f32 %v3593, %v3594
    %v3596 = vrot.slane %v3564, 4
    %v3597 = vadd.f32 %v3564, %v3596
    %v3598 = vrot.slane %v3597, 2
    %v3599 = vadd.f32 %v3597, %v3598
    %v3600 = vrot.slane %v3599, 1
    %v3601 = vadd.f32 %v3599, %v3600
    %v3602 = vsel %vm3537, %v3565, 0.0
    %v3603 = vrot.slane %v3602, 4
    %v3604 = vadd.f32 %v3602, %v3603
    %v3605 = vrot.slane %v3604, 2
    %v3606 = vadd.f32 %v3604, %v3605
    %v3607 = vrot.slane %v3606, 1
    %v3608 = vadd.f32 %v3606, %v3607
    %v3609 = vmul.f32 %v3571, %v375
    %v3610 = vmul.f32 %v3577, %v375
    %v3611 = vmul.f32 %v3583, %v375
    %v3612 = vmul.f32 %v3589, %v375
    %v3613 = vmul.f32 %v3595, %v375
    %v3614 = vmul.f32 %v3601, %v375
    %v3615 = vmul.f32 %v3608, %v375
    %v3616 = vadd.f32 %v3609, 1e-05
    %v3617 = vadd.f32 %v3610, 1e-05
    %v3618 = vadd.f32 %v3611, 1e-05
    %v3619 = vadd.f32 %v3612, 1e-05
    %v3620 = vadd.f32 %v3613, 1e-05
    %v3621 = vadd.f32 %v3614, 1e-05
    %v3622 = vadd.f32 %v3615, 1e-05
    %v3623 = vrsqrt.pop %v3616
    %v3624 = vrsqrt.pop %v3617
    %v3625 = vrsqrt.pop %v3618
    %v3626 = vrsqrt.pop %v3619
    %v3627 = vrsqrt.pop %v3620
    %v3628 = vrsqrt.pop %v3621
    %v3629 = vrsqrt.pop %v3622
    %v3637 = vcombine.low %v3623, %v3624
    %v3638 = vcombine.low %v3625, %v3626
    %v3639 = vcombine.low %v3627, %v3628
    %v3641 = vunpack.c.l.s4 1966171168
    %v3642 = vunpack.c.0.s8 %v3641
    %v3643 = vlaneseq
    %v3644 = vshrl.u32 %v3643, 7
    %v3645 = vsub.s32 %v3642, %v3644
    %v3646 = vrot.slane %v3637, %v3645
    %v3648 = vunpack.c.l.s4 1966171168
    %v3649 = vunpack.c.0.s8 %v3648
    %v3650 = vlaneseq
    %v3651 = vshrl.u32 %v3650, 7
    %v3652 = vsub.s32 %v3649, %v3651
    %v3653 = vrot.slane %v3638, %v3652
    %v3655 = vunpack.c.l.s4 1966171168
    %v3656 = vunpack.c.0.s8 %v3655
    %v3657 = vlaneseq
    %v3658 = vshrl.u32 %v3657, 7
    %v3659 = vsub.s32 %v3656, %v3658
    %v3660 = vrot.slane %v3639, %v3659
    %v3662 = vunpack.c.l.s4 1966171168
    %v3663 = vunpack.c.0.s8 %v3662
    %v3664 = vlaneseq
    %v3665 = vshrl.u32 %v3664, 7
    %v3666 = vsub.s32 %v3663, %v3665
    %v3667 = vrot.slane %v3629, %v3666
    %v3668 = vcombine.low %v3646, %v3653
    %v3669 = vcombine.low %v3660, %v3667
    %v3671 = vunpack.c.l.s4 1966171168
    %v3672 = vunpack.c.0.s8 %v3671
    %v3673 = vlaneseq
    %v3674 = vshrl.u32 %v3673, 7
    %v3675 = vsub.s32 %v3672, %v3674
    %v3676 = vrot.slane %v3668, %v3675
    %v3678 = vunpack.c.l.s4 1966171168
    %v3679 = vunpack.c.0.s8 %v3678
    %v3680 = vlaneseq
    %v3681 = vshrl.u32 %v3680, 7
    %v3682 = vsub.s32 %v3679, %v3681
    %v3683 = vrot.slane %v3669, %v3682
    %v3684 = vcombine.low %v3676, %v3683
    %v3686 = vmul.f32 %v3499, %v3684
    %v3688 = vlaneseq
    %v3689 = vshrl.u32 %v3688, 7
    %v3690 = vsub.s32 0, %v3689
    %v3691 = vrot.slane %v3686, %v3690
    %v3692 = vlaneseq
    %v3693 = vshrl.u32 %v3692, 7
    %v3694 = vsub.s32 1, %v3693
    %v3695 = vrot.slane %v3686, %v3694
    %v3696 = vlaneseq
    %v3697 = vshrl.u32 %v3696, 7
    %v3698 = vsub.s32 2, %v3697
    %v3699 = vrot.slane %v3686, %v3698
    %v3700 = vlaneseq
    %v3701 = vshrl.u32 %v3700, 7
    %v3702 = vsub.s32 3, %v3701
    %v3703 = vrot.slane %v3686, %v3702
    %v3704 = vlaneseq
    %v3705 = vshrl.u32 %v3704, 7
    %v3706 = vsub.s32 4, %v3705
    %v3707 = vrot.slane %v3686, %v3706
    %v3708 = vlaneseq
    %v3709 = vshrl.u32 %v3708, 7
    %v3710 = vsub.s32 5, %v3709
    %v3711 = vrot.slane %v3686, %v3710
    %v3712 = vlaneseq
    %v3713 = vshrl.u32 %v3712, 7
    %v3714 = vsub.s32 6, %v3713
    %v3715 = vrot.slane %v3686, %v3714
    %v3723 = vmul.f32 %v3545, %v3691
    %v3724 = vmul.f32 %v3546, %v3695
    %v3725 = vmul.f32 %v3547, %v3699
    %v3726 = vmul.f32 %v3548, %v3703
    %v3727 = vmul.f32 %v3549, %v3707
    %v3728 = vmul.f32 %v3550, %v3711
    %v3729 = vmul.f32 %v3551, %v3715
    %v3737 = vcombine.low %v3723, %v3724
    %v3738 = vcombine.low %v3725, %v3726
    %v3739 = vcombine.low %v3727, %v3728
    %v3741 = vunpack.c.l.s4 1966171168
    %v3742 = vunpack.c.0.s8 %v3741
    %v3743 = vlaneseq
    %v3744 = vshrl.u32 %v3743, 7
    %v3745 = vsub.s32 %v3742, %v3744
    %v3746 = vrot.slane %v3737, %v3745
    %v3748 = vunpack.c.l.s4 1966171168
    %v3749 = vunpack.c.0.s8 %v3748
    %v3750 = vlaneseq
    %v3751 = vshrl.u32 %v3750, 7
    %v3752 = vsub.s32 %v3749, %v3751
    %v3753 = vrot.slane %v3738, %v3752
    %v3755 = vunpack.c.l.s4 1966171168
    %v3756 = vunpack.c.0.s8 %v3755
    %v3757 = vlaneseq
    %v3758 = vshrl.u32 %v3757, 7
    %v3759 = vsub.s32 %v3756, %v3758
    %v3760 = vrot.slane %v3739, %v3759
    %v3762 = vunpack.c.l.s4 1966171168
    %v3763 = vunpack.c.0.s8 %v3762
    %v3764 = vlaneseq
    %v3765 = vshrl.u32 %v3764, 7
    %v3766 = vsub.s32 %v3763, %v3765
    %v3767 = vrot.slane %v3729, %v3766
    %v3768 = vcombine.low %v3746, %v3753
    %v3769 = vcombine.low %v3760, %v3767
    %v3771 = vunpack.c.l.s4 1966171168
    %v3772 = vunpack.c.0.s8 %v3771
    %v3773 = vlaneseq
    %v3774 = vshrl.u32 %v3773, 7
    %v3775 = vsub.s32 %v3772, %v3774
    %v3776 = vrot.slane %v3768, %v3775
    %v3778 = vunpack.c.l.s4 1966171168
    %v3779 = vunpack.c.0.s8 %v3778
    %v3780 = vlaneseq
    %v3781 = vshrl.u32 %v3780, 7
    %v3782 = vsub.s32 %v3779, %v3781
    %v3783 = vrot.slane %v3769, %v3782
    %v3784 = vcombine.low %v3776, %v3783
    %v3786 = vsub.f32 %v3500, %v3784
    %v3787 = vmul.f32 %v3249, %v3691
    %v3788 = vmul.f32 %v3251, %v3695
    %v3789 = vmul.f32 %v3331, %v3699
    %v3790 = vmul.f32 %v3333, %v3703
    %v3791 = vmul.f32 %v3413, %v3707
    %v3792 = vmul.f32 %v3415, %v3711
    %v3793 = vmul.f32 %v3494, %v3715
    %v3795 = vlaneseq
    %v3796 = vshrl.u32 %v3795, 7
    %v3797 = vsub.s32 0, %v3796
    %v3798 = vrot.slane %v3786, %v3797
    %v3799 = vlaneseq
    %v3800 = vshrl.u32 %v3799, 7
    %v3801 = vsub.s32 1, %v3800
    %v3802 = vrot.slane %v3786, %v3801
    %v3803 = vlaneseq
    %v3804 = vshrl.u32 %v3803, 7
    %v3805 = vsub.s32 2, %v3804
    %v3806 = vrot.slane %v3786, %v3805
    %v3807 = vlaneseq
    %v3808 = vshrl.u32 %v3807, 7
    %v3809 = vsub.s32 3, %v3808
    %v3810 = vrot.slane %v3786, %v3809
    %v3811 = vlaneseq
    %v3812 = vshrl.u32 %v3811, 7
    %v3813 = vsub.s32 4, %v3812
    %v3814 = vrot.slane %v3786, %v3813
    %v3815 = vlaneseq
    %v3816 = vshrl.u32 %v3815, 7
    %v3817 = vsub.s32 5, %v3816
    %v3818 = vrot.slane %v3786, %v3817
    %v3819 = vlaneseq
    %v3820 = vshrl.u32 %v3819, 7
    %v3821 = vsub.s32 6, %v3820
    %v3822 = vrot.slane %v3786, %v3821
    %v3830 = vadd.f32 %v3787, %v3798
    %v3831 = vadd.f32 %v3788, %v3802
    %v3832 = vadd.f32 %v3789, %v3806
    %v3833 = vadd.f32 %v3790, %v3810
    %v3834 = vadd.f32 %v3791, %v3814
    %v3835 = vadd.f32 %v3792, %v3818
    %v3836 = vadd.f32 %v3793, %v3822
    %v3837 = vtanh.pop %v3830
    %v3838 = vtanh.pop %v3831
    %v3839 = vtanh.pop %v3832
    %v3840 = vtanh.pop %v3833
    %v3841 = vtanh.pop %v3834
    %v3842 = vtanh.pop %v3835
    %v3843 = vtanh.pop %v3836
    %3844 = vst [vmem:[#allocation2] sm:$0xff] %v3837
    %3845 = vst [vmem:[#allocation2 + $0x8] sm:$0xff] %v3838
    %3846 = vst [vmem:[#allocation2 + $0x10] sm:$0xff] %v3839
    %3847 = vst [vmem:[#allocation2 + $0x18] sm:$0xff] %v3840
    %3848 = vst [vmem:[#allocation2 + $0x20] sm:$0xff] %v3841
    %3849 = vst [vmem:[#allocation2 + $0x28] sm:$0xff] %v3842
    %3850 = vst.msk [vmem:[#allocation2 + $0x30] sm:$0xff] %vm3537, %v3843
    // Predicated region
    $region62: #{gen_forward.3} parent=1 // pred_check
      _
    $region63: #{gen_forward.3} parent=1 // pred_check_branch
      %3852 = sbr.rel (0) target = $region65
    $region64: #{gen_forward.3} parent=1 // pred_region
      %s3854 = ssub.s32 896, 896
      %3855 = vsyncadd [#allocation3], %s3854
      %s3857 = sshll.u32 [#allocation2], 4
      %s3858 = int_to_ptr.vmem [resolvable:$true] %s3857
      %3860 = dma.vmem_to_hbm [thread:$0]  %s3858, 896, %s15, [#allocation3]
    $region65: #{gen_forward.3} parent=1 // pred_fallthru
      _
    // Predicated region
    $region66: #{gen_forward.3} parent=1 // pred_check
      _
    $region67: #{gen_forward.3} parent=1 // pred_check_branch
      %3862 = sbr.rel (0) target = $region69
    $region68: #{gen_forward.3} parent=1 // pred_region
      %3863 = dma.done [#allocation3], 896
    $region69: #{gen_forward.3} parent=1 // pred_fallthru
      _
    %3864 = vsyncpa [#allocation3], 1

</llo_original>
